<compile_context>
chip_gen: v7x
topology: tpu7x:2x2x1
jax: 0.10.0
libtpu: 0.0.40
codegen_flags: <defaults>
</compile_context>

<pallas_src>
import jax
import jax.numpy as jnp
from jax.experimental import pallas as pl
from jax.experimental.pallas import tpu as pltpu

H = 32   # hidden size == embedding size
V = 32   # vocab size


# ---------------------------------------------------------------- fused kernel
def seq2seq_kernel(
        in_ids_ref, tgt_ids_ref,                                    # (S*B,1), (T*B,1) int32
        enc_emb_ref, enc_wih_t_ref, enc_whh_t_ref, enc_gbias_ref, enc_bhn_ref,
        dec_emb_ref, dec_wih_t_ref, dec_whh_t_ref, dec_gbias_ref, dec_bhn_ref,
        dec_wout_t_ref, dec_bout_ref,
        logp_ref, hdec_ref,                                         # outputs (T*B,V), (B,H)
        hs_scr):                                                    # VMEM scratch (T*B, H)
    SB = in_ids_ref.shape[0]
    TB = tgt_ids_ref.shape[0]
    B = hdec_ref.shape[0]
    S, T = SB // B, TB // B

    # One-time: per-vocab input-side gate tables.  b_ih and the r/z parts of b_hh are
    # already folded into *_gbias (done at param-prep time), so per-step work is minimal.
    gi_enc_tab = (jnp.dot(enc_emb_ref[...], enc_wih_t_ref[...],
                          preferred_element_type=jnp.float32) + enc_gbias_ref[...])
    gi_dec_tab = (jnp.dot(dec_emb_ref[...], dec_wih_t_ref[...],
                          preferred_element_type=jnp.float32) + dec_gbias_ref[...])

    # One-hot MXU gather of ALL timesteps at once (no per-step dynamic sublane slices).
    def gather_all(ids_col, tab, rows):
        lanes = jax.lax.broadcasted_iota(jnp.int32, (rows, V), 1)
        onehot = (lanes == ids_col).astype(jnp.float32)              # (rows, V)
        return jnp.dot(onehot, tab, preferred_element_type=jnp.float32)   # (rows, 3H)

    gi_enc_all = gather_all(in_ids_ref[...], gi_enc_tab, SB)         # (S*B, 3H)
    gi_dec_all = gather_all(tgt_ids_ref[...], gi_dec_tab, TB)        # (T*B, 3H)

    # Hoist weight loads / bias broadcasts out of the serial loops.
    enc_whh_t = enc_whh_t_ref[...]                                   # (H, 3H)
    dec_whh_t = dec_whh_t_ref[...]                                   # (H, 3H)
    enc_bhn = jnp.broadcast_to(enc_bhn_ref[...], (B, H))             # n-gate hidden bias
    dec_bhn = jnp.broadcast_to(dec_bhn_ref[...], (B, H))

    def gru_step(gi, h, whh_t, bhn):
        # Only the h-dependent matmul + gate math sits on the serial critical path.
        gh = jnp.dot(h, whh_t, preferred_element_type=jnp.float32)   # (B, 3H), no bias add
        rz = jax.nn.sigmoid(gi[:, :2 * H] + gh[:, :2 * H])           # fused r|z sigmoid
        r, z = rz[:, :H], rz[:, H:]
        # PyTorch GRU: n = tanh(i_n + r * (W_hn h + b_hn)) — b_hn must stay inside r*(.)
        n = jnp.tanh(gi[:, 2 * H:] + r * (gh[:, 2 * H:] + bhn))
        return (1.0 - z) * n + z * h

    # Encoder recurrence (h0 = zeros), fully unrolled.
    h = jnp.zeros((B, H), jnp.float32)
    for t in range(S):
        h = gru_step(gi_enc_all[t * B:(t + 1) * B, :], h, enc_whh_t, enc_bhn)

    # Decoder recurrence seeded with the encoder hidden; stash per-step h off the hot path.
    for t in range(T):
        h = gru_step(gi_dec_all[t * B:(t + 1) * B, :], h, dec_whh_t, dec_bhn)
        hs_scr[t * B:(t + 1) * B, :] = h

    # One batched projection + log_softmax for all T decoder steps.
    hs = hs_scr[...]                                                 # (T*B, H)
    logits = (jnp.dot(hs, dec_wout_t_ref[...], preferred_element_type=jnp.float32)
              + jnp.broadcast_to(dec_bout_ref[...], (TB, V)))        # (T*B, V)
    m = jnp.max(logits, axis=-1, keepdims=True)
    lse = m + jnp.log(jnp.sum(jnp.exp(logits - m), axis=-1, keepdims=True))
    logp_ref[...] = logits - lse
    hdec_ref[...] = h


# ---------------------------------------------------------------- wrapper
def prepare_params(params):
    """One-time layout/param prep: transpose weights, fold biases into gate tables."""
    rz_mask = jnp.concatenate(
        [jnp.ones((1, 2 * H), jnp.float32), jnp.zeros((1, H), jnp.float32)], axis=-1)
    return dict(
        enc_emb=params["enc_emb"].astype(jnp.float32),
        enc_wih_t=params["enc_wih"].T,                               # [H, 3H]
        enc_whh_t=params["enc_whh"].T,                               # [H, 3H]
        enc_gbias=params["enc_bih"] + params["enc_bhh"] * rz_mask,   # b_ih + (b_hr|b_hz|0)
        enc_bhn=params["enc_bhh"][:, 2 * H:],                        # [1, H]
        dec_emb=params["dec_emb"].astype(jnp.float32),
        dec_wih_t=params["dec_wih"].T,
        dec_whh_t=params["dec_whh"].T,
        dec_gbias=params["dec_bih"] + params["dec_bhh"] * rz_mask,
        dec_bhn=params["dec_bhh"][:, 2 * H:],
        dec_wout_t=params["dec_wout"].T,                             # [H, V]
        dec_bout=params["dec_bout"],                                 # [1, V]
    )


def seq2seq_forward(prepared, input_ids, target_ids, input_length, target_length):
    """Mirrors Seq2seq.forward: encoder then decoder seeded with encoder_hidden.

    input_ids: [S, B] int32, target_ids: [T, B] int32.
    Returns (decoder_outputs [T,B,V] log-probs, decoder_hidden [1,B,H]).
    """
    # TODO(synk): pack_padded_sequence semantics for variable input_length/target_length
    # are not replicated; all sequences are processed to full length (lengths unused).
    S, B = input_ids.shape
    T, _ = target_ids.shape
    in_ids = input_ids.astype(jnp.int32).reshape(S * B, 1)    # row = t*B + b
    tgt_ids = target_ids.astype(jnp.int32).reshape(T * B, 1)

    def _full(shape):
        return pl.BlockSpec(shape, lambda i: (0,) * len(shape))

    logp_flat, h_dec = pl.pallas_call(
        seq2seq_kernel,
        out_shape=(
            jax.ShapeDtypeStruct((T * B, V), jnp.float32),
            jax.ShapeDtypeStruct((B, H), jnp.float32),
        ),
        grid_spec=pltpu.PrefetchScalarGridSpec(
            num_scalar_prefetch=0,
            grid=(1,),
            in_specs=[
                _full((S * B, 1)), _full((T * B, 1)),
                _full((V, H)), _full((H, 3 * H)), _full((H, 3 * H)),
                _full((1, 3 * H)), _full((1, H)),
                _full((V, H)), _full((H, 3 * H)), _full((H, 3 * H)),
                _full((1, 3 * H)), _full((1, H)),
                _full((H, V)), _full((1, V)),
            ],
            out_specs=[
                _full((T * B, V)),
                _full((B, H)),
            ],
            scratch_shapes=[
                pltpu.VMEM((T * B, H), jnp.float32),   # per-step decoder hiddens
            ],
        ),
        # TODO(synk): on v7x (2 TCs/chip) add a leading "parallel" batch-tile grid axis once
        # B grows beyond this toy size; at B=2 a single TensorCore is the right choice.
        compiler_params=pltpu.CompilerParams(dimension_semantics=("arbitrary",)),
    )(in_ids, tgt_ids,
      prepared["enc_emb"], prepared["enc_wih_t"], prepared["enc_whh_t"],
      prepared["enc_gbias"], prepared["enc_bhn"],
      prepared["dec_emb"], prepared["dec_wih_t"], prepared["dec_whh_t"],
      prepared["dec_gbias"], prepared["dec_bhn"],
      prepared["dec_wout_t"], prepared["dec_bout"])

    decoder_outputs = logp_flat.reshape(T, B, V)      # row index t*B+b -> [T, B, V]
    decoder_hidden = h_dec[None]                      # [1, B, H]
    return decoder_outputs, decoder_hidden


# ---------------------------------------------------------------- pure-JAX reference
def reference_forward(params, input_ids, target_ids):
    hp = jax.lax.Precision.HIGHEST

    def gru_seq(emb, wih, whh, bih, bhh, ids, h):
        x = jnp.take(emb, ids, axis=0).astype(jnp.float32)            # [L, B, H]
        hs = []
        for t in range(ids.shape[0]):
            gi = jnp.dot(x[t], wih.T, precision=hp) + bih
            gh = jnp.dot(h, whh.T, precision=hp) + bhh
            i_r, i_z, i_n = gi[:, :H], gi[:, H:2 * H], gi[:, 2 * H:]
            h_r, h_z, h_n = gh[:, :H], gh[:, H:2 * H], gh[:, 2 * H:]
            r = jax.nn.sigmoid(i_r + h_r)
            z = jax.nn.sigmoid(i_z + h_z)
            n = jnp.tanh(i_n + r * h_n)
            h = (1.0 - z) * n + z * h
            hs.append(h)
        return jnp.stack(hs), h

    B = input_ids.shape[1]
    h0 = jnp.zeros((B, H), jnp.float32)
    _, h_enc = gru_seq(params["enc_emb"], params["enc_wih"], params["enc_whh"],
                       params["enc_bih"], params["enc_bhh"], input_ids, h0)
    hs, h_dec = gru_seq(params["dec_emb"], params["dec_wih"], params["dec_whh"],
                        params["dec_bih"], params["dec_bhh"], target_ids, h_enc)
    logits = jnp.dot(hs, params["dec_wout"].T, precision=hp) + params["dec_bout"]
    return jax.nn.log_softmax(logits, axis=-1), h_dec[None]


# ---------------------------------------------------------------- params
def init_params(key):
    ks = jax.random.split(key, 12)
    scale = 1.0 / (H ** 0.5)
    u = lambda k, shape: jax.random.uniform(k, shape, jnp.float32, -scale, scale)
    return dict(
        enc_emb=jax.random.normal(ks[0], (V, H), jnp.float32),
        enc_wih=u(ks[1], (3 * H, H)),
        enc_whh=u(ks[2], (3 * H, H)),
        enc_bih=u(ks[3], (1, 3 * H)),
        enc_bhh=u(ks[4], (1, 3 * H)),
        dec_emb=jax.random.normal(ks[5], (V, H), jnp.float32),
        dec_wih=u(ks[6], (3 * H, H)),
        dec_whh=u(ks[7], (3 * H, H)),
        dec_bih=u(ks[8], (1, 3 * H)),
        dec_bhh=u(ks[9], (1, 3 * H)),
        dec_wout=u(ks[10], (V, H)),
        dec_bout=u(ks[11], (1, V)),
    )


if __name__ == "__main__":
    key = jax.random.PRNGKey(0)
    pkey, ikey, tkey = jax.random.split(key, 3)
    params = init_params(pkey)
    prepared = prepare_params(params)

    B, S, T = 2, 8, 8
    input_ids = jax.random.randint(ikey, (S, B), 0, V, dtype=jnp.int32)    # [S, B]
    target_ids = jax.random.randint(tkey, (T, B), 0, V, dtype=jnp.int32)   # [T, B]
    input_length = jnp.full((B,), S, dtype=jnp.int32)
    target_length = jnp.full((B,), T, dtype=jnp.int32)

    decoder_outputs, decoder_hidden = seq2seq_forward(
        prepared, input_ids, target_ids, input_length, target_length)
    jax.block_until_ready((decoder_outputs, decoder_hidden))

    assert decoder_outputs.shape == (T, B, V)
    assert decoder_hidden.shape == (1, B, H)
    # decoder_outputs are log-probs: each row should sum to ~1 after exp.
    assert jnp.allclose(jnp.sum(jnp.exp(decoder_outputs), axis=-1), 1.0, atol=1e-4)

    # Check against a pure-JAX reference of the same PyTorch-semantics forward
    # (kernel uses default TPU matmul precision vs HIGHEST in the reference).
    ref_logp, ref_hidden = reference_forward(params, input_ids, target_ids)
    assert jnp.max(jnp.abs(decoder_outputs - ref_logp)) < 1e-2
    assert jnp.max(jnp.abs(decoder_hidden - ref_hidden)) < 1e-2

    print("KERNEL_OK")
</pallas_src>

<mosaic_0001>
module attributes {stable_mosaic.version = 11 : i64} {
  func.func @seq2seq_kernel(%arg0: i32, %arg1: memref<16x1xi32, #tpu.memory_space<vmem>>, %arg2: memref<16x1xi32, #tpu.memory_space<vmem>>, %arg3: memref<32x32xf32, #tpu.memory_space<vmem>>, %arg4: memref<32x96xf32, #tpu.memory_space<vmem>>, %arg5: memref<32x96xf32, #tpu.memory_space<vmem>>, %arg6: memref<1x96xf32, #tpu.memory_space<vmem>>, %arg7: memref<1x32xf32, #tpu.memory_space<vmem>>, %arg8: memref<32x32xf32, #tpu.memory_space<vmem>>, %arg9: memref<32x96xf32, #tpu.memory_space<vmem>>, %arg10: memref<32x96xf32, #tpu.memory_space<vmem>>, %arg11: memref<1x96xf32, #tpu.memory_space<vmem>>, %arg12: memref<1x32xf32, #tpu.memory_space<vmem>>, %arg13: memref<32x32xf32, #tpu.memory_space<vmem>>, %arg14: memref<1x32xf32, #tpu.memory_space<vmem>>, %arg15: memref<16x32xf32, #tpu.memory_space<vmem>>, %arg16: memref<2x32xf32, #tpu.memory_space<vmem>>, %arg17: memref<16x32xf32, #tpu.memory_space<vmem>>) attributes {dimension_semantics = [#tpu.dimension_semantics<arbitrary>], iteration_bounds = array<i64: 1>, scalar_prefetch = 0 : i64, scratch_operands = 1 : i64, tpu.core_type = #tpu.core_type<tc>, window_params = [{pipeline_mode = #tpu.pipeline_mode<synchronous>, transform_indices = @transform_0, window_bounds = array<i64: 16, 1>}, {pipeline_mode = #tpu.pipeline_mode<synchronous>, transform_indices = @transform_1, window_bounds = array<i64: 16, 1>}, {pipeline_mode = #tpu.pipeline_mode<synchronous>, transform_indices = @transform_2, window_bounds = array<i64: 32, 32>}, {pipeline_mode = #tpu.pipeline_mode<synchronous>, transform_indices = @transform_3, window_bounds = array<i64: 32, 96>}, {pipeline_mode = #tpu.pipeline_mode<synchronous>, transform_indices = @transform_4, window_bounds = array<i64: 32, 96>}, {pipeline_mode = #tpu.pipeline_mode<synchronous>, transform_indices = @transform_5, window_bounds = array<i64: 1, 96>}, {pipeline_mode = #tpu.pipeline_mode<synchronous>, transform_indices = @transform_6, window_bounds = array<i64: 1, 32>}, {pipeline_mode = #tpu.pipeline_mode<synchronous>, transform_indices = @transform_7, window_bounds = array<i64: 32, 32>}, {pipeline_mode = #tpu.pipeline_mode<synchronous>, transform_indices = @transform_8, window_bounds = array<i64: 32, 96>}, {pipeline_mode = #tpu.pipeline_mode<synchronous>, transform_indices = @transform_9, window_bounds = array<i64: 32, 96>}, {pipeline_mode = #tpu.pipeline_mode<synchronous>, transform_indices = @transform_10, window_bounds = array<i64: 1, 96>}, {pipeline_mode = #tpu.pipeline_mode<synchronous>, transform_indices = @transform_11, window_bounds = array<i64: 1, 32>}, {pipeline_mode = #tpu.pipeline_mode<synchronous>, transform_indices = @transform_12, window_bounds = array<i64: 32, 32>}, {pipeline_mode = #tpu.pipeline_mode<synchronous>, transform_indices = @transform_13, window_bounds = array<i64: 1, 32>}, {pipeline_mode = #tpu.pipeline_mode<synchronous>, transform_indices = @transform_14, window_bounds = array<i64: 16, 32>}, {pipeline_mode = #tpu.pipeline_mode<synchronous>, transform_indices = @transform_15, window_bounds = array<i64: 2, 32>}]} {
    %c0 = arith.constant 0 : index
    %c0_0 = arith.constant 0 : index
    %0 = vector.load %arg3[%c0, %c0_0] : memref<32x32xf32, #tpu.memory_space<vmem>>, vector<32x32xf32>
    %c0_1 = arith.constant 0 : index
    %c0_2 = arith.constant 0 : index
    %1 = vector.load %arg4[%c0_1, %c0_2] : memref<32x96xf32, #tpu.memory_space<vmem>>, vector<32x96xf32>
    %cst = arith.constant dense<0.000000e+00> : vector<32x96xf32>
    %2 = tpu.matmul %0, %1, %cst {dimension_numbers = #tpu.dot_dimension_numbers<[1], [0], [0], [1], [0, 0, 1, 1], [], []>} : vector<32x32xf32>, vector<32x96xf32>, vector<32x96xf32> -> vector<32x96xf32>
    %c0_3 = arith.constant 0 : index
    %c0_4 = arith.constant 0 : index
    %3 = vector.load %arg6[%c0_3, %c0_4] : memref<1x96xf32, #tpu.memory_space<vmem>>, vector<1x96xf32>
    %4 = vector.broadcast %3 : vector<1x96xf32> to vector<32x96xf32>
    %5 = arith.addf %2, %4 : vector<32x96xf32>
    %c0_5 = arith.constant 0 : index
    %c0_6 = arith.constant 0 : index
    %6 = vector.load %arg8[%c0_5, %c0_6] : memref<32x32xf32, #tpu.memory_space<vmem>>, vector<32x32xf32>
    %c0_7 = arith.constant 0 : index
    %c0_8 = arith.constant 0 : index
    %7 = vector.load %arg9[%c0_7, %c0_8] : memref<32x96xf32, #tpu.memory_space<vmem>>, vector<32x96xf32>
    %cst_9 = arith.constant dense<0.000000e+00> : vector<32x96xf32>
    %8 = tpu.matmul %6, %7, %cst_9 {dimension_numbers = #tpu.dot_dimension_numbers<[1], [0], [0], [1], [0, 0, 1, 1], [], []>} : vector<32x32xf32>, vector<32x96xf32>, vector<32x96xf32> -> vector<32x96xf32>
    %c0_10 = arith.constant 0 : index
    %c0_11 = arith.constant 0 : index
    %9 = vector.load %arg11[%c0_10, %c0_11] : memref<1x96xf32, #tpu.memory_space<vmem>>, vector<1x96xf32>
    %10 = vector.broadcast %9 : vector<1x96xf32> to vector<32x96xf32>
    %11 = arith.addf %8, %10 : vector<32x96xf32>
    %c0_12 = arith.constant 0 : index
    %c0_13 = arith.constant 0 : index
    %12 = vector.load %arg1[%c0_12, %c0_13] : memref<16x1xi32, #tpu.memory_space<vmem>>, vector<16x1xi32>
    %13 = tpu.iota {dimensions = array<i32: 1>} : vector<16x32xi32>
    %14 = vector.broadcast %12 : vector<16x1xi32> to vector<16x32xi32>
    %15 = arith.cmpi eq, %13, %14 : vector<16x32xi32>
    %16 = arith.extui %15 : vector<16x32xi1> to vector<16x32xi32>
    %17 = arith.sitofp %16 : vector<16x32xi32> to vector<16x32xf32>
    %cst_14 = arith.constant dense<0.000000e+00> : vector<16x96xf32>
    %18 = tpu.matmul %17, %5, %cst_14 {dimension_numbers = #tpu.dot_dimension_numbers<[1], [0], [0], [1], [0, 0, 1, 1], [], []>} : vector<16x32xf32>, vector<32x96xf32>, vector<16x96xf32> -> vector<16x96xf32>
    %c0_15 = arith.constant 0 : index
    %c0_16 = arith.constant 0 : index
    %19 = vector.load %arg2[%c0_15, %c0_16] : memref<16x1xi32, #tpu.memory_space<vmem>>, vector<16x1xi32>
    %20 = tpu.iota {dimensions = array<i32: 1>} : vector<16x32xi32>
    %21 = vector.broadcast %19 : vector<16x1xi32> to vector<16x32xi32>
    %22 = arith.cmpi eq, %20, %21 : vector<16x32xi32>
    %23 = arith.extui %22 : vector<16x32xi1> to vector<16x32xi32>
    %24 = arith.sitofp %23 : vector<16x32xi32> to vector<16x32xf32>
    %cst_17 = arith.constant dense<0.000000e+00> : vector<16x96xf32>
    %25 = tpu.matmul %24, %11, %cst_17 {dimension_numbers = #tpu.dot_dimension_numbers<[1], [0], [0], [1], [0, 0, 1, 1], [], []>} : vector<16x32xf32>, vector<32x96xf32>, vector<16x96xf32> -> vector<16x96xf32>
    %c0_18 = arith.constant 0 : index
    %c0_19 = arith.constant 0 : index
    %26 = vector.load %arg5[%c0_18, %c0_19] : memref<32x96xf32, #tpu.memory_space<vmem>>, vector<32x96xf32>
    %c0_20 = arith.constant 0 : index
    %c0_21 = arith.constant 0 : index
    %27 = vector.load %arg10[%c0_20, %c0_21] : memref<32x96xf32, #tpu.memory_space<vmem>>, vector<32x96xf32>
    %c0_22 = arith.constant 0 : index
    %c0_23 = arith.constant 0 : index
    %28 = vector.load %arg7[%c0_22, %c0_23] : memref<1x32xf32, #tpu.memory_space<vmem>>, vector<1x32xf32>
    %29 = vector.shape_cast %28 : vector<1x32xf32> to vector<1x32xf32>
    %30 = vector.broadcast %29 : vector<1x32xf32> to vector<2x32xf32>
    %c0_24 = arith.constant 0 : index
    %c0_25 = arith.constant 0 : index
    %31 = vector.load %arg12[%c0_24, %c0_25] : memref<1x32xf32, #tpu.memory_space<vmem>>, vector<1x32xf32>
    %32 = vector.shape_cast %31 : vector<1x32xf32> to vector<1x32xf32>
    %33 = vector.broadcast %32 : vector<1x32xf32> to vector<2x32xf32>
    %cst_26 = arith.constant 0.000000e+00 : f32
    %34 = vector.broadcast %cst_26 : f32 to vector<2x32xf32>
    %35 = vector.extract_strided_slice %18 {offsets = [0, 0], sizes = [2, 96], strides = [1, 1]} : vector<16x96xf32> to vector<2x96xf32>
    %cst_27 = arith.constant dense<0.000000e+00> : vector<2x96xf32>
    %36 = tpu.matmul %34, %26, %cst_27 {dimension_numbers = #tpu.dot_dimension_numbers<[1], [0], [0], [1], [0, 0, 1, 1], [], []>} : vector<2x32xf32>, vector<32x96xf32>, vector<2x96xf32> -> vector<2x96xf32>
    %37 = vector.extract_strided_slice %35 {offsets = [0, 0], sizes = [2, 64], strides = [1, 1]} : vector<2x96xf32> to vector<2x64xf32>
    %38 = vector.extract_strided_slice %36 {offsets = [0, 0], sizes = [2, 64], strides = [1, 1]} : vector<2x96xf32> to vector<2x64xf32>
    %39 = arith.addf %37, %38 : vector<2x64xf32>
    %40 = arith.negf %39 : vector<2x64xf32>
    %41 = math.exp %40 : vector<2x64xf32>
    %cst_28 = arith.constant 1.000000e+00 : f32
    %42 = vector.broadcast %cst_28 : f32 to vector<2x64xf32>
    %43 = arith.addf %42, %41 : vector<2x64xf32>
    %44 = arith.divf %42, %43 : vector<2x64xf32>
    %45 = vector.extract_strided_slice %44 {offsets = [0, 0], sizes = [2, 32], strides = [1, 1]} : vector<2x64xf32> to vector<2x32xf32>
    %46 = vector.extract_strided_slice %44 {offsets = [0, 32], sizes = [2, 32], strides = [1, 1]} : vector<2x64xf32> to vector<2x32xf32>
    %47 = vector.extract_strided_slice %35 {offsets = [0, 64], sizes = [2, 32], strides = [1, 1]} : vector<2x96xf32> to vector<2x32xf32>
    %48 = vector.extract_strided_slice %36 {offsets = [0, 64], sizes = [2, 32], strides = [1, 1]} : vector<2x96xf32> to vector<2x32xf32>
    %49 = arith.addf %48, %30 : vector<2x32xf32>
    %50 = arith.mulf %45, %49 : vector<2x32xf32>
    %51 = arith.addf %47, %50 : vector<2x32xf32>
    %52 = math.tanh %51 : vector<2x32xf32>
    %cst_29 = arith.constant 1.000000e+00 : f32
    %53 = vector.broadcast %cst_29 : f32 to vector<2x32xf32>
    %54 = arith.subf %53, %46 : vector<2x32xf32>
    %55 = arith.mulf %54, %52 : vector<2x32xf32>
    %56 = arith.mulf %46, %34 : vector<2x32xf32>
    %57 = arith.addf %55, %56 : vector<2x32xf32>
    %58 = vector.extract_strided_slice %18 {offsets = [2, 0], sizes = [2, 96], strides = [1, 1]} : vector<16x96xf32> to vector<2x96xf32>
    %cst_30 = arith.constant dense<0.000000e+00> : vector<2x96xf32>
    %59 = tpu.matmul %57, %26, %cst_30 {dimension_numbers = #tpu.dot_dimension_numbers<[1], [0], [0], [1], [0, 0, 1, 1], [], []>} : vector<2x32xf32>, vector<32x96xf32>, vector<2x96xf32> -> vector<2x96xf32>
    %60 = vector.extract_strided_slice %58 {offsets = [0, 0], sizes = [2, 64], strides = [1, 1]} : vector<2x96xf32> to vector<2x64xf32>
    %61 = vector.extract_strided_slice %59 {offsets = [0, 0], sizes = [2, 64], strides = [1, 1]} : vector<2x96xf32> to vector<2x64xf32>
    %62 = arith.addf %60, %61 : vector<2x64xf32>
    %63 = arith.negf %62 : vector<2x64xf32>
    %64 = math.exp %63 : vector<2x64xf32>
    %cst_31 = arith.constant 1.000000e+00 : f32
    %65 = vector.broadcast %cst_31 : f32 to vector<2x64xf32>
    %66 = arith.addf %65, %64 : vector<2x64xf32>
    %67 = arith.divf %65, %66 : vector<2x64xf32>
    %68 = vector.extract_strided_slice %67 {offsets = [0, 0], sizes = [2, 32], strides = [1, 1]} : vector<2x64xf32> to vector<2x32xf32>
    %69 = vector.extract_strided_slice %67 {offsets = [0, 32], sizes = [2, 32], strides = [1, 1]} : vector<2x64xf32> to vector<2x32xf32>
    %70 = vector.extract_strided_slice %58 {offsets = [0, 64], sizes = [2, 32], strides = [1, 1]} : vector<2x96xf32> to vector<2x32xf32>
    %71 = vector.extract_strided_slice %59 {offsets = [0, 64], sizes = [2, 32], strides = [1, 1]} : vector<2x96xf32> to vector<2x32xf32>
    %72 = arith.addf %71, %30 : vector<2x32xf32>
    %73 = arith.mulf %68, %72 : vector<2x32xf32>
    %74 = arith.addf %70, %73 : vector<2x32xf32>
    %75 = math.tanh %74 : vector<2x32xf32>
    %cst_32 = arith.constant 1.000000e+00 : f32
    %76 = vector.broadcast %cst_32 : f32 to vector<2x32xf32>
    %77 = arith.subf %76, %69 : vector<2x32xf32>
    %78 = arith.mulf %77, %75 : vector<2x32xf32>
    %79 = arith.mulf %69, %57 : vector<2x32xf32>
    %80 = arith.addf %78, %79 : vector<2x32xf32>
    %81 = vector.extract_strided_slice %18 {offsets = [4, 0], sizes = [2, 96], strides = [1, 1]} : vector<16x96xf32> to vector<2x96xf32>
    %cst_33 = arith.constant dense<0.000000e+00> : vector<2x96xf32>
    %82 = tpu.matmul %80, %26, %cst_33 {dimension_numbers = #tpu.dot_dimension_numbers<[1], [0], [0], [1], [0, 0, 1, 1], [], []>} : vector<2x32xf32>, vector<32x96xf32>, vector<2x96xf32> -> vector<2x96xf32>
    %83 = vector.extract_strided_slice %81 {offsets = [0, 0], sizes = [2, 64], strides = [1, 1]} : vector<2x96xf32> to vector<2x64xf32>
    %84 = vector.extract_strided_slice %82 {offsets = [0, 0], sizes = [2, 64], strides = [1, 1]} : vector<2x96xf32> to vector<2x64xf32>
    %85 = arith.addf %83, %84 : vector<2x64xf32>
    %86 = arith.negf %85 : vector<2x64xf32>
    %87 = math.exp %86 : vector<2x64xf32>
    %cst_34 = arith.constant 1.000000e+00 : f32
    %88 = vector.broadcast %cst_34 : f32 to vector<2x64xf32>
    %89 = arith.addf %88, %87 : vector<2x64xf32>
    %90 = arith.divf %88, %89 : vector<2x64xf32>
    %91 = vector.extract_strided_slice %90 {offsets = [0, 0], sizes = [2, 32], strides = [1, 1]} : vector<2x64xf32> to vector<2x32xf32>
    %92 = vector.extract_strided_slice %90 {offsets = [0, 32], sizes = [2, 32], strides = [1, 1]} : vector<2x64xf32> to vector<2x32xf32>
    %93 = vector.extract_strided_slice %81 {offsets = [0, 64], sizes = [2, 32], strides = [1, 1]} : vector<2x96xf32> to vector<2x32xf32>
    %94 = vector.extract_strided_slice %82 {offsets = [0, 64], sizes = [2, 32], strides = [1, 1]} : vector<2x96xf32> to vector<2x32xf32>
    %95 = arith.addf %94, %30 : vector<2x32xf32>
    %96 = arith.mulf %91, %95 : vector<2x32xf32>
    %97 = arith.addf %93, %96 : vector<2x32xf32>
    %98 = math.tanh %97 : vector<2x32xf32>
    %cst_35 = arith.constant 1.000000e+00 : f32
    %99 = vector.broadcast %cst_35 : f32 to vector<2x32xf32>
    %100 = arith.subf %99, %92 : vector<2x32xf32>
    %101 = arith.mulf %100, %98 : vector<2x32xf32>
    %102 = arith.mulf %92, %80 : vector<2x32xf32>
    %103 = arith.addf %101, %102 : vector<2x32xf32>
    %104 = vector.extract_strided_slice %18 {offsets = [6, 0], sizes = [2, 96], strides = [1, 1]} : vector<16x96xf32> to vector<2x96xf32>
    %cst_36 = arith.constant dense<0.000000e+00> : vector<2x96xf32>
    %105 = tpu.matmul %103, %26, %cst_36 {dimension_numbers = #tpu.dot_dimension_numbers<[1], [0], [0], [1], [0, 0, 1, 1], [], []>} : vector<2x32xf32>, vector<32x96xf32>, vector<2x96xf32> -> vector<2x96xf32>
    %106 = vector.extract_strided_slice %104 {offsets = [0, 0], sizes = [2, 64], strides = [1, 1]} : vector<2x96xf32> to vector<2x64xf32>
    %107 = vector.extract_strided_slice %105 {offsets = [0, 0], sizes = [2, 64], strides = [1, 1]} : vector<2x96xf32> to vector<2x64xf32>
    %108 = arith.addf %106, %107 : vector<2x64xf32>
    %109 = arith.negf %108 : vector<2x64xf32>
    %110 = math.exp %109 : vector<2x64xf32>
    %cst_37 = arith.constant 1.000000e+00 : f32
    %111 = vector.broadcast %cst_37 : f32 to vector<2x64xf32>
    %112 = arith.addf %111, %110 : vector<2x64xf32>
    %113 = arith.divf %111, %112 : vector<2x64xf32>
    %114 = vector.extract_strided_slice %113 {offsets = [0, 0], sizes = [2, 32], strides = [1, 1]} : vector<2x64xf32> to vector<2x32xf32>
    %115 = vector.extract_strided_slice %113 {offsets = [0, 32], sizes = [2, 32], strides = [1, 1]} : vector<2x64xf32> to vector<2x32xf32>
    %116 = vector.extract_strided_slice %104 {offsets = [0, 64], sizes = [2, 32], strides = [1, 1]} : vector<2x96xf32> to vector<2x32xf32>
    %117 = vector.extract_strided_slice %105 {offsets = [0, 64], sizes = [2, 32], strides = [1, 1]} : vector<2x96xf32> to vector<2x32xf32>
    %118 = arith.addf %117, %30 : vector<2x32xf32>
    %119 = arith.mulf %114, %118 : vector<2x32xf32>
    %120 = arith.addf %116, %119 : vector<2x32xf32>
    %121 = math.tanh %120 : vector<2x32xf32>
    %cst_38 = arith.constant 1.000000e+00 : f32
    %122 = vector.broadcast %cst_38 : f32 to vector<2x32xf32>
    %123 = arith.subf %122, %115 : vector<2x32xf32>
    %124 = arith.mulf %123, %121 : vector<2x32xf32>
    %125 = arith.mulf %115, %103 : vector<2x32xf32>
    %126 = arith.addf %124, %125 : vector<2x32xf32>
    %127 = vector.extract_strided_slice %18 {offsets = [8, 0], sizes = [2, 96], strides = [1, 1]} : vector<16x96xf32> to vector<2x96xf32>
    %cst_39 = arith.constant dense<0.000000e+00> : vector<2x96xf32>
    %128 = tpu.matmul %126, %26, %cst_39 {dimension_numbers = #tpu.dot_dimension_numbers<[1], [0], [0], [1], [0, 0, 1, 1], [], []>} : vector<2x32xf32>, vector<32x96xf32>, vector<2x96xf32> -> vector<2x96xf32>
    %129 = vector.extract_strided_slice %127 {offsets = [0, 0], sizes = [2, 64], strides = [1, 1]} : vector<2x96xf32> to vector<2x64xf32>
    %130 = vector.extract_strided_slice %128 {offsets = [0, 0], sizes = [2, 64], strides = [1, 1]} : vector<2x96xf32> to vector<2x64xf32>
    %131 = arith.addf %129, %130 : vector<2x64xf32>
    %132 = arith.negf %131 : vector<2x64xf32>
    %133 = math.exp %132 : vector<2x64xf32>
    %cst_40 = arith.constant 1.000000e+00 : f32
    %134 = vector.broadcast %cst_40 : f32 to vector<2x64xf32>
    %135 = arith.addf %134, %133 : vector<2x64xf32>
    %136 = arith.divf %134, %135 : vector<2x64xf32>
    %137 = vector.extract_strided_slice %136 {offsets = [0, 0], sizes = [2, 32], strides = [1, 1]} : vector<2x64xf32> to vector<2x32xf32>
    %138 = vector.extract_strided_slice %136 {offsets = [0, 32], sizes = [2, 32], strides = [1, 1]} : vector<2x64xf32> to vector<2x32xf32>
    %139 = vector.extract_strided_slice %127 {offsets = [0, 64], sizes = [2, 32], strides = [1, 1]} : vector<2x96xf32> to vector<2x32xf32>
    %140 = vector.extract_strided_slice %128 {offsets = [0, 64], sizes = [2, 32], strides = [1, 1]} : vector<2x96xf32> to vector<2x32xf32>
    %141 = arith.addf %140, %30 : vector<2x32xf32>
    %142 = arith.mulf %137, %141 : vector<2x32xf32>
    %143 = arith.addf %139, %142 : vector<2x32xf32>
    %144 = math.tanh %143 : vector<2x32xf32>
    %cst_41 = arith.constant 1.000000e+00 : f32
    %145 = vector.broadcast %cst_41 : f32 to vector<2x32xf32>
    %146 = arith.subf %145, %138 : vector<2x32xf32>
    %147 = arith.mulf %146, %144 : vector<2x32xf32>
    %148 = arith.mulf %138, %126 : vector<2x32xf32>
    %149 = arith.addf %147, %148 : vector<2x32xf32>
    %150 = vector.extract_strided_slice %18 {offsets = [10, 0], sizes = [2, 96], strides = [1, 1]} : vector<16x96xf32> to vector<2x96xf32>
    %cst_42 = arith.constant dense<0.000000e+00> : vector<2x96xf32>
    %151 = tpu.matmul %149, %26, %cst_42 {dimension_numbers = #tpu.dot_dimension_numbers<[1], [0], [0], [1], [0, 0, 1, 1], [], []>} : vector<2x32xf32>, vector<32x96xf32>, vector<2x96xf32> -> vector<2x96xf32>
    %152 = vector.extract_strided_slice %150 {offsets = [0, 0], sizes = [2, 64], strides = [1, 1]} : vector<2x96xf32> to vector<2x64xf32>
    %153 = vector.extract_strided_slice %151 {offsets = [0, 0], sizes = [2, 64], strides = [1, 1]} : vector<2x96xf32> to vector<2x64xf32>
    %154 = arith.addf %152, %153 : vector<2x64xf32>
    %155 = arith.negf %154 : vector<2x64xf32>
    %156 = math.exp %155 : vector<2x64xf32>
    %cst_43 = arith.constant 1.000000e+00 : f32
    %157 = vector.broadcast %cst_43 : f32 to vector<2x64xf32>
    %158 = arith.addf %157, %156 : vector<2x64xf32>
    %159 = arith.divf %157, %158 : vector<2x64xf32>
    %160 = vector.extract_strided_slice %159 {offsets = [0, 0], sizes = [2, 32], strides = [1, 1]} : vector<2x64xf32> to vector<2x32xf32>
    %161 = vector.extract_strided_slice %159 {offsets = [0, 32], sizes = [2, 32], strides = [1, 1]} : vector<2x64xf32> to vector<2x32xf32>
    %162 = vector.extract_strided_slice %150 {offsets = [0, 64], sizes = [2, 32], strides = [1, 1]} : vector<2x96xf32> to vector<2x32xf32>
    %163 = vector.extract_strided_slice %151 {offsets = [0, 64], sizes = [2, 32], strides = [1, 1]} : vector<2x96xf32> to vector<2x32xf32>
    %164 = arith.addf %163, %30 : vector<2x32xf32>
    %165 = arith.mulf %160, %164 : vector<2x32xf32>
    %166 = arith.addf %162, %165 : vector<2x32xf32>
    %167 = math.tanh %166 : vector<2x32xf32>
    %cst_44 = arith.constant 1.000000e+00 : f32
    %168 = vector.broadcast %cst_44 : f32 to vector<2x32xf32>
    %169 = arith.subf %168, %161 : vector<2x32xf32>
    %170 = arith.mulf %169, %167 : vector<2x32xf32>
    %171 = arith.mulf %161, %149 : vector<2x32xf32>
    %172 = arith.addf %170, %171 : vector<2x32xf32>
    %173 = vector.extract_strided_slice %18 {offsets = [12, 0], sizes = [2, 96], strides = [1, 1]} : vector<16x96xf32> to vector<2x96xf32>
    %cst_45 = arith.constant dense<0.000000e+00> : vector<2x96xf32>
    %174 = tpu.matmul %172, %26, %cst_45 {dimension_numbers = #tpu.dot_dimension_numbers<[1], [0], [0], [1], [0, 0, 1, 1], [], []>} : vector<2x32xf32>, vector<32x96xf32>, vector<2x96xf32> -> vector<2x96xf32>
    %175 = vector.extract_strided_slice %173 {offsets = [0, 0], sizes = [2, 64], strides = [1, 1]} : vector<2x96xf32> to vector<2x64xf32>
    %176 = vector.extract_strided_slice %174 {offsets = [0, 0], sizes = [2, 64], strides = [1, 1]} : vector<2x96xf32> to vector<2x64xf32>
    %177 = arith.addf %175, %176 : vector<2x64xf32>
    %178 = arith.negf %177 : vector<2x64xf32>
    %179 = math.exp %178 : vector<2x64xf32>
    %cst_46 = arith.constant 1.000000e+00 : f32
    %180 = vector.broadcast %cst_46 : f32 to vector<2x64xf32>
    %181 = arith.addf %180, %179 : vector<2x64xf32>
    %182 = arith.divf %180, %181 : vector<2x64xf32>
    %183 = vector.extract_strided_slice %182 {offsets = [0, 0], sizes = [2, 32], strides = [1, 1]} : vector<2x64xf32> to vector<2x32xf32>
    %184 = vector.extract_strided_slice %182 {offsets = [0, 32], sizes = [2, 32], strides = [1, 1]} : vector<2x64xf32> to vector<2x32xf32>
    %185 = vector.extract_strided_slice %173 {offsets = [0, 64], sizes = [2, 32], strides = [1, 1]} : vector<2x96xf32> to vector<2x32xf32>
    %186 = vector.extract_strided_slice %174 {offsets = [0, 64], sizes = [2, 32], strides = [1, 1]} : vector<2x96xf32> to vector<2x32xf32>
    %187 = arith.addf %186, %30 : vector<2x32xf32>
    %188 = arith.mulf %183, %187 : vector<2x32xf32>
    %189 = arith.addf %185, %188 : vector<2x32xf32>
    %190 = math.tanh %189 : vector<2x32xf32>
    %cst_47 = arith.constant 1.000000e+00 : f32
    %191 = vector.broadcast %cst_47 : f32 to vector<2x32xf32>
    %192 = arith.subf %191, %184 : vector<2x32xf32>
    %193 = arith.mulf %192, %190 : vector<2x32xf32>
    %194 = arith.mulf %184, %172 : vector<2x32xf32>
    %195 = arith.addf %193, %194 : vector<2x32xf32>
    %196 = vector.extract_strided_slice %18 {offsets = [14, 0], sizes = [2, 96], strides = [1, 1]} : vector<16x96xf32> to vector<2x96xf32>
    %cst_48 = arith.constant dense<0.000000e+00> : vector<2x96xf32>
    %197 = tpu.matmul %195, %26, %cst_48 {dimension_numbers = #tpu.dot_dimension_numbers<[1], [0], [0], [1], [0, 0, 1, 1], [], []>} : vector<2x32xf32>, vector<32x96xf32>, vector<2x96xf32> -> vector<2x96xf32>
    %198 = vector.extract_strided_slice %196 {offsets = [0, 0], sizes = [2, 64], strides = [1, 1]} : vector<2x96xf32> to vector<2x64xf32>
    %199 = vector.extract_strided_slice %197 {offsets = [0, 0], sizes = [2, 64], strides = [1, 1]} : vector<2x96xf32> to vector<2x64xf32>
    %200 = arith.addf %198, %199 : vector<2x64xf32>
    %201 = arith.negf %200 : vector<2x64xf32>
    %202 = math.exp %201 : vector<2x64xf32>
    %cst_49 = arith.constant 1.000000e+00 : f32
    %203 = vector.broadcast %cst_49 : f32 to vector<2x64xf32>
    %204 = arith.addf %203, %202 : vector<2x64xf32>
    %205 = arith.divf %203, %204 : vector<2x64xf32>
    %206 = vector.extract_strided_slice %205 {offsets = [0, 0], sizes = [2, 32], strides = [1, 1]} : vector<2x64xf32> to vector<2x32xf32>
    %207 = vector.extract_strided_slice %205 {offsets = [0, 32], sizes = [2, 32], strides = [1, 1]} : vector<2x64xf32> to vector<2x32xf32>
    %208 = vector.extract_strided_slice %196 {offsets = [0, 64], sizes = [2, 32], strides = [1, 1]} : vector<2x96xf32> to vector<2x32xf32>
    %209 = vector.extract_strided_slice %197 {offsets = [0, 64], sizes = [2, 32], strides = [1, 1]} : vector<2x96xf32> to vector<2x32xf32>
    %210 = arith.addf %209, %30 : vector<2x32xf32>
    %211 = arith.mulf %206, %210 : vector<2x32xf32>
    %212 = arith.addf %208, %211 : vector<2x32xf32>
    %213 = math.tanh %212 : vector<2x32xf32>
    %cst_50 = arith.constant 1.000000e+00 : f32
    %214 = vector.broadcast %cst_50 : f32 to vector<2x32xf32>
    %215 = arith.subf %214, %207 : vector<2x32xf32>
    %216 = arith.mulf %215, %213 : vector<2x32xf32>
    %217 = arith.mulf %207, %195 : vector<2x32xf32>
    %218 = arith.addf %216, %217 : vector<2x32xf32>
    %219 = vector.extract_strided_slice %25 {offsets = [0, 0], sizes = [2, 96], strides = [1, 1]} : vector<16x96xf32> to vector<2x96xf32>
    %cst_51 = arith.constant dense<0.000000e+00> : vector<2x96xf32>
    %220 = tpu.matmul %218, %27, %cst_51 {dimension_numbers = #tpu.dot_dimension_numbers<[1], [0], [0], [1], [0, 0, 1, 1], [], []>} : vector<2x32xf32>, vector<32x96xf32>, vector<2x96xf32> -> vector<2x96xf32>
    %221 = vector.extract_strided_slice %219 {offsets = [0, 0], sizes = [2, 64], strides = [1, 1]} : vector<2x96xf32> to vector<2x64xf32>
    %222 = vector.extract_strided_slice %220 {offsets = [0, 0], sizes = [2, 64], strides = [1, 1]} : vector<2x96xf32> to vector<2x64xf32>
    %223 = arith.addf %221, %222 : vector<2x64xf32>
    %224 = arith.negf %223 : vector<2x64xf32>
    %225 = math.exp %224 : vector<2x64xf32>
    %cst_52 = arith.constant 1.000000e+00 : f32
    %226 = vector.broadcast %cst_52 : f32 to vector<2x64xf32>
    %227 = arith.addf %226, %225 : vector<2x64xf32>
    %228 = arith.divf %226, %227 : vector<2x64xf32>
    %229 = vector.extract_strided_slice %228 {offsets = [0, 0], sizes = [2, 32], strides = [1, 1]} : vector<2x64xf32> to vector<2x32xf32>
    %230 = vector.extract_strided_slice %228 {offsets = [0, 32], sizes = [2, 32], strides = [1, 1]} : vector<2x64xf32> to vector<2x32xf32>
    %231 = vector.extract_strided_slice %219 {offsets = [0, 64], sizes = [2, 32], strides = [1, 1]} : vector<2x96xf32> to vector<2x32xf32>
    %232 = vector.extract_strided_slice %220 {offsets = [0, 64], sizes = [2, 32], strides = [1, 1]} : vector<2x96xf32> to vector<2x32xf32>
    %233 = arith.addf %232, %33 : vector<2x32xf32>
    %234 = arith.mulf %229, %233 : vector<2x32xf32>
    %235 = arith.addf %231, %234 : vector<2x32xf32>
    %236 = math.tanh %235 : vector<2x32xf32>
    %cst_53 = arith.constant 1.000000e+00 : f32
    %237 = vector.broadcast %cst_53 : f32 to vector<2x32xf32>
    %238 = arith.subf %237, %230 : vector<2x32xf32>
    %239 = arith.mulf %238, %236 : vector<2x32xf32>
    %240 = arith.mulf %230, %218 : vector<2x32xf32>
    %241 = arith.addf %239, %240 : vector<2x32xf32>
    %c0_54 = arith.constant 0 : index
    %c0_55 = arith.constant 0 : index
    %242 = vector.load %arg17[%c0_54, %c0_55] : memref<16x32xf32, #tpu.memory_space<vmem>>, vector<2x32xf32>
    tpu.vector_store %arg17[%c0_54, %c0_55], %241 {strides = array<i32>} : memref<16x32xf32, #tpu.memory_space<vmem>>, vector<2x32xf32>,
    %243 = vector.extract_strided_slice %25 {offsets = [2, 0], sizes = [2, 96], strides = [1, 1]} : vector<16x96xf32> to vector<2x96xf32>
    %cst_56 = arith.constant dense<0.000000e+00> : vector<2x96xf32>
    %244 = tpu.matmul %241, %27, %cst_56 {dimension_numbers = #tpu.dot_dimension_numbers<[1], [0], [0], [1], [0, 0, 1, 1], [], []>} : vector<2x32xf32>, vector<32x96xf32>, vector<2x96xf32> -> vector<2x96xf32>
    %245 = vector.extract_strided_slice %243 {offsets = [0, 0], sizes = [2, 64], strides = [1, 1]} : vector<2x96xf32> to vector<2x64xf32>
    %246 = vector.extract_strided_slice %244 {offsets = [0, 0], sizes = [2, 64], strides = [1, 1]} : vector<2x96xf32> to vector<2x64xf32>
    %247 = arith.addf %245, %246 : vector<2x64xf32>
    %248 = arith.negf %247 : vector<2x64xf32>
    %249 = math.exp %248 : vector<2x64xf32>
    %cst_57 = arith.constant 1.000000e+00 : f32
    %250 = vector.broadcast %cst_57 : f32 to vector<2x64xf32>
    %251 = arith.addf %250, %249 : vector<2x64xf32>
    %252 = arith.divf %250, %251 : vector<2x64xf32>
    %253 = vector.extract_strided_slice %252 {offsets = [0, 0], sizes = [2, 32], strides = [1, 1]} : vector<2x64xf32> to vector<2x32xf32>
    %254 = vector.extract_strided_slice %252 {offsets = [0, 32], sizes = [2, 32], strides = [1, 1]} : vector<2x64xf32> to vector<2x32xf32>
    %255 = vector.extract_strided_slice %243 {offsets = [0, 64], sizes = [2, 32], strides = [1, 1]} : vector<2x96xf32> to vector<2x32xf32>
    %256 = vector.extract_strided_slice %244 {offsets = [0, 64], sizes = [2, 32], strides = [1, 1]} : vector<2x96xf32> to vector<2x32xf32>
    %257 = arith.addf %256, %33 : vector<2x32xf32>
    %258 = arith.mulf %253, %257 : vector<2x32xf32>
    %259 = arith.addf %255, %258 : vector<2x32xf32>
    %260 = math.tanh %259 : vector<2x32xf32>
    %cst_58 = arith.constant 1.000000e+00 : f32
    %261 = vector.broadcast %cst_58 : f32 to vector<2x32xf32>
    %262 = arith.subf %261, %254 : vector<2x32xf32>
    %263 = arith.mulf %262, %260 : vector<2x32xf32>
    %264 = arith.mulf %254, %241 : vector<2x32xf32>
    %265 = arith.addf %263, %264 : vector<2x32xf32>
    %c2 = arith.constant 2 : index
    %c0_59 = arith.constant 0 : index
    %266 = vector.load %arg17[%c2, %c0_59] : memref<16x32xf32, #tpu.memory_space<vmem>>, vector<2x32xf32>
    tpu.vector_store %arg17[%c2, %c0_59], %265 {strides = array<i32>} : memref<16x32xf32, #tpu.memory_space<vmem>>, vector<2x32xf32>,
    %267 = vector.extract_strided_slice %25 {offsets = [4, 0], sizes = [2, 96], strides = [1, 1]} : vector<16x96xf32> to vector<2x96xf32>
    %cst_60 = arith.constant dense<0.000000e+00> : vector<2x96xf32>
    %268 = tpu.matmul %265, %27, %cst_60 {dimension_numbers = #tpu.dot_dimension_numbers<[1], [0], [0], [1], [0, 0, 1, 1], [], []>} : vector<2x32xf32>, vector<32x96xf32>, vector<2x96xf32> -> vector<2x96xf32>
    %269 = vector.extract_strided_slice %267 {offsets = [0, 0], sizes = [2, 64], strides = [1, 1]} : vector<2x96xf32> to vector<2x64xf32>
    %270 = vector.extract_strided_slice %268 {offsets = [0, 0], sizes = [2, 64], strides = [1, 1]} : vector<2x96xf32> to vector<2x64xf32>
    %271 = arith.addf %269, %270 : vector<2x64xf32>
    %272 = arith.negf %271 : vector<2x64xf32>
    %273 = math.exp %272 : vector<2x64xf32>
    %cst_61 = arith.constant 1.000000e+00 : f32
    %274 = vector.broadcast %cst_61 : f32 to vector<2x64xf32>
    %275 = arith.addf %274, %273 : vector<2x64xf32>
    %276 = arith.divf %274, %275 : vector<2x64xf32>
    %277 = vector.extract_strided_slice %276 {offsets = [0, 0], sizes = [2, 32], strides = [1, 1]} : vector<2x64xf32> to vector<2x32xf32>
    %278 = vector.extract_strided_slice %276 {offsets = [0, 32], sizes = [2, 32], strides = [1, 1]} : vector<2x64xf32> to vector<2x32xf32>
    %279 = vector.extract_strided_slice %267 {offsets = [0, 64], sizes = [2, 32], strides = [1, 1]} : vector<2x96xf32> to vector<2x32xf32>
    %280 = vector.extract_strided_slice %268 {offsets = [0, 64], sizes = [2, 32], strides = [1, 1]} : vector<2x96xf32> to vector<2x32xf32>
    %281 = arith.addf %280, %33 : vector<2x32xf32>
    %282 = arith.mulf %277, %281 : vector<2x32xf32>
    %283 = arith.addf %279, %282 : vector<2x32xf32>
    %284 = math.tanh %283 : vector<2x32xf32>
    %cst_62 = arith.constant 1.000000e+00 : f32
    %285 = vector.broadcast %cst_62 : f32 to vector<2x32xf32>
    %286 = arith.subf %285, %278 : vector<2x32xf32>
    %287 = arith.mulf %286, %284 : vector<2x32xf32>
    %288 = arith.mulf %278, %265 : vector<2x32xf32>
    %289 = arith.addf %287, %288 : vector<2x32xf32>
    %c4 = arith.constant 4 : index
    %c0_63 = arith.constant 0 : index
    %290 = vector.load %arg17[%c4, %c0_63] : memref<16x32xf32, #tpu.memory_space<vmem>>, vector<2x32xf32>
    tpu.vector_store %arg17[%c4, %c0_63], %289 {strides = array<i32>} : memref<16x32xf32, #tpu.memory_space<vmem>>, vector<2x32xf32>,
    %291 = vector.extract_strided_slice %25 {offsets = [6, 0], sizes = [2, 96], strides = [1, 1]} : vector<16x96xf32> to vector<2x96xf32>
    %cst_64 = arith.constant dense<0.000000e+00> : vector<2x96xf32>
    %292 = tpu.matmul %289, %27, %cst_64 {dimension_numbers = #tpu.dot_dimension_numbers<[1], [0], [0], [1], [0, 0, 1, 1], [], []>} : vector<2x32xf32>, vector<32x96xf32>, vector<2x96xf32> -> vector<2x96xf32>
    %293 = vector.extract_strided_slice %291 {offsets = [0, 0], sizes = [2, 64], strides = [1, 1]} : vector<2x96xf32> to vector<2x64xf32>
    %294 = vector.extract_strided_slice %292 {offsets = [0, 0], sizes = [2, 64], strides = [1, 1]} : vector<2x96xf32> to vector<2x64xf32>
    %295 = arith.addf %293, %294 : vector<2x64xf32>
    %296 = arith.negf %295 : vector<2x64xf32>
    %297 = math.exp %296 : vector<2x64xf32>
    %cst_65 = arith.constant 1.000000e+00 : f32
    %298 = vector.broadcast %cst_65 : f32 to vector<2x64xf32>
    %299 = arith.addf %298, %297 : vector<2x64xf32>
    %300 = arith.divf %298, %299 : vector<2x64xf32>
    %301 = vector.extract_strided_slice %300 {offsets = [0, 0], sizes = [2, 32], strides = [1, 1]} : vector<2x64xf32> to vector<2x32xf32>
    %302 = vector.extract_strided_slice %300 {offsets = [0, 32], sizes = [2, 32], strides = [1, 1]} : vector<2x64xf32> to vector<2x32xf32>
    %303 = vector.extract_strided_slice %291 {offsets = [0, 64], sizes = [2, 32], strides = [1, 1]} : vector<2x96xf32> to vector<2x32xf32>
    %304 = vector.extract_strided_slice %292 {offsets = [0, 64], sizes = [2, 32], strides = [1, 1]} : vector<2x96xf32> to vector<2x32xf32>
    %305 = arith.addf %304, %33 : vector<2x32xf32>
    %306 = arith.mulf %301, %305 : vector<2x32xf32>
    %307 = arith.addf %303, %306 : vector<2x32xf32>
    %308 = math.tanh %307 : vector<2x32xf32>
    %cst_66 = arith.constant 1.000000e+00 : f32
    %309 = vector.broadcast %cst_66 : f32 to vector<2x32xf32>
    %310 = arith.subf %309, %302 : vector<2x32xf32>
    %311 = arith.mulf %310, %308 : vector<2x32xf32>
    %312 = arith.mulf %302, %289 : vector<2x32xf32>
    %313 = arith.addf %311, %312 : vector<2x32xf32>
    %c6 = arith.constant 6 : index
    %c0_67 = arith.constant 0 : index
    %314 = vector.load %arg17[%c6, %c0_67] : memref<16x32xf32, #tpu.memory_space<vmem>>, vector<2x32xf32>
    tpu.vector_store %arg17[%c6, %c0_67], %313 {strides = array<i32>} : memref<16x32xf32, #tpu.memory_space<vmem>>, vector<2x32xf32>,
    %315 = vector.extract_strided_slice %25 {offsets = [8, 0], sizes = [2, 96], strides = [1, 1]} : vector<16x96xf32> to vector<2x96xf32>
    %cst_68 = arith.constant dense<0.000000e+00> : vector<2x96xf32>
    %316 = tpu.matmul %313, %27, %cst_68 {dimension_numbers = #tpu.dot_dimension_numbers<[1], [0], [0], [1], [0, 0, 1, 1], [], []>} : vector<2x32xf32>, vector<32x96xf32>, vector<2x96xf32> -> vector<2x96xf32>
    %317 = vector.extract_strided_slice %315 {offsets = [0, 0], sizes = [2, 64], strides = [1, 1]} : vector<2x96xf32> to vector<2x64xf32>
    %318 = vector.extract_strided_slice %316 {offsets = [0, 0], sizes = [2, 64], strides = [1, 1]} : vector<2x96xf32> to vector<2x64xf32>
    %319 = arith.addf %317, %318 : vector<2x64xf32>
    %320 = arith.negf %319 : vector<2x64xf32>
    %321 = math.exp %320 : vector<2x64xf32>
    %cst_69 = arith.constant 1.000000e+00 : f32
    %322 = vector.broadcast %cst_69 : f32 to vector<2x64xf32>
    %323 = arith.addf %322, %321 : vector<2x64xf32>
    %324 = arith.divf %322, %323 : vector<2x64xf32>
    %325 = vector.extract_strided_slice %324 {offsets = [0, 0], sizes = [2, 32], strides = [1, 1]} : vector<2x64xf32> to vector<2x32xf32>
    %326 = vector.extract_strided_slice %324 {offsets = [0, 32], sizes = [2, 32], strides = [1, 1]} : vector<2x64xf32> to vector<2x32xf32>
    %327 = vector.extract_strided_slice %315 {offsets = [0, 64], sizes = [2, 32], strides = [1, 1]} : vector<2x96xf32> to vector<2x32xf32>
    %328 = vector.extract_strided_slice %316 {offsets = [0, 64], sizes = [2, 32], strides = [1, 1]} : vector<2x96xf32> to vector<2x32xf32>
    %329 = arith.addf %328, %33 : vector<2x32xf32>
    %330 = arith.mulf %325, %329 : vector<2x32xf32>
    %331 = arith.addf %327, %330 : vector<2x32xf32>
    %332 = math.tanh %331 : vector<2x32xf32>
    %cst_70 = arith.constant 1.000000e+00 : f32
    %333 = vector.broadcast %cst_70 : f32 to vector<2x32xf32>
    %334 = arith.subf %333, %326 : vector<2x32xf32>
    %335 = arith.mulf %334, %332 : vector<2x32xf32>
    %336 = arith.mulf %326, %313 : vector<2x32xf32>
    %337 = arith.addf %335, %336 : vector<2x32xf32>
    %c8 = arith.constant 8 : index
    %c0_71 = arith.constant 0 : index
    %338 = vector.load %arg17[%c8, %c0_71] : memref<16x32xf32, #tpu.memory_space<vmem>>, vector<2x32xf32>
    tpu.vector_store %arg17[%c8, %c0_71], %337 {strides = array<i32>} : memref<16x32xf32, #tpu.memory_space<vmem>>, vector<2x32xf32>,
    %339 = vector.extract_strided_slice %25 {offsets = [10, 0], sizes = [2, 96], strides = [1, 1]} : vector<16x96xf32> to vector<2x96xf32>
    %cst_72 = arith.constant dense<0.000000e+00> : vector<2x96xf32>
    %340 = tpu.matmul %337, %27, %cst_72 {dimension_numbers = #tpu.dot_dimension_numbers<[1], [0], [0], [1], [0, 0, 1, 1], [], []>} : vector<2x32xf32>, vector<32x96xf32>, vector<2x96xf32> -> vector<2x96xf32>
    %341 = vector.extract_strided_slice %339 {offsets = [0, 0], sizes = [2, 64], strides = [1, 1]} : vector<2x96xf32> to vector<2x64xf32>
    %342 = vector.extract_strided_slice %340 {offsets = [0, 0], sizes = [2, 64], strides = [1, 1]} : vector<2x96xf32> to vector<2x64xf32>
    %343 = arith.addf %341, %342 : vector<2x64xf32>
    %344 = arith.negf %343 : vector<2x64xf32>
    %345 = math.exp %344 : vector<2x64xf32>
    %cst_73 = arith.constant 1.000000e+00 : f32
    %346 = vector.broadcast %cst_73 : f32 to vector<2x64xf32>
    %347 = arith.addf %346, %345 : vector<2x64xf32>
    %348 = arith.divf %346, %347 : vector<2x64xf32>
    %349 = vector.extract_strided_slice %348 {offsets = [0, 0], sizes = [2, 32], strides = [1, 1]} : vector<2x64xf32> to vector<2x32xf32>
    %350 = vector.extract_strided_slice %348 {offsets = [0, 32], sizes = [2, 32], strides = [1, 1]} : vector<2x64xf32> to vector<2x32xf32>
    %351 = vector.extract_strided_slice %339 {offsets = [0, 64], sizes = [2, 32], strides = [1, 1]} : vector<2x96xf32> to vector<2x32xf32>
    %352 = vector.extract_strided_slice %340 {offsets = [0, 64], sizes = [2, 32], strides = [1, 1]} : vector<2x96xf32> to vector<2x32xf32>
    %353 = arith.addf %352, %33 : vector<2x32xf32>
    %354 = arith.mulf %349, %353 : vector<2x32xf32>
    %355 = arith.addf %351, %354 : vector<2x32xf32>
    %356 = math.tanh %355 : vector<2x32xf32>
    %cst_74 = arith.constant 1.000000e+00 : f32
    %357 = vector.broadcast %cst_74 : f32 to vector<2x32xf32>
    %358 = arith.subf %357, %350 : vector<2x32xf32>
    %359 = arith.mulf %358, %356 : vector<2x32xf32>
    %360 = arith.mulf %350, %337 : vector<2x32xf32>
    %361 = arith.addf %359, %360 : vector<2x32xf32>
    %c10 = arith.constant 10 : index
    %c0_75 = arith.constant 0 : index
    %362 = vector.load %arg17[%c10, %c0_75] : memref<16x32xf32, #tpu.memory_space<vmem>>, vector<2x32xf32>
    tpu.vector_store %arg17[%c10, %c0_75], %361 {strides = array<i32>} : memref<16x32xf32, #tpu.memory_space<vmem>>, vector<2x32xf32>,
    %363 = vector.extract_strided_slice %25 {offsets = [12, 0], sizes = [2, 96], strides = [1, 1]} : vector<16x96xf32> to vector<2x96xf32>
    %cst_76 = arith.constant dense<0.000000e+00> : vector<2x96xf32>
    %364 = tpu.matmul %361, %27, %cst_76 {dimension_numbers = #tpu.dot_dimension_numbers<[1], [0], [0], [1], [0, 0, 1, 1], [], []>} : vector<2x32xf32>, vector<32x96xf32>, vector<2x96xf32> -> vector<2x96xf32>
    %365 = vector.extract_strided_slice %363 {offsets = [0, 0], sizes = [2, 64], strides = [1, 1]} : vector<2x96xf32> to vector<2x64xf32>
    %366 = vector.extract_strided_slice %364 {offsets = [0, 0], sizes = [2, 64], strides = [1, 1]} : vector<2x96xf32> to vector<2x64xf32>
    %367 = arith.addf %365, %366 : vector<2x64xf32>
    %368 = arith.negf %367 : vector<2x64xf32>
    %369 = math.exp %368 : vector<2x64xf32>
    %cst_77 = arith.constant 1.000000e+00 : f32
    %370 = vector.broadcast %cst_77 : f32 to vector<2x64xf32>
    %371 = arith.addf %370, %369 : vector<2x64xf32>
    %372 = arith.divf %370, %371 : vector<2x64xf32>
    %373 = vector.extract_strided_slice %372 {offsets = [0, 0], sizes = [2, 32], strides = [1, 1]} : vector<2x64xf32> to vector<2x32xf32>
    %374 = vector.extract_strided_slice %372 {offsets = [0, 32], sizes = [2, 32], strides = [1, 1]} : vector<2x64xf32> to vector<2x32xf32>
    %375 = vector.extract_strided_slice %363 {offsets = [0, 64], sizes = [2, 32], strides = [1, 1]} : vector<2x96xf32> to vector<2x32xf32>
    %376 = vector.extract_strided_slice %364 {offsets = [0, 64], sizes = [2, 32], strides = [1, 1]} : vector<2x96xf32> to vector<2x32xf32>
    %377 = arith.addf %376, %33 : vector<2x32xf32>
    %378 = arith.mulf %373, %377 : vector<2x32xf32>
    %379 = arith.addf %375, %378 : vector<2x32xf32>
    %380 = math.tanh %379 : vector<2x32xf32>
    %cst_78 = arith.constant 1.000000e+00 : f32
    %381 = vector.broadcast %cst_78 : f32 to vector<2x32xf32>
    %382 = arith.subf %381, %374 : vector<2x32xf32>
    %383 = arith.mulf %382, %380 : vector<2x32xf32>
    %384 = arith.mulf %374, %361 : vector<2x32xf32>
    %385 = arith.addf %383, %384 : vector<2x32xf32>
    %c12 = arith.constant 12 : index
    %c0_79 = arith.constant 0 : index
    %386 = vector.load %arg17[%c12, %c0_79] : memref<16x32xf32, #tpu.memory_space<vmem>>, vector<2x32xf32>
    tpu.vector_store %arg17[%c12, %c0_79], %385 {strides = array<i32>} : memref<16x32xf32, #tpu.memory_space<vmem>>, vector<2x32xf32>,
    %387 = vector.extract_strided_slice %25 {offsets = [14, 0], sizes = [2, 96], strides = [1, 1]} : vector<16x96xf32> to vector<2x96xf32>
    %cst_80 = arith.constant dense<0.000000e+00> : vector<2x96xf32>
    %388 = tpu.matmul %385, %27, %cst_80 {dimension_numbers = #tpu.dot_dimension_numbers<[1], [0], [0], [1], [0, 0, 1, 1], [], []>} : vector<2x32xf32>, vector<32x96xf32>, vector<2x96xf32> -> vector<2x96xf32>
    %389 = vector.extract_strided_slice %387 {offsets = [0, 0], sizes = [2, 64], strides = [1, 1]} : vector<2x96xf32> to vector<2x64xf32>
    %390 = vector.extract_strided_slice %388 {offsets = [0, 0], sizes = [2, 64], strides = [1, 1]} : vector<2x96xf32> to vector<2x64xf32>
    %391 = arith.addf %389, %390 : vector<2x64xf32>
    %392 = arith.negf %391 : vector<2x64xf32>
    %393 = math.exp %392 : vector<2x64xf32>
    %cst_81 = arith.constant 1.000000e+00 : f32
    %394 = vector.broadcast %cst_81 : f32 to vector<2x64xf32>
    %395 = arith.addf %394, %393 : vector<2x64xf32>
    %396 = arith.divf %394, %395 : vector<2x64xf32>
    %397 = vector.extract_strided_slice %396 {offsets = [0, 0], sizes = [2, 32], strides = [1, 1]} : vector<2x64xf32> to vector<2x32xf32>
    %398 = vector.extract_strided_slice %396 {offsets = [0, 32], sizes = [2, 32], strides = [1, 1]} : vector<2x64xf32> to vector<2x32xf32>
    %399 = vector.extract_strided_slice %387 {offsets = [0, 64], sizes = [2, 32], strides = [1, 1]} : vector<2x96xf32> to vector<2x32xf32>
    %400 = vector.extract_strided_slice %388 {offsets = [0, 64], sizes = [2, 32], strides = [1, 1]} : vector<2x96xf32> to vector<2x32xf32>
    %401 = arith.addf %400, %33 : vector<2x32xf32>
    %402 = arith.mulf %397, %401 : vector<2x32xf32>
    %403 = arith.addf %399, %402 : vector<2x32xf32>
    %404 = math.tanh %403 : vector<2x32xf32>
    %cst_82 = arith.constant 1.000000e+00 : f32
    %405 = vector.broadcast %cst_82 : f32 to vector<2x32xf32>
    %406 = arith.subf %405, %398 : vector<2x32xf32>
    %407 = arith.mulf %406, %404 : vector<2x32xf32>
    %408 = arith.mulf %398, %385 : vector<2x32xf32>
    %409 = arith.addf %407, %408 : vector<2x32xf32>
    %c14 = arith.constant 14 : index
    %c0_83 = arith.constant 0 : index
    %410 = vector.load %arg17[%c14, %c0_83] : memref<16x32xf32, #tpu.memory_space<vmem>>, vector<2x32xf32>
    tpu.vector_store %arg17[%c14, %c0_83], %409 {strides = array<i32>} : memref<16x32xf32, #tpu.memory_space<vmem>>, vector<2x32xf32>,
    %c0_84 = arith.constant 0 : index
    %c0_85 = arith.constant 0 : index
    %411 = vector.load %arg17[%c0_84, %c0_85] : memref<16x32xf32, #tpu.memory_space<vmem>>, vector<16x32xf32>
    %c0_86 = arith.constant 0 : index
    %c0_87 = arith.constant 0 : index
    %412 = vector.load %arg13[%c0_86, %c0_87] : memref<32x32xf32, #tpu.memory_space<vmem>>, vector<32x32xf32>
    %cst_88 = arith.constant dense<0.000000e+00> : vector<16x32xf32>
    %413 = tpu.matmul %411, %412, %cst_88 {dimension_numbers = #tpu.dot_dimension_numbers<[1], [0], [0], [1], [0, 0, 1, 1], [], []>} : vector<16x32xf32>, vector<32x32xf32>, vector<16x32xf32> -> vector<16x32xf32>
    %c0_89 = arith.constant 0 : index
    %c0_90 = arith.constant 0 : index
    %414 = vector.load %arg14[%c0_89, %c0_90] : memref<1x32xf32, #tpu.memory_space<vmem>>, vector<1x32xf32>
    %415 = vector.shape_cast %414 : vector<1x32xf32> to vector<1x32xf32>
    %416 = vector.broadcast %415 : vector<1x32xf32> to vector<16x32xf32>
    %417 = arith.addf %413, %416 : vector<16x32xf32>
    %cst_91 = arith.constant dense<0xFF800000> : vector<16xf32>
    %418 = vector.multi_reduction <maximumf>, %417, %cst_91 [1] : vector<16x32xf32> to vector<16xf32>
    %419 = vector.shape_cast %418 : vector<16xf32> to vector<16x1xf32>
    %420 = vector.broadcast %419 : vector<16x1xf32> to vector<16x32xf32>
    %421 = arith.subf %417, %420 : vector<16x32xf32>
    %422 = math.exp %421 : vector<16x32xf32>
    %cst_92 = arith.constant dense<0.000000e+00> : vector<16xf32>
    %423 = vector.multi_reduction <add>, %422, %cst_92 [1] : vector<16x32xf32> to vector<16xf32>
    %424 = vector.shape_cast %423 : vector<16xf32> to vector<16x1xf32>
    %425 = math.log %424 : vector<16x1xf32>
    %426 = arith.addf %419, %425 : vector<16x1xf32>
    %427 = vector.broadcast %426 : vector<16x1xf32> to vector<16x32xf32>
    %428 = arith.subf %417, %427 : vector<16x32xf32>
    %c0_93 = arith.constant 0 : index
    %c0_94 = arith.constant 0 : index
    %429 = vector.load %arg15[%c0_93, %c0_94] : memref<16x32xf32, #tpu.memory_space<vmem>>, vector<16x32xf32>
    tpu.vector_store %arg15[%c0_93, %c0_94], %428 {strides = array<i32>} : memref<16x32xf32, #tpu.memory_space<vmem>>, vector<16x32xf32>,
    %c0_95 = arith.constant 0 : index
    %c0_96 = arith.constant 0 : index
    %430 = vector.load %arg16[%c0_95, %c0_96] : memref<2x32xf32, #tpu.memory_space<vmem>>, vector<2x32xf32>
    tpu.vector_store %arg16[%c0_95, %c0_96], %409 {strides = array<i32>} : memref<2x32xf32, #tpu.memory_space<vmem>>, vector<2x32xf32>,
    return
  }
  func.func @transform_0(%arg0: i32) -> (i32, i32) {
    %c0_i32 = arith.constant 0 : i32
    %c0_i32_0 = arith.constant 0 : i32
    %c0_i32_1 = arith.constant 0 : i32
    return %c0_i32, %c0_i32_0 : i32, i32
  }
  func.func @transform_1(%arg0: i32) -> (i32, i32) {
    %c0_i32 = arith.constant 0 : i32
    %c0_i32_0 = arith.constant 0 : i32
    %c0_i32_1 = arith.constant 0 : i32
    return %c0_i32, %c0_i32_0 : i32, i32
  }
  func.func @transform_2(%arg0: i32) -> (i32, i32) {
    %c0_i32 = arith.constant 0 : i32
    %c0_i32_0 = arith.constant 0 : i32
    %c0_i32_1 = arith.constant 0 : i32
    return %c0_i32, %c0_i32_0 : i32, i32
  }
  func.func @transform_3(%arg0: i32) -> (i32, i32) {
    %c0_i32 = arith.constant 0 : i32
    %c0_i32_0 = arith.constant 0 : i32
    %c0_i32_1 = arith.constant 0 : i32
    return %c0_i32, %c0_i32_0 : i32, i32
  }
  func.func @transform_4(%arg0: i32) -> (i32, i32) {
    %c0_i32 = arith.constant 0 : i32
    %c0_i32_0 = arith.constant 0 : i32
    %c0_i32_1 = arith.constant 0 : i32
    return %c0_i32, %c0_i32_0 : i32, i32
  }
  func.func @transform_5(%arg0: i32) -> (i32, i32) {
    %c0_i32 = arith.constant 0 : i32
    %c0_i32_0 = arith.constant 0 : i32
    %c0_i32_1 = arith.constant 0 : i32
    return %c0_i32, %c0_i32_0 : i32, i32
  }
  func.func @transform_6(%arg0: i32) -> (i32, i32) {
    %c0_i32 = arith.constant 0 : i32
    %c0_i32_0 = arith.constant 0 : i32
    %c0_i32_1 = arith.constant 0 : i32
    return %c0_i32, %c0_i32_0 : i32, i32
  }
  func.func @transform_7(%arg0: i32) -> (i32, i32) {
    %c0_i32 = arith.constant 0 : i32
    %c0_i32_0 = arith.constant 0 : i32
    %c0_i32_1 = arith.constant 0 : i32
    return %c0_i32, %c0_i32_0 : i32, i32
  }
  func.func @transform_8(%arg0: i32) -> (i32, i32) {
    %c0_i32 = arith.constant 0 : i32
    %c0_i32_0 = arith.constant 0 : i32
    %c0_i32_1 = arith.constant 0 : i32
    return %c0_i32, %c0_i32_0 : i32, i32
  }
  func.func @transform_9(%arg0: i32) -> (i32, i32) {
    %c0_i32 = arith.constant 0 : i32
    %c0_i32_0 = arith.constant 0 : i32
    %c0_i32_1 = arith.constant 0 : i32
    return %c0_i32, %c0_i32_0 : i32, i32
  }
  func.func @transform_10(%arg0: i32) -> (i32, i32) {
    %c0_i32 = arith.constant 0 : i32
    %c0_i32_0 = arith.constant 0 : i32
    %c0_i32_1 = arith.constant 0 : i32
    return %c0_i32, %c0_i32_0 : i32, i32
  }
  func.func @transform_11(%arg0: i32) -> (i32, i32) {
    %c0_i32 = arith.constant 0 : i32
    %c0_i32_0 = arith.constant 0 : i32
    %c0_i32_1 = arith.constant 0 : i32
    return %c0_i32, %c0_i32_0 : i32, i32
  }
  func.func @transform_12(%arg0: i32) -> (i32, i32) {
    %c0_i32 = arith.constant 0 : i32
    %c0_i32_0 = arith.constant 0 : i32
    %c0_i32_1 = arith.constant 0 : i32
    return %c0_i32, %c0_i32_0 : i32, i32
  }
  func.func @transform_13(%arg0: i32) -> (i32, i32) {
    %c0_i32 = arith.constant 0 : i32
    %c0_i32_0 = arith.constant 0 : i32
    %c0_i32_1 = arith.constant 0 : i32
    return %c0_i32, %c0_i32_0 : i32, i32
  }
  func.func @transform_14(%arg0: i32) -> (i32, i32) {
    %c0_i32 = arith.constant 0 : i32
    %c0_i32_0 = arith.constant 0 : i32
    %c0_i32_1 = arith.constant 0 : i32
    return %c0_i32, %c0_i32_0 : i32, i32
  }
  func.func @transform_15(%arg0: i32) -> (i32, i32) {
    %c0_i32 = arith.constant 0 : i32
    %c0_i32_0 = arith.constant 0 : i32
    %c0_i32_1 = arith.constant 0 : i32
    return %c0_i32, %c0_i32_0 : i32, i32
  }
}

</mosaic_0001>

<llo_original>
// kernel: tpu_custom_call.1
$region0: #{tpu_custom_call.1}
  #allocation0 [shape = 'u32[]', space=smem, size = 0x4, offset = 0x4, fixed_abs, tag = 'smem constant byte address 0x4 - core index']
  #allocation1 [shape = 'u32[144,128]{1,0:T(1,128)}', space=vmem, size = 0x12000, scoped, tag = 'internal scratch']
  #allocation2 [shape = 'f32[16,32]{1,0:T(8,128)}', space=vmem, size = 0x2000, scoped, tag = 'scratch operand']
  %s0 = inlined_call_operand.vmem [shape: s32[16,1], index: 0, kind: input, shape index: {}]
  %s1 = inlined_call_operand.vmem [shape: s32[16,1], index: 1, kind: input, shape index: {}]
  %s2 = inlined_call_operand.vmem [shape: f32[32,32], index: 2, kind: input, shape index: {}]
  %s3 = inlined_call_operand.hbm [shape: f32[32,96], index: 3, kind: input, shape index: {}]
  %s4 = inlined_call_operand.hbm [shape: f32[32,96], index: 4, kind: input, shape index: {}]
  %s5 = inlined_call_operand.hbm [shape: f32[1,96], index: 5, kind: input, shape index: {}]
  %s6 = inlined_call_operand.hbm [shape: f32[1,32], index: 6, kind: input, shape index: {}]
  %s7 = inlined_call_operand.hbm [shape: f32[32,32], index: 7, kind: input, shape index: {}]
  %s8 = inlined_call_operand.vmem [shape: f32[32,96], index: 8, kind: input, shape index: {}]
  %s9 = inlined_call_operand.hbm [shape: f32[32,96], index: 9, kind: input, shape index: {}]
  %s10 = inlined_call_operand.vmem [shape: f32[1,96], index: 10, kind: input, shape index: {}]
  %s11 = inlined_call_operand.vmem [shape: f32[1,32], index: 11, kind: input, shape index: {}]
  %s12 = inlined_call_operand.hbm [shape: f32[32,32], index: 12, kind: input, shape index: {}]
  %s13 = inlined_call_operand.vmem [shape: f32[1,32], index: 13, kind: input, shape index: {}]
  %s14 = inlined_call_operand.hbm [shape: f32[16,32], index: 14, kind: output, shape index: {0}]
  %s15 = inlined_call_operand.hbm [shape: f32[2,32], index: 15, kind: output, shape index: {1}]
  %16 = xla_tuple %s14, %s15
  %s17 = sld [smem:[#allocation0]]
  $region102: #{tpu_custom_call.1} parent=0
    _
  %s19 = ssub.s32 1, %s17
  %s20 = scalar_select 0, %s19, %s17
  $region1: #{tpu_custom_call.1} parent=0
    #allocation3 [shape = 'u8[16384]{0}', space=vmem, size = 0x4000, scoped, tag = 'input window, operand 3, single buffered']
    #allocation4 [shape = 's32[1]{0}', space=sflag, size = 0x4, scoped, tag = 'scoped memory for tpu_custom_call.1']
    #allocation5 [shape = 's32[1]{0}', space=sflag, size = 0x4, scoped, tag = 'scoped memory for tpu_custom_call.1']
    #allocation6 [shape = 'u8[16384]{0}', space=vmem, size = 0x4000, scoped, tag = 'input window, operand 4, single buffered']
    #allocation7 [shape = 's32[1]{0}', space=sflag, size = 0x4, scoped, tag = 'scoped memory for tpu_custom_call.1']
    #allocation8 [shape = 'u8[512]{0}', space=vmem, size = 0x400, scoped, tag = 'input window, operand 5, single buffered']
    #allocation9 [shape = 'u8[512]{0}', space=vmem, size = 0x400, scoped, tag = 'input window, operand 6, single buffered']
    #allocation10 [shape = 's32[1]{0}', space=sflag, size = 0x4, scoped, tag = 'scoped memory for tpu_custom_call.1']
    #allocation11 [shape = 'u8[16384]{0}', space=vmem, size = 0x4000, scoped, tag = 'input window, operand 7, single buffered']
    #allocation12 [shape = 'u8[16384]{0}', space=vmem, size = 0x4000, scoped, tag = 'input window, operand 9, single buffered']
    #allocation13 [shape = 's32[1]{0}', space=sflag, size = 0x4, scoped, tag = 'scoped memory for tpu_custom_call.1']
    #allocation14 [shape = 'u8[16384]{0}', space=vmem, size = 0x4000, scoped, tag = 'input window, operand 12, single buffered']
    #allocation15 [shape = 'u8[8192]{0}', space=vmem, size = 0x2000, scoped, tag = 'output window, operand 0, single buffered']
    #allocation16 [shape = 'u8[1024]{0}', space=vmem, size = 0x400, scoped, tag = 'output window, operand 1, single buffered']
    #allocation17 [shape = 's32[1]{0}', space=sflag, size = 0x4, scoped, tag = 'scoped memory for tpu_custom_call.1']
    %21 = vsyncpa [#allocation4], 0
    %22 = vsyncpa [#allocation7], 0
    %23 = vsyncpa [#allocation10], 0
    %24 = vsyncpa [#allocation13], 0
    %25 = vsyncpa [#allocation5], 0
    %26 = vsyncpa [#allocation17], 0
    // Predicated region
    $region2: #{tpu_custom_call.1} parent=1 // pred_check
      _
    $region3: #{tpu_custom_call.1} parent=1 // pred_check_branch
      %28 = sbr.rel (0) target = $region5
    $region4: #{tpu_custom_call.1} parent=1 // pred_region
      _
    $region5: #{tpu_custom_call.1} parent=1 // pred_fallthru
      _
    // Predicated region
    $region6: #{tpu_custom_call.1} parent=1 // pred_check
      _
    $region7: #{tpu_custom_call.1} parent=1 // pred_check_branch
      %30 = sbr.rel (0) target = $region9
    $region8: #{tpu_custom_call.1} parent=1 // pred_region
      _
    $region9: #{tpu_custom_call.1} parent=1 // pred_fallthru
      _
    // Predicated region
    $region10: #{tpu_custom_call.1} parent=1 // pred_check
      _
    $region11: #{tpu_custom_call.1} parent=1 // pred_check_branch
      %32 = sbr.rel (0) target = $region13
    $region12: #{tpu_custom_call.1} parent=1 // pred_region
      _
    $region13: #{tpu_custom_call.1} parent=1 // pred_fallthru
      _
    // Predicated region
    $region14: #{tpu_custom_call.1} parent=1 // pred_check
      _
    $region15: #{tpu_custom_call.1} parent=1 // pred_check_branch
      %34 = sbr.rel (0) target = $region17
    $region16: #{tpu_custom_call.1} parent=1 // pred_region
      %s36 = ssub.s32 512, 512
      %37 = vsyncadd [#allocation4], %s36
      %s38 = sshll.u32 [#allocation3], 4
      %s39 = int_to_ptr.vmem [resolvable:$true] %s38
      %44 = dma.hbm_to_vmem [thread:$0]  %s3, 512, %s39, [#allocation4], 128, 128, 8
    $region17: #{tpu_custom_call.1} parent=1 // pred_fallthru
      _
    // Predicated region
    $region18: #{tpu_custom_call.1} parent=1 // pred_check
      _
    $region19: #{tpu_custom_call.1} parent=1 // pred_check_branch
      %46 = sbr.rel (0) target = $region21
    $region20: #{tpu_custom_call.1} parent=1 // pred_region
      %s48 = ssub.s32 512, 512
      %49 = vsyncadd [#allocation7], %s48
      %s50 = sshll.u32 [#allocation6], 4
      %s51 = int_to_ptr.vmem [resolvable:$true] %s50
      %56 = dma.hbm_to_vmem [thread:$0]  %s4, 512, %s51, [#allocation7], 128, 128, 8
    $region21: #{tpu_custom_call.1} parent=1 // pred_fallthru
      _
    // Predicated region
    $region22: #{tpu_custom_call.1} parent=1 // pred_check
      _
    $region23: #{tpu_custom_call.1} parent=1 // pred_check_branch
      %58 = sbr.rel (0) target = $region25
    $region24: #{tpu_custom_call.1} parent=1 // pred_region
      %s60 = ssub.s32 16, 16
      %61 = vsyncadd [#allocation7], %s60
      %s63 = sshll.u32 [#allocation8], 4
      %s64 = int_to_ptr.vmem [resolvable:$true] %s63
      %66 = dma.hbm_to_vmem [thread:$0]  %s5, 16, %s64, [#allocation7]
    $region25: #{tpu_custom_call.1} parent=1 // pred_fallthru
      _
    // Predicated region
    $region26: #{tpu_custom_call.1} parent=1 // pred_check
      _
    $region27: #{tpu_custom_call.1} parent=1 // pred_check_branch
      %68 = sbr.rel (0) target = $region29
    $region28: #{tpu_custom_call.1} parent=1 // pred_region
      %s70 = ssub.s32 16, 16
      %71 = vsyncadd [#allocation10], %s70
      %s73 = sshll.u32 [#allocation9], 4
      %s74 = int_to_ptr.vmem [resolvable:$true] %s73
      %76 = dma.hbm_to_vmem [thread:$0]  %s6, 16, %s74, [#allocation10]
    $region29: #{tpu_custom_call.1} parent=1 // pred_fallthru
      _
    // Predicated region
    $region30: #{tpu_custom_call.1} parent=1 // pred_check
      _
    $region31: #{tpu_custom_call.1} parent=1 // pred_check_branch
      %78 = sbr.rel (0) target = $region33
    $region32: #{tpu_custom_call.1} parent=1 // pred_region
      %s80 = ssub.s32 512, 512
      %81 = vsyncadd [#allocation10], %s80
      %s82 = sshll.u32 [#allocation11], 4
      %s83 = int_to_ptr.vmem [resolvable:$true] %s82
      %88 = dma.hbm_to_vmem [thread:$0]  %s7, 512, %s83, [#allocation10], 128, 128, 8
    $region33: #{tpu_custom_call.1} parent=1 // pred_fallthru
      _
    // Predicated region
    $region34: #{tpu_custom_call.1} parent=1 // pred_check
      _
    $region35: #{tpu_custom_call.1} parent=1 // pred_check_branch
      %90 = sbr.rel (0) target = $region37
    $region36: #{tpu_custom_call.1} parent=1 // pred_region
      _
    $region37: #{tpu_custom_call.1} parent=1 // pred_fallthru
      _
    // Predicated region
    $region38: #{tpu_custom_call.1} parent=1 // pred_check
      _
    $region39: #{tpu_custom_call.1} parent=1 // pred_check_branch
      %92 = sbr.rel (0) target = $region41
    $region40: #{tpu_custom_call.1} parent=1 // pred_region
      %s94 = ssub.s32 512, 512
      %95 = vsyncadd [#allocation13], %s94
      %s96 = sshll.u32 [#allocation12], 4
      %s97 = int_to_ptr.vmem [resolvable:$true] %s96
      %102 = dma.hbm_to_vmem [thread:$0]  %s9, 512, %s97, [#allocation13], 128, 128, 8
    $region41: #{tpu_custom_call.1} parent=1 // pred_fallthru
      _
    // Predicated region
    $region42: #{tpu_custom_call.1} parent=1 // pred_check
      _
    $region43: #{tpu_custom_call.1} parent=1 // pred_check_branch
      %104 = sbr.rel (0) target = $region45
    $region44: #{tpu_custom_call.1} parent=1 // pred_region
      _
    $region45: #{tpu_custom_call.1} parent=1 // pred_fallthru
      _
    // Predicated region
    $region46: #{tpu_custom_call.1} parent=1 // pred_check
      _
    $region47: #{tpu_custom_call.1} parent=1 // pred_check_branch
      %106 = sbr.rel (0) target = $region49
    $region48: #{tpu_custom_call.1} parent=1 // pred_region
      _
    $region49: #{tpu_custom_call.1} parent=1 // pred_fallthru
      _
    // Predicated region
    $region50: #{tpu_custom_call.1} parent=1 // pred_check
      _
    $region51: #{tpu_custom_call.1} parent=1 // pred_check_branch
      %108 = sbr.rel (0) target = $region53
    $region52: #{tpu_custom_call.1} parent=1 // pred_region
      %s110 = ssub.s32 512, 512
      %111 = vsyncadd [#allocation13], %s110
      %s112 = sshll.u32 [#allocation14], 4
      %s113 = int_to_ptr.vmem [resolvable:$true] %s112
      %118 = dma.hbm_to_vmem [thread:$0]  %s12, 512, %s113, [#allocation13], 128, 128, 8
    $region53: #{tpu_custom_call.1} parent=1 // pred_fallthru
      _
    // Predicated region
    $region54: #{tpu_custom_call.1} parent=1 // pred_check
      _
    $region55: #{tpu_custom_call.1} parent=1 // pred_check_branch
      %120 = sbr.rel (0) target = $region57
    $region56: #{tpu_custom_call.1} parent=1 // pred_region
      _
    $region57: #{tpu_custom_call.1} parent=1 // pred_fallthru
      _
    // Predicated region
    $region58: #{tpu_custom_call.1} parent=1 // pred_check
      _
    $region59: #{tpu_custom_call.1} parent=1 // pred_check_branch
      %122 = sbr.rel (0) target = $region61
    $region60: #{tpu_custom_call.1} parent=1 // pred_region
      %123 = dma.done [#allocation4], 512
    $region61: #{tpu_custom_call.1} parent=1 // pred_fallthru
      _
    // Predicated region
    $region62: #{tpu_custom_call.1} parent=1 // pred_check
      _
    $region63: #{tpu_custom_call.1} parent=1 // pred_check_branch
      %125 = sbr.rel (0) target = $region65
    $region64: #{tpu_custom_call.1} parent=1 // pred_region
      %126 = dma.done [#allocation7], 512
    $region65: #{tpu_custom_call.1} parent=1 // pred_fallthru
      _
    // Predicated region
    $region66: #{tpu_custom_call.1} parent=1 // pred_check
      _
    $region67: #{tpu_custom_call.1} parent=1 // pred_check_branch
      %128 = sbr.rel (0) target = $region69
    $region68: #{tpu_custom_call.1} parent=1 // pred_region
      %129 = dma.done [#allocation7], 16
    $region69: #{tpu_custom_call.1} parent=1 // pred_fallthru
      _
    // Predicated region
    $region70: #{tpu_custom_call.1} parent=1 // pred_check
      _
    $region71: #{tpu_custom_call.1} parent=1 // pred_check_branch
      %131 = sbr.rel (0) target = $region73
    $region72: #{tpu_custom_call.1} parent=1 // pred_region
      %132 = dma.done [#allocation10], 16
    $region73: #{tpu_custom_call.1} parent=1 // pred_fallthru
      _
    // Predicated region
    $region74: #{tpu_custom_call.1} parent=1 // pred_check
      _
    $region75: #{tpu_custom_call.1} parent=1 // pred_check_branch
      %134 = sbr.rel (0) target = $region77
    $region76: #{tpu_custom_call.1} parent=1 // pred_region
      %135 = dma.done [#allocation10], 512
    $region77: #{tpu_custom_call.1} parent=1 // pred_fallthru
      _
    // Predicated region
    $region78: #{tpu_custom_call.1} parent=1 // pred_check
      _
    $region79: #{tpu_custom_call.1} parent=1 // pred_check_branch
      %137 = sbr.rel (0) target = $region81
    $region80: #{tpu_custom_call.1} parent=1 // pred_region
      %138 = dma.done [#allocation13], 512
    $region81: #{tpu_custom_call.1} parent=1 // pred_fallthru
      _
    // Predicated region
    $region82: #{tpu_custom_call.1} parent=1 // pred_check
      _
    $region83: #{tpu_custom_call.1} parent=1 // pred_check_branch
      %140 = sbr.rel (0) target = $region85
    $region84: #{tpu_custom_call.1} parent=1 // pred_region
      %141 = dma.done [#allocation13], 512
    $region85: #{tpu_custom_call.1} parent=1 // pred_fallthru
      _
    %v142 = vld [vmem:[%s2] sm:$0xff]
    %v143 = vld [vmem:[%s2 + $0x8] sm:$0xff]
    %v144 = vld [vmem:[%s2 + $0x10] sm:$0xff]
    %v145 = vld [vmem:[%s2 + $0x18] sm:$0xff]
    %v146 = vld [vmem:[#allocation3] sm:$0xff]
    %v147 = vld [vmem:[#allocation3 + $0x8] sm:$0xff]
    %v148 = vld [vmem:[#allocation3 + $0x10] sm:$0xff]
    %v149 = vld [vmem:[#allocation3 + $0x18] sm:$0xff]
    %v150 = vld [vmem:[#allocation8] sm:$0x1]
    %v152 = vlaneseq
    %v153 = vshrl.u32 %v152, 7
    %v154 = vsub.s32 0, %v153
    %v155 = vrot.slane %v150, %v154
    %vm157 = vcmask 261120
    %v159 = vsel %vm157, %v142, 0
    %v162 = vsel %vm157, %v143, 0
    %v165 = vsel %vm157, %v144, 0
    %v168 = vsel %vm157, %v145, 0
    %170 = vmatprep.subr.mxu0 0.0
    %171 = vmatpush1.msra.mxu0 %v146
    %172 = vmatprep.subr.mxu0 0.0
    %173 = vmatpush1.msra.mxu0 %v147
    %174 = vmatprep.subr.mxu0 0.0
    %175 = vmatpush1.msra.mxu0 %v148
    %176 = vmatprep.subr.mxu0 0.0
    %177 = vmatpush1.msra.mxu0 %v149
    %178 = vmatprep.subr.mxu0 0.0
    %179 = vmatpush1.msra.mxu0 0.0
    %180 = vmatprep.subr.mxu0 0.0
    %181 = vmatpush1.msra.mxu0 0.0
    %182 = vmatprep.subr.mxu0 0.0
    %183 = vmatpush1.msra.mxu0 0.0
    %184 = vmatprep.subr.mxu0 0.0
    %185 = vmatpush1.msra.mxu0 0.0
    %186 = vmatprep.subr.mxu0 0.0
    %187 = vmatpush1.msra.mxu0 0.0
    %188 = vmatprep.subr.mxu0 0.0
    %189 = vmatpush1.msra.mxu0 0.0
    %190 = vmatprep.subr.mxu0 0.0
    %191 = vmatpush1.msra.mxu0 0.0
    %192 = vmatprep.subr.mxu0 0.0
    %193 = vmatpush1.msra.mxu0 0.0
    %194 = vmatprep.subr.mxu0 0.0
    %195 = vmatpush1.msra.mxu0 0.0
    %196 = vmatprep.subr.mxu0 0.0
    %197 = vmatpush1.msra.mxu0 0.0
    %198 = vmatprep.subr.mxu0 0.0
    %199 = vmatpush1.msra.mxu0 0.0
    %200 = vmatprep.subr.mxu0 0.0
    %201 = vmatpush1.msra.mxu0 0.0
    %202 = vmatprep.subr.mxu0 0.0
    %203 = vmatpush1.msra.mxu0 0.0
    %204 = vmatprep.subr.mxu0 0.0
    %205 = vmatpush1.msra.mxu0 0.0
    %206 = vmatprep.subr.mxu0 0.0
    %207 = vmatpush1.msra.mxu0 0.0
    %208 = vmatprep.subr.mxu0 0.0
    %209 = vmatpush1.msra.mxu0 0.0
    %210 = vmatprep.subr.mxu0 0.0
    %211 = vmatpush1.msra.mxu0 0.0
    %212 = vmatprep.subr.mxu0 0.0
    %213 = vmatpush1.msra.mxu0 0.0
    %214 = vmatprep.subr.mxu0 0.0
    %215 = vmatpush1.msra.mxu0 0.0
    %216 = vmatprep.subr.mxu0 0.0
    %217 = vmatpush1.msra.mxu0 0.0
    %218 = vmatprep.subr.mxu0 0.0
    %219 = vmatpush1.msra.mxu0 0.0
    %220 = vmatprep.subr.mxu0 0.0
    %221 = vmatpush1.msra.mxu0 0.0
    %222 = vmatprep.subr.mxu0 0.0
    %223 = vmatpush1.msra.mxu0 0.0
    %224 = vmatprep.subr.mxu0 0.0
    %225 = vmatpush1.msra.mxu0 0.0
    %226 = vmatprep.subr.mxu0 0.0
    %227 = vmatpush1.msra.mxu0 0.0
    %228 = vmatprep.subr.mxu0 0.0
    %229 = vmatpush1.msra.mxu0 0.0
    %230 = vmatprep.subr.mxu0 0.0
    %231 = vmatpush1.msra.mxu0 0.0
    %232 = vmatprep.subr.mxu0 0.0
    %233 = vmatpush1.msra.mxu0 0.0
    %234 = vmatprep.mubr.f32.mxu0 0.0
    %235 = vmatmul.mubr.f32.gmra.mrb[0].mxu0 %v159
    %v236 = vpop.f32.mrb[0].mxu0
    %v237 = vadd.f32 %v155, %v236
    %v238 = vpop.f32.mrb[0].mxu0
    %239 = vmatprep.mubr.f32.mxu0 0.0
    %240 = vmatmul.mubr.f32.gmra.mrb[0].mxu0 %v162
    %v241 = vpop.f32.mrb[0].mxu0
    %v242 = vadd.f32 %v155, %v241
    %v243 = vpop.f32.mrb[0].mxu0
    %244 = vmatprep.mubr.f32.mxu0 0.0
    %245 = vmatmul.mubr.f32.gmra.mrb[0].mxu0 %v165
    %v246 = vpop.f32.mrb[0].mxu0
    %v247 = vadd.f32 %v155, %v246
    %v248 = vpop.f32.mrb[0].mxu0
    %249 = vmatprep.mubr.f32.mxu0 0.0
    %250 = vmatmul.mubr.f32.gmra.mrb[0].mxu0 %v168
    %v251 = vpop.f32.mrb[0].mxu0
    %v252 = vadd.f32 %v155, %v251
    %v253 = vpop.f32.mrb[0].mxu0
    %254 = vdwg.mxu0
    %v255 = vld [vmem:[#allocation11] sm:$0xff]
    %v256 = vld [vmem:[#allocation11 + $0x8] sm:$0xff]
    %v257 = vld [vmem:[#allocation11 + $0x10] sm:$0xff]
    %v258 = vld [vmem:[#allocation11 + $0x18] sm:$0xff]
    %v259 = vld [vmem:[%s8] sm:$0xff]
    %v260 = vld [vmem:[%s8 + $0x8] sm:$0xff]
    %v261 = vld [vmem:[%s8 + $0x10] sm:$0xff]
    %v262 = vld [vmem:[%s8 + $0x18] sm:$0xff]
    %v263 = vld [vmem:[%s10] sm:$0x1]
    %v265 = vlaneseq
    %v266 = vshrl.u32 %v265, 7
    %v267 = vsub.s32 0, %v266
    %v268 = vrot.slane %v263, %v267
    %v271 = vsel %vm157, %v255, 0
    %v274 = vsel %vm157, %v256, 0
    %v277 = vsel %vm157, %v257, 0
    %v280 = vsel %vm157, %v258, 0
    %282 = vmatprep.subr.mxu0 0.0
    %283 = vmatpush1.msra.mxu0 %v259
    %284 = vmatprep.subr.mxu0 0.0
    %285 = vmatpush1.msra.mxu0 %v260
    %286 = vmatprep.subr.mxu0 0.0
    %287 = vmatpush1.msra.mxu0 %v261
    %288 = vmatprep.subr.mxu0 0.0
    %289 = vmatpush1.msra.mxu0 %v262
    %290 = vmatprep.subr.mxu0 0.0
    %291 = vmatpush1.msra.mxu0 0.0
    %292 = vmatprep.subr.mxu0 0.0
    %293 = vmatpush1.msra.mxu0 0.0
    %294 = vmatprep.subr.mxu0 0.0
    %295 = vmatpush1.msra.mxu0 0.0
    %296 = vmatprep.subr.mxu0 0.0
    %297 = vmatpush1.msra.mxu0 0.0
    %298 = vmatprep.subr.mxu0 0.0
    %299 = vmatpush1.msra.mxu0 0.0
    %300 = vmatprep.subr.mxu0 0.0
    %301 = vmatpush1.msra.mxu0 0.0
    %302 = vmatprep.subr.mxu0 0.0
    %303 = vmatpush1.msra.mxu0 0.0
    %304 = vmatprep.subr.mxu0 0.0
    %305 = vmatpush1.msra.mxu0 0.0
    %306 = vmatprep.subr.mxu0 0.0
    %307 = vmatpush1.msra.mxu0 0.0
    %308 = vmatprep.subr.mxu0 0.0
    %309 = vmatpush1.msra.mxu0 0.0
    %310 = vmatprep.subr.mxu0 0.0
    %311 = vmatpush1.msra.mxu0 0.0
    %312 = vmatprep.subr.mxu0 0.0
    %313 = vmatpush1.msra.mxu0 0.0
    %314 = vmatprep.subr.mxu0 0.0
    %315 = vmatpush1.msra.mxu0 0.0
    %316 = vmatprep.subr.mxu0 0.0
    %317 = vmatpush1.msra.mxu0 0.0
    %318 = vmatprep.subr.mxu0 0.0
    %319 = vmatpush1.msra.mxu0 0.0
    %320 = vmatprep.subr.mxu0 0.0
    %321 = vmatpush1.msra.mxu0 0.0
    %322 = vmatprep.subr.mxu0 0.0
    %323 = vmatpush1.msra.mxu0 0.0
    %324 = vmatprep.subr.mxu0 0.0
    %325 = vmatpush1.msra.mxu0 0.0
    %326 = vmatprep.subr.mxu0 0.0
    %327 = vmatpush1.msra.mxu0 0.0
    %328 = vmatprep.subr.mxu0 0.0
    %329 = vmatpush1.msra.mxu0 0.0
    %330 = vmatprep.subr.mxu0 0.0
    %331 = vmatpush1.msra.mxu0 0.0
    %332 = vmatprep.subr.mxu0 0.0
    %333 = vmatpush1.msra.mxu0 0.0
    %334 = vmatprep.subr.mxu0 0.0
    %335 = vmatpush1.msra.mxu0 0.0
    %336 = vmatprep.subr.mxu0 0.0
    %337 = vmatpush1.msra.mxu0 0.0
    %338 = vmatprep.subr.mxu0 0.0
    %339 = vmatpush1.msra.mxu0 0.0
    %340 = vmatprep.subr.mxu0 0.0
    %341 = vmatpush1.msra.mxu0 0.0
    %342 = vmatprep.subr.mxu0 0.0
    %343 = vmatpush1.msra.mxu0 0.0
    %344 = vmatprep.subr.mxu0 0.0
    %345 = vmatpush1.msra.mxu0 0.0
    %346 = vmatprep.mubr.f32.mxu0 0.0
    %347 = vmatmul.mubr.f32.gmra.mrb[0].mxu0 %v271
    %v348 = vpop.f32.mrb[0].mxu0
    %v349 = vadd.f32 %v268, %v348
    %v350 = vpop.f32.mrb[0].mxu0
    %351 = vmatprep.mubr.f32.mxu0 0.0
    %352 = vmatmul.mubr.f32.gmra.mrb[0].mxu0 %v274
    %v353 = vpop.f32.mrb[0].mxu0
    %v354 = vadd.f32 %v268, %v353
    %v355 = vpop.f32.mrb[0].mxu0
    %356 = vmatprep.mubr.f32.mxu0 0.0
    %357 = vmatmul.mubr.f32.gmra.mrb[0].mxu0 %v277
    %v358 = vpop.f32.mrb[0].mxu0
    %v359 = vadd.f32 %v268, %v358
    %v360 = vpop.f32.mrb[0].mxu0
    %361 = vmatprep.mubr.f32.mxu0 0.0
    %362 = vmatmul.mubr.f32.gmra.mrb[0].mxu0 %v280
    %v363 = vpop.f32.mrb[0].mxu0
    %v364 = vadd.f32 %v268, %v363
    %v365 = vpop.f32.mrb[0].mxu0
    %366 = vdwg.mxu0
    %v367 = vld [vmem:[%s0] sm:$0xff]
    %v368 = vld [vmem:[%s0 + $0x8] sm:$0xff]
    %v369 = vlaneseq
    %v370 = vand.u32 %v369, 127
    %371 = vset.pattern.permute.xlu0 0
    %372 = vperm.xlu0 %371, %v367
    %v373 = vpop.permute.xlu0 %372
    %374 = vset.pattern.permute.xlu0 0
    %375 = vperm.xlu0 %374, %v368
    %v376 = vpop.permute.xlu0 %375
    %vm377 = vcmp.eq.s32.totalorder %v370, %v373
    %vm378 = vcmp.eq.s32.totalorder %v370, %v376
    %v379 = vsel %vm377, 1, 0
    %v380 = vsel %vm378, 1, 0
    %v381 = vcvt.s32.f32 %v379
    %v382 = vcvt.s32.f32 %v380
    %v384 = vsel %vm157, %v381, 0
    %v387 = vsel %vm157, %v382, 0
    %389 = vmatprep.subr.mxu0 0.0
    %390 = vmatpush1.msra.mxu0 %v237
    %391 = vmatprep.subr.mxu0 0.0
    %392 = vmatpush1.msra.mxu0 %v242
    %393 = vmatprep.subr.mxu0 0.0
    %394 = vmatpush1.msra.mxu0 %v247
    %395 = vmatprep.subr.mxu0 0.0
    %396 = vmatpush1.msra.mxu0 %v252
    %397 = vmatprep.subr.mxu0 0.0
    %398 = vmatpush1.msra.mxu0 0.0
    %399 = vmatprep.subr.mxu0 0.0
    %400 = vmatpush1.msra.mxu0 0.0
    %401 = vmatprep.subr.mxu0 0.0
    %402 = vmatpush1.msra.mxu0 0.0
    %403 = vmatprep.subr.mxu0 0.0
    %404 = vmatpush1.msra.mxu0 0.0
    %405 = vmatprep.subr.mxu0 0.0
    %406 = vmatpush1.msra.mxu0 0.0
    %407 = vmatprep.subr.mxu0 0.0
    %408 = vmatpush1.msra.mxu0 0.0
    %409 = vmatprep.subr.mxu0 0.0
    %410 = vmatpush1.msra.mxu0 0.0
    %411 = vmatprep.subr.mxu0 0.0
    %412 = vmatpush1.msra.mxu0 0.0
    %413 = vmatprep.subr.mxu0 0.0
    %414 = vmatpush1.msra.mxu0 0.0
    %415 = vmatprep.subr.mxu0 0.0
    %416 = vmatpush1.msra.mxu0 0.0
    %417 = vmatprep.subr.mxu0 0.0
    %418 = vmatpush1.msra.mxu0 0.0
    %419 = vmatprep.subr.mxu0 0.0
    %420 = vmatpush1.msra.mxu0 0.0
    %421 = vmatprep.subr.mxu0 0.0
    %422 = vmatpush1.msra.mxu0 0.0
    %423 = vmatprep.subr.mxu0 0.0
    %424 = vmatpush1.msra.mxu0 0.0
    %425 = vmatprep.subr.mxu0 0.0
    %426 = vmatpush1.msra.mxu0 0.0
    %427 = vmatprep.subr.mxu0 0.0
    %428 = vmatpush1.msra.mxu0 0.0
    %429 = vmatprep.subr.mxu0 0.0
    %430 = vmatpush1.msra.mxu0 0.0
    %431 = vmatprep.subr.mxu0 0.0
    %432 = vmatpush1.msra.mxu0 0.0
    %433 = vmatprep.subr.mxu0 0.0
    %434 = vmatpush1.msra.mxu0 0.0
    %435 = vmatprep.subr.mxu0 0.0
    %436 = vmatpush1.msra.mxu0 0.0
    %437 = vmatprep.subr.mxu0 0.0
    %438 = vmatpush1.msra.mxu0 0.0
    %439 = vmatprep.subr.mxu0 0.0
    %440 = vmatpush1.msra.mxu0 0.0
    %441 = vmatprep.subr.mxu0 0.0
    %442 = vmatpush1.msra.mxu0 0.0
    %443 = vmatprep.subr.mxu0 0.0
    %444 = vmatpush1.msra.mxu0 0.0
    %445 = vmatprep.subr.mxu0 0.0
    %446 = vmatpush1.msra.mxu0 0.0
    %447 = vmatprep.subr.mxu0 0.0
    %448 = vmatpush1.msra.mxu0 0.0
    %449 = vmatprep.subr.mxu0 0.0
    %450 = vmatpush1.msra.mxu0 0.0
    %451 = vmatprep.subr.mxu0 0.0
    %452 = vmatpush1.msra.mxu0 0.0
    %453 = vmatprep.mubr.f32.mxu0 0.0
    %454 = vmatmul.mubr.f32.gmra.mrb[0].mxu0 %v384
    %v455 = vpop.f32.mrb[0].mxu0
    %v456 = vadd.f32 0.0, %v455
    %v457 = vpop.f32.mrb[0].mxu0
    %458 = vmatprep.mubr.f32.mxu0 0.0
    %459 = vmatmul.mubr.f32.gmra.mrb[0].mxu0 %v387
    %v460 = vpop.f32.mrb[0].mxu0
    %v461 = vadd.f32 0.0, %v460
    %v462 = vpop.f32.mrb[0].mxu0
    %463 = vdwg.mxu0
    %v464 = vld [vmem:[%s1] sm:$0xff]
    %v465 = vld [vmem:[%s1 + $0x8] sm:$0xff]
    %466 = vset.pattern.permute.xlu0 0
    %467 = vperm.xlu0 %466, %v464
    %v468 = vpop.permute.xlu0 %467
    %469 = vset.pattern.permute.xlu0 0
    %470 = vperm.xlu0 %469, %v465
    %v471 = vpop.permute.xlu0 %470
    %vm472 = vcmp.eq.s32.totalorder %v370, %v468
    %vm473 = vcmp.eq.s32.totalorder %v370, %v471
    %v474 = vsel %vm472, 1, 0
    %v475 = vsel %vm473, 1, 0
    %v476 = vcvt.s32.f32 %v474
    %v477 = vcvt.s32.f32 %v475
    %v479 = vsel %vm157, %v476, 0
    %v482 = vsel %vm157, %v477, 0
    %484 = vmatprep.subr.mxu0 0.0
    %485 = vmatpush1.msra.mxu0 %v349
    %486 = vmatprep.subr.mxu0 0.0
    %487 = vmatpush1.msra.mxu0 %v354
    %488 = vmatprep.subr.mxu0 0.0
    %489 = vmatpush1.msra.mxu0 %v359
    %490 = vmatprep.subr.mxu0 0.0
    %491 = vmatpush1.msra.mxu0 %v364
    %492 = vmatprep.subr.mxu0 0.0
    %493 = vmatpush1.msra.mxu0 0.0
    %494 = vmatprep.subr.mxu0 0.0
    %495 = vmatpush1.msra.mxu0 0.0
    %496 = vmatprep.subr.mxu0 0.0
    %497 = vmatpush1.msra.mxu0 0.0
    %498 = vmatprep.subr.mxu0 0.0
    %499 = vmatpush1.msra.mxu0 0.0
    %500 = vmatprep.subr.mxu0 0.0
    %501 = vmatpush1.msra.mxu0 0.0
    %502 = vmatprep.subr.mxu0 0.0
    %503 = vmatpush1.msra.mxu0 0.0
    %504 = vmatprep.subr.mxu0 0.0
    %505 = vmatpush1.msra.mxu0 0.0
    %506 = vmatprep.subr.mxu0 0.0
    %507 = vmatpush1.msra.mxu0 0.0
    %508 = vmatprep.subr.mxu0 0.0
    %509 = vmatpush1.msra.mxu0 0.0
    %510 = vmatprep.subr.mxu0 0.0
    %511 = vmatpush1.msra.mxu0 0.0
    %512 = vmatprep.subr.mxu0 0.0
    %513 = vmatpush1.msra.mxu0 0.0
    %514 = vmatprep.subr.mxu0 0.0
    %515 = vmatpush1.msra.mxu0 0.0
    %516 = vmatprep.subr.mxu0 0.0
    %517 = vmatpush1.msra.mxu0 0.0
    %518 = vmatprep.subr.mxu0 0.0
    %519 = vmatpush1.msra.mxu0 0.0
    %520 = vmatprep.subr.mxu0 0.0
    %521 = vmatpush1.msra.mxu0 0.0
    %522 = vmatprep.subr.mxu0 0.0
    %523 = vmatpush1.msra.mxu0 0.0
    %524 = vmatprep.subr.mxu0 0.0
    %525 = vmatpush1.msra.mxu0 0.0
    %526 = vmatprep.subr.mxu0 0.0
    %527 = vmatpush1.msra.mxu0 0.0
    %528 = vmatprep.subr.mxu0 0.0
    %529 = vmatpush1.msra.mxu0 0.0
    %530 = vmatprep.subr.mxu0 0.0
    %531 = vmatpush1.msra.mxu0 0.0
    %532 = vmatprep.subr.mxu0 0.0
    %533 = vmatpush1.msra.mxu0 0.0
    %534 = vmatprep.subr.mxu0 0.0
    %535 = vmatpush1.msra.mxu0 0.0
    %536 = vmatprep.subr.mxu0 0.0
    %537 = vmatpush1.msra.mxu0 0.0
    %538 = vmatprep.subr.mxu0 0.0
    %539 = vmatpush1.msra.mxu0 0.0
    %540 = vmatprep.subr.mxu0 0.0
    %541 = vmatpush1.msra.mxu0 0.0
    %542 = vmatprep.subr.mxu0 0.0
    %543 = vmatpush1.msra.mxu0 0.0
    %544 = vmatprep.subr.mxu0 0.0
    %545 = vmatpush1.msra.mxu0 0.0
    %546 = vmatprep.subr.mxu0 0.0
    %547 = vmatpush1.msra.mxu0 0.0
    %548 = vmatprep.mubr.f32.mxu0 0.0
    %549 = vmatmul.mubr.f32.gmra.mrb[0].mxu0 %v479
    %v550 = vpop.f32.mrb[0].mxu0
    %v551 = vadd.f32 0.0, %v550
    %v552 = vpop.f32.mrb[0].mxu0
    %553 = vmatprep.mubr.f32.mxu0 0.0
    %554 = vmatmul.mubr.f32.gmra.mrb[0].mxu0 %v482
    %v555 = vpop.f32.mrb[0].mxu0
    %v556 = vadd.f32 0.0, %v555
    %v557 = vpop.f32.mrb[0].mxu0
    %558 = vdwg.mxu0
    %v559 = vld [vmem:[#allocation6] sm:$0xff]
    %v560 = vld [vmem:[#allocation6 + $0x8] sm:$0xff]
    %v561 = vld [vmem:[#allocation6 + $0x10] sm:$0xff]
    %v562 = vld [vmem:[#allocation6 + $0x18] sm:$0xff]
    %v563 = vld [vmem:[#allocation12] sm:$0xff]
    %v564 = vld [vmem:[#allocation12 + $0x8] sm:$0xff]
    %v565 = vld [vmem:[#allocation12 + $0x10] sm:$0xff]
    %v566 = vld [vmem:[#allocation12 + $0x18] sm:$0xff]
    %v567 = vld [vmem:[#allocation9] sm:$0x1]
    %v569 = vlaneseq
    %v570 = vshrl.u32 %v569, 7
    %v571 = vsub.s32 0, %v570
    %v572 = vrot.slane %v567, %v571
    %v573 = vld [vmem:[%s11] sm:$0x1]
    %v575 = vlaneseq
    %v576 = vshrl.u32 %v575, 7
    %v577 = vsub.s32 0, %v576
    %v578 = vrot.slane %v573, %v577
    %v580 = vsel %vm157, 0.0, 0
    %582 = vmatprep.subr.mxu0 0.0
    %583 = vmatpush1.msra.mxu0 %v559
    %584 = vmatprep.subr.mxu0 0.0
    %585 = vmatpush1.msra.mxu0 %v560
    %586 = vmatprep.subr.mxu0 0.0
    %587 = vmatpush1.msra.mxu0 %v561
    %588 = vmatprep.subr.mxu0 0.0
    %589 = vmatpush1.msra.mxu0 %v562
    %590 = vmatprep.subr.mxu0 0.0
    %591 = vmatpush1.msra.mxu0 0.0
    %592 = vmatprep.subr.mxu0 0.0
    %593 = vmatpush1.msra.mxu0 0.0
    %594 = vmatprep.subr.mxu0 0.0
    %595 = vmatpush1.msra.mxu0 0.0
    %596 = vmatprep.subr.mxu0 0.0
    %597 = vmatpush1.msra.mxu0 0.0
    %598 = vmatprep.subr.mxu0 0.0
    %599 = vmatpush1.msra.mxu0 0.0
    %600 = vmatprep.subr.mxu0 0.0
    %601 = vmatpush1.msra.mxu0 0.0
    %602 = vmatprep.subr.mxu0 0.0
    %603 = vmatpush1.msra.mxu0 0.0
    %604 = vmatprep.subr.mxu0 0.0
    %605 = vmatpush1.msra.mxu0 0.0
    %606 = vmatprep.subr.mxu0 0.0
    %607 = vmatpush1.msra.mxu0 0.0
    %608 = vmatprep.subr.mxu0 0.0
    %609 = vmatpush1.msra.mxu0 0.0
    %610 = vmatprep.subr.mxu0 0.0
    %611 = vmatpush1.msra.mxu0 0.0
    %612 = vmatprep.subr.mxu0 0.0
    %613 = vmatpush1.msra.mxu0 0.0
    %614 = vmatprep.subr.mxu0 0.0
    %615 = vmatpush1.msra.mxu0 0.0
    %616 = vmatprep.subr.mxu0 0.0
    %617 = vmatpush1.msra.mxu0 0.0
    %618 = vmatprep.subr.mxu0 0.0
    %619 = vmatpush1.msra.mxu0 0.0
    %620 = vmatprep.subr.mxu0 0.0
    %621 = vmatpush1.msra.mxu0 0.0
    %622 = vmatprep.subr.mxu0 0.0
    %623 = vmatpush1.msra.mxu0 0.0
    %624 = vmatprep.subr.mxu0 0.0
    %625 = vmatpush1.msra.mxu0 0.0
    %626 = vmatprep.subr.mxu0 0.0
    %627 = vmatpush1.msra.mxu0 0.0
    %628 = vmatprep.subr.mxu0 0.0
    %629 = vmatpush1.msra.mxu0 0.0
    %630 = vmatprep.subr.mxu0 0.0
    %631 = vmatpush1.msra.mxu0 0.0
    %632 = vmatprep.subr.mxu0 0.0
    %633 = vmatpush1.msra.mxu0 0.0
    %634 = vmatprep.subr.mxu0 0.0
    %635 = vmatpush1.msra.mxu0 0.0
    %636 = vmatprep.subr.mxu0 0.0
    %637 = vmatpush1.msra.mxu0 0.0
    %638 = vmatprep.subr.mxu0 0.0
    %639 = vmatpush1.msra.mxu0 0.0
    %640 = vmatprep.subr.mxu0 0.0
    %641 = vmatpush1.msra.mxu0 0.0
    %642 = vmatprep.subr.mxu0 0.0
    %643 = vmatpush1.msra.mxu0 0.0
    %644 = vmatprep.subr.mxu0 0.0
    %645 = vmatpush1.msra.mxu0 0.0
    %646 = vmatprep.mubr.f32.mxu0 0.0
    %647 = vmatmul.mubr.f32.gmra.mrb[0].mxu0 %v580
    %v648 = vpop.f32.mrb[0].mxu0
    %v649 = vadd.f32 0.0, %v648
    %v650 = vpop.f32.mrb[0].mxu0
    %651 = vdwg.mxu0
    %v652 = vadd.f32 %v456, %v649
    %v653 = vxor.u32 %v652, 2147483648
    %v654 = vmul.f32 %v653, 1.442695
    %v655 = vpow.pop %v654
    %v656 = vadd.f32 %v655, 1.0
    %v657 = vrcp.pop %v656
    %v658 = vmul.f32 1.0, %v657
    %659 = vrot.lane.b32.xlu0 %v572, 64
    %v660 = vpop.permute.xlu0 %659
    %v662 = vadd.f32 %v649, %v660
    %664 = vrot.lane.b32.xlu0 %v662, 64
    %v665 = vpop.permute.xlu0 %664
    %v667 = vmul.f32 %v658, %v665
    %669 = vrot.lane.b32.xlu0 %v667, 64
    %v670 = vpop.permute.xlu0 %669
    %v672 = vadd.f32 %v456, %v670
    %v673 = vtanh.pop %v672
    %v674 = vsub.f32 1.0, %v658
    %676 = vrot.lane.b32.xlu0 %v673, 96
    %v677 = vpop.permute.xlu0 %676
    %v679 = vmul.f32 %v674, %v677
    %v680 = vmul.f32 %v658, 0.0
    %v681 = vadd.f32 %v679, %v680
    %683 = vrot.lane.b32.xlu0 %v681, 96
    %v684 = vpop.permute.xlu0 %683
    %v685 = vsel %vm157, %v684, 0
    %687 = vmatprep.subr.mxu0 0.0
    %688 = vmatpush1.msra.mxu0 %v559
    %689 = vmatprep.subr.mxu0 0.0
    %690 = vmatpush1.msra.mxu0 %v560
    %691 = vmatprep.subr.mxu0 0.0
    %692 = vmatpush1.msra.mxu0 %v561
    %693 = vmatprep.subr.mxu0 0.0
    %694 = vmatpush1.msra.mxu0 %v562
    %695 = vmatprep.subr.mxu0 0.0
    %696 = vmatpush1.msra.mxu0 0.0
    %697 = vmatprep.subr.mxu0 0.0
    %698 = vmatpush1.msra.mxu0 0.0
    %699 = vmatprep.subr.mxu0 0.0
    %700 = vmatpush1.msra.mxu0 0.0
    %701 = vmatprep.subr.mxu0 0.0
    %702 = vmatpush1.msra.mxu0 0.0
    %703 = vmatprep.subr.mxu0 0.0
    %704 = vmatpush1.msra.mxu0 0.0
    %705 = vmatprep.subr.mxu0 0.0
    %706 = vmatpush1.msra.mxu0 0.0
    %707 = vmatprep.subr.mxu0 0.0
    %708 = vmatpush1.msra.mxu0 0.0
    %709 = vmatprep.subr.mxu0 0.0
    %710 = vmatpush1.msra.mxu0 0.0
    %711 = vmatprep.subr.mxu0 0.0
    %712 = vmatpush1.msra.mxu0 0.0
    %713 = vmatprep.subr.mxu0 0.0
    %714 = vmatpush1.msra.mxu0 0.0
    %715 = vmatprep.subr.mxu0 0.0
    %716 = vmatpush1.msra.mxu0 0.0
    %717 = vmatprep.subr.mxu0 0.0
    %718 = vmatpush1.msra.mxu0 0.0
    %719 = vmatprep.subr.mxu0 0.0
    %720 = vmatpush1.msra.mxu0 0.0
    %721 = vmatprep.subr.mxu0 0.0
    %722 = vmatpush1.msra.mxu0 0.0
    %723 = vmatprep.subr.mxu0 0.0
    %724 = vmatpush1.msra.mxu0 0.0
    %725 = vmatprep.subr.mxu0 0.0
    %726 = vmatpush1.msra.mxu0 0.0
    %727 = vmatprep.subr.mxu0 0.0
    %728 = vmatpush1.msra.mxu0 0.0
    %729 = vmatprep.subr.mxu0 0.0
    %730 = vmatpush1.msra.mxu0 0.0
    %731 = vmatprep.subr.mxu0 0.0
    %732 = vmatpush1.msra.mxu0 0.0
    %733 = vmatprep.subr.mxu0 0.0
    %734 = vmatpush1.msra.mxu0 0.0
    %735 = vmatprep.subr.mxu0 0.0
    %736 = vmatpush1.msra.mxu0 0.0
    %737 = vmatprep.subr.mxu0 0.0
    %738 = vmatpush1.msra.mxu0 0.0
    %739 = vmatprep.subr.mxu0 0.0
    %740 = vmatpush1.msra.mxu0 0.0
    %741 = vmatprep.subr.mxu0 0.0
    %742 = vmatpush1.msra.mxu0 0.0
    %743 = vmatprep.subr.mxu0 0.0
    %744 = vmatpush1.msra.mxu0 0.0
    %745 = vmatprep.subr.mxu0 0.0
    %746 = vmatpush1.msra.mxu0 0.0
    %747 = vmatprep.subr.mxu0 0.0
    %748 = vmatpush1.msra.mxu0 0.0
    %749 = vmatprep.subr.mxu0 0.0
    %750 = vmatpush1.msra.mxu0 0.0
    %751 = vmatprep.mubr.f32.mxu0 0.0
    %752 = vmatmul.mubr.f32.gmra.mrb[0].mxu0 %v685
    %v753 = vpop.f32.mrb[0].mxu0
    %v754 = vadd.f32 0.0, %v753
    %v755 = vpop.f32.mrb[0].mxu0
    %756 = vdwg.mxu0
    %v758 = vrot.slane %v754, 6
    %v760 = vadd.f32 %v456, %v758
    %v761 = vxor.u32 %v760, 2147483648
    %v762 = vmul.f32 %v761, 1.442695
    %v763 = vpow.pop %v762
    %v764 = vadd.f32 %v763, 1.0
    %v765 = vrcp.pop %v764
    %v766 = vmul.f32 1.0, %v765
    %v767 = vadd.f32 %v754, %v660
    %v769 = vrot.slane %v767, 6
    %770 = vrot.lane.b32.xlu0 %v769, 64
    %v771 = vpop.permute.xlu0 %770
    %v773 = vmul.f32 %v766, %v771
    %775 = vrot.lane.b32.xlu0 %v773, 64
    %v776 = vpop.permute.xlu0 %775
    %v778 = vadd.f32 %v456, %v776
    %v779 = vtanh.pop %v778
    %v780 = vsub.f32 1.0, %v766
    %782 = vrot.lane.b32.xlu0 %v779, 96
    %v783 = vpop.permute.xlu0 %782
    %v785 = vmul.f32 %v780, %v783
    %v786 = vrot.slane %v681, 6
    %v788 = vmul.f32 %v766, %v786
    %v789 = vadd.f32 %v785, %v788
    %v791 = vrot.slane %v789, 2
    %792 = vrot.lane.b32.xlu0 %v791, 96
    %v793 = vpop.permute.xlu0 %792
    %v794 = vsel %vm157, %v793, 0
    %796 = vmatprep.subr.mxu0 0.0
    %797 = vmatpush1.msra.mxu0 %v559
    %798 = vmatprep.subr.mxu0 0.0
    %799 = vmatpush1.msra.mxu0 %v560
    %800 = vmatprep.subr.mxu0 0.0
    %801 = vmatpush1.msra.mxu0 %v561
    %802 = vmatprep.subr.mxu0 0.0
    %803 = vmatpush1.msra.mxu0 %v562
    %804 = vmatprep.subr.mxu0 0.0
    %805 = vmatpush1.msra.mxu0 0.0
    %806 = vmatprep.subr.mxu0 0.0
    %807 = vmatpush1.msra.mxu0 0.0
    %808 = vmatprep.subr.mxu0 0.0
    %809 = vmatpush1.msra.mxu0 0.0
    %810 = vmatprep.subr.mxu0 0.0
    %811 = vmatpush1.msra.mxu0 0.0
    %812 = vmatprep.subr.mxu0 0.0
    %813 = vmatpush1.msra.mxu0 0.0
    %814 = vmatprep.subr.mxu0 0.0
    %815 = vmatpush1.msra.mxu0 0.0
    %816 = vmatprep.subr.mxu0 0.0
    %817 = vmatpush1.msra.mxu0 0.0
    %818 = vmatprep.subr.mxu0 0.0
    %819 = vmatpush1.msra.mxu0 0.0
    %820 = vmatprep.subr.mxu0 0.0
    %821 = vmatpush1.msra.mxu0 0.0
    %822 = vmatprep.subr.mxu0 0.0
    %823 = vmatpush1.msra.mxu0 0.0
    %824 = vmatprep.subr.mxu0 0.0
    %825 = vmatpush1.msra.mxu0 0.0
    %826 = vmatprep.subr.mxu0 0.0
    %827 = vmatpush1.msra.mxu0 0.0
    %828 = vmatprep.subr.mxu0 0.0
    %829 = vmatpush1.msra.mxu0 0.0
    %830 = vmatprep.subr.mxu0 0.0
    %831 = vmatpush1.msra.mxu0 0.0
    %832 = vmatprep.subr.mxu0 0.0
    %833 = vmatpush1.msra.mxu0 0.0
    %834 = vmatprep.subr.mxu0 0.0
    %835 = vmatpush1.msra.mxu0 0.0
    %836 = vmatprep.subr.mxu0 0.0
    %837 = vmatpush1.msra.mxu0 0.0
    %838 = vmatprep.subr.mxu0 0.0
    %839 = vmatpush1.msra.mxu0 0.0
    %840 = vmatprep.subr.mxu0 0.0
    %841 = vmatpush1.msra.mxu0 0.0
    %842 = vmatprep.subr.mxu0 0.0
    %843 = vmatpush1.msra.mxu0 0.0
    %844 = vmatprep.subr.mxu0 0.0
    %845 = vmatpush1.msra.mxu0 0.0
    %846 = vmatprep.subr.mxu0 0.0
    %847 = vmatpush1.msra.mxu0 0.0
    %848 = vmatprep.subr.mxu0 0.0
    %849 = vmatpush1.msra.mxu0 0.0
    %850 = vmatprep.subr.mxu0 0.0
    %851 = vmatpush1.msra.mxu0 0.0
    %852 = vmatprep.subr.mxu0 0.0
    %853 = vmatpush1.msra.mxu0 0.0
    %854 = vmatprep.subr.mxu0 0.0
    %855 = vmatpush1.msra.mxu0 0.0
    %856 = vmatprep.subr.mxu0 0.0
    %857 = vmatpush1.msra.mxu0 0.0
    %858 = vmatprep.subr.mxu0 0.0
    %859 = vmatpush1.msra.mxu0 0.0
    %860 = vmatprep.mubr.f32.mxu0 0.0
    %861 = vmatmul.mubr.f32.gmra.mrb[0].mxu0 %v794
    %v862 = vpop.f32.mrb[0].mxu0
    %v863 = vadd.f32 0.0, %v862
    %v864 = vpop.f32.mrb[0].mxu0
    %865 = vdwg.mxu0
    %v867 = vrot.slane %v863, 4
    %v869 = vadd.f32 %v456, %v867
    %v870 = vxor.u32 %v869, 2147483648
    %v871 = vmul.f32 %v870, 1.442695
    %v872 = vpow.pop %v871
    %v873 = vadd.f32 %v872, 1.0
    %v874 = vrcp.pop %v873
    %v875 = vmul.f32 1.0, %v874
    %v876 = vadd.f32 %v863, %v660
    %v878 = vrot.slane %v876, 4
    %879 = vrot.lane.b32.xlu0 %v878, 64
    %v880 = vpop.permute.xlu0 %879
    %v882 = vmul.f32 %v875, %v880
    %884 = vrot.lane.b32.xlu0 %v882, 64
    %v885 = vpop.permute.xlu0 %884
    %v887 = vadd.f32 %v456, %v885
    %v888 = vtanh.pop %v887
    %v889 = vsub.f32 1.0, %v875
    %891 = vrot.lane.b32.xlu0 %v888, 96
    %v892 = vpop.permute.xlu0 %891
    %v894 = vmul.f32 %v889, %v892
    %v895 = vrot.slane %v789, 6
    %v897 = vmul.f32 %v875, %v895
    %v898 = vadd.f32 %v894, %v897
    %v900 = vrot.slane %v898, 4
    %901 = vrot.lane.b32.xlu0 %v900, 96
    %v902 = vpop.permute.xlu0 %901
    %v903 = vsel %vm157, %v902, 0
    %905 = vmatprep.subr.mxu0 0.0
    %906 = vmatpush1.msra.mxu0 %v559
    %907 = vmatprep.subr.mxu0 0.0
    %908 = vmatpush1.msra.mxu0 %v560
    %909 = vmatprep.subr.mxu0 0.0
    %910 = vmatpush1.msra.mxu0 %v561
    %911 = vmatprep.subr.mxu0 0.0
    %912 = vmatpush1.msra.mxu0 %v562
    %913 = vmatprep.subr.mxu0 0.0
    %914 = vmatpush1.msra.mxu0 0.0
    %915 = vmatprep.subr.mxu0 0.0
    %916 = vmatpush1.msra.mxu0 0.0
    %917 = vmatprep.subr.mxu0 0.0
    %918 = vmatpush1.msra.mxu0 0.0
    %919 = vmatprep.subr.mxu0 0.0
    %920 = vmatpush1.msra.mxu0 0.0
    %921 = vmatprep.subr.mxu0 0.0
    %922 = vmatpush1.msra.mxu0 0.0
    %923 = vmatprep.subr.mxu0 0.0
    %924 = vmatpush1.msra.mxu0 0.0
    %925 = vmatprep.subr.mxu0 0.0
    %926 = vmatpush1.msra.mxu0 0.0
    %927 = vmatprep.subr.mxu0 0.0
    %928 = vmatpush1.msra.mxu0 0.0
    %929 = vmatprep.subr.mxu0 0.0
    %930 = vmatpush1.msra.mxu0 0.0
    %931 = vmatprep.subr.mxu0 0.0
    %932 = vmatpush1.msra.mxu0 0.0
    %933 = vmatprep.subr.mxu0 0.0
    %934 = vmatpush1.msra.mxu0 0.0
    %935 = vmatprep.subr.mxu0 0.0
    %936 = vmatpush1.msra.mxu0 0.0
    %937 = vmatprep.subr.mxu0 0.0
    %938 = vmatpush1.msra.mxu0 0.0
    %939 = vmatprep.subr.mxu0 0.0
    %940 = vmatpush1.msra.mxu0 0.0
    %941 = vmatprep.subr.mxu0 0.0
    %942 = vmatpush1.msra.mxu0 0.0
    %943 = vmatprep.subr.mxu0 0.0
    %944 = vmatpush1.msra.mxu0 0.0
    %945 = vmatprep.subr.mxu0 0.0
    %946 = vmatpush1.msra.mxu0 0.0
    %947 = vmatprep.subr.mxu0 0.0
    %948 = vmatpush1.msra.mxu0 0.0
    %949 = vmatprep.subr.mxu0 0.0
    %950 = vmatpush1.msra.mxu0 0.0
    %951 = vmatprep.subr.mxu0 0.0
    %952 = vmatpush1.msra.mxu0 0.0
    %953 = vmatprep.subr.mxu0 0.0
    %954 = vmatpush1.msra.mxu0 0.0
    %955 = vmatprep.subr.mxu0 0.0
    %956 = vmatpush1.msra.mxu0 0.0
    %957 = vmatprep.subr.mxu0 0.0
    %958 = vmatpush1.msra.mxu0 0.0
    %959 = vmatprep.subr.mxu0 0.0
    %960 = vmatpush1.msra.mxu0 0.0
    %961 = vmatprep.subr.mxu0 0.0
    %962 = vmatpush1.msra.mxu0 0.0
    %963 = vmatprep.subr.mxu0 0.0
    %964 = vmatpush1.msra.mxu0 0.0
    %965 = vmatprep.subr.mxu0 0.0
    %966 = vmatpush1.msra.mxu0 0.0
    %967 = vmatprep.subr.mxu0 0.0
    %968 = vmatpush1.msra.mxu0 0.0
    %969 = vmatprep.mubr.f32.mxu0 0.0
    %970 = vmatmul.mubr.f32.gmra.mrb[0].mxu0 %v903
    %v971 = vpop.f32.mrb[0].mxu0
    %v972 = vadd.f32 0.0, %v971
    %v973 = vpop.f32.mrb[0].mxu0
    %974 = vdwg.mxu0
    %v976 = vrot.slane %v972, 2
    %v978 = vadd.f32 %v456, %v976
    %v979 = vxor.u32 %v978, 2147483648
    %v980 = vmul.f32 %v979, 1.442695
    %v981 = vpow.pop %v980
    %v982 = vadd.f32 %v981, 1.0
    %v983 = vrcp.pop %v982
    %v984 = vmul.f32 1.0, %v983
    %v985 = vadd.f32 %v972, %v660
    %v987 = vrot.slane %v985, 2
    %988 = vrot.lane.b32.xlu0 %v987, 64
    %v989 = vpop.permute.xlu0 %988
    %v991 = vmul.f32 %v984, %v989
    %993 = vrot.lane.b32.xlu0 %v991, 64
    %v994 = vpop.permute.xlu0 %993
    %v996 = vadd.f32 %v456, %v994
    %v997 = vtanh.pop %v996
    %v998 = vsub.f32 1.0, %v984
    %1000 = vrot.lane.b32.xlu0 %v997, 96
    %v1001 = vpop.permute.xlu0 %1000
    %v1003 = vmul.f32 %v998, %v1001
    %v1004 = vrot.slane %v898, 6
    %v1006 = vmul.f32 %v984, %v1004
    %v1007 = vadd.f32 %v1003, %v1006
    %v1009 = vrot.slane %v1007, 6
    %1010 = vrot.lane.b32.xlu0 %v1009, 96
    %v1011 = vpop.permute.xlu0 %1010
    %v1012 = vsel %vm157, %v1011, 0
    %1014 = vmatprep.subr.mxu0 0.0
    %1015 = vmatpush1.msra.mxu0 %v559
    %1016 = vmatprep.subr.mxu0 0.0
    %1017 = vmatpush1.msra.mxu0 %v560
    %1018 = vmatprep.subr.mxu0 0.0
    %1019 = vmatpush1.msra.mxu0 %v561
    %1020 = vmatprep.subr.mxu0 0.0
    %1021 = vmatpush1.msra.mxu0 %v562
    %1022 = vmatprep.subr.mxu0 0.0
    %1023 = vmatpush1.msra.mxu0 0.0
    %1024 = vmatprep.subr.mxu0 0.0
    %1025 = vmatpush1.msra.mxu0 0.0
    %1026 = vmatprep.subr.mxu0 0.0
    %1027 = vmatpush1.msra.mxu0 0.0
    %1028 = vmatprep.subr.mxu0 0.0
    %1029 = vmatpush1.msra.mxu0 0.0
    %1030 = vmatprep.subr.mxu0 0.0
    %1031 = vmatpush1.msra.mxu0 0.0
    %1032 = vmatprep.subr.mxu0 0.0
    %1033 = vmatpush1.msra.mxu0 0.0
    %1034 = vmatprep.subr.mxu0 0.0
    %1035 = vmatpush1.msra.mxu0 0.0
    %1036 = vmatprep.subr.mxu0 0.0
    %1037 = vmatpush1.msra.mxu0 0.0
    %1038 = vmatprep.subr.mxu0 0.0
    %1039 = vmatpush1.msra.mxu0 0.0
    %1040 = vmatprep.subr.mxu0 0.0
    %1041 = vmatpush1.msra.mxu0 0.0
    %1042 = vmatprep.subr.mxu0 0.0
    %1043 = vmatpush1.msra.mxu0 0.0
    %1044 = vmatprep.subr.mxu0 0.0
    %1045 = vmatpush1.msra.mxu0 0.0
    %1046 = vmatprep.subr.mxu0 0.0
    %1047 = vmatpush1.msra.mxu0 0.0
    %1048 = vmatprep.subr.mxu0 0.0
    %1049 = vmatpush1.msra.mxu0 0.0
    %1050 = vmatprep.subr.mxu0 0.0
    %1051 = vmatpush1.msra.mxu0 0.0
    %1052 = vmatprep.subr.mxu0 0.0
    %1053 = vmatpush1.msra.mxu0 0.0
    %1054 = vmatprep.subr.mxu0 0.0
    %1055 = vmatpush1.msra.mxu0 0.0
    %1056 = vmatprep.subr.mxu0 0.0
    %1057 = vmatpush1.msra.mxu0 0.0
    %1058 = vmatprep.subr.mxu0 0.0
    %1059 = vmatpush1.msra.mxu0 0.0
    %1060 = vmatprep.subr.mxu0 0.0
    %1061 = vmatpush1.msra.mxu0 0.0
    %1062 = vmatprep.subr.mxu0 0.0
    %1063 = vmatpush1.msra.mxu0 0.0
    %1064 = vmatprep.subr.mxu0 0.0
    %1065 = vmatpush1.msra.mxu0 0.0
    %1066 = vmatprep.subr.mxu0 0.0
    %1067 = vmatpush1.msra.mxu0 0.0
    %1068 = vmatprep.subr.mxu0 0.0
    %1069 = vmatpush1.msra.mxu0 0.0
    %1070 = vmatprep.subr.mxu0 0.0
    %1071 = vmatpush1.msra.mxu0 0.0
    %1072 = vmatprep.subr.mxu0 0.0
    %1073 = vmatpush1.msra.mxu0 0.0
    %1074 = vmatprep.subr.mxu0 0.0
    %1075 = vmatpush1.msra.mxu0 0.0
    %1076 = vmatprep.subr.mxu0 0.0
    %1077 = vmatpush1.msra.mxu0 0.0
    %1078 = vmatprep.mubr.f32.mxu0 0.0
    %1079 = vmatmul.mubr.f32.gmra.mrb[0].mxu0 %v1012
    %v1080 = vpop.f32.mrb[0].mxu0
    %v1081 = vadd.f32 0.0, %v1080
    %v1082 = vpop.f32.mrb[0].mxu0
    %1083 = vdwg.mxu0
    %v1084 = vadd.f32 %v461, %v1081
    %v1085 = vxor.u32 %v1084, 2147483648
    %v1086 = vmul.f32 %v1085, 1.442695
    %v1087 = vpow.pop %v1086
    %v1088 = vadd.f32 %v1087, 1.0
    %v1089 = vrcp.pop %v1088
    %v1090 = vmul.f32 1.0, %v1089
    %v1091 = vadd.f32 %v1081, %v660
    %1093 = vrot.lane.b32.xlu0 %v1091, 64
    %v1094 = vpop.permute.xlu0 %1093
    %v1096 = vmul.f32 %v1090, %v1094
    %1098 = vrot.lane.b32.xlu0 %v1096, 64
    %v1099 = vpop.permute.xlu0 %1098
    %v1101 = vadd.f32 %v461, %v1099
    %v1102 = vtanh.pop %v1101
    %v1103 = vsub.f32 1.0, %v1090
    %1105 = vrot.lane.b32.xlu0 %v1102, 96
    %v1106 = vpop.permute.xlu0 %1105
    %v1108 = vmul.f32 %v1103, %v1106
    %v1110 = vmul.f32 %v1090, %v1009
    %v1111 = vadd.f32 %v1108, %v1110
    %1113 = vrot.lane.b32.xlu0 %v1111, 96
    %v1114 = vpop.permute.xlu0 %1113
    %v1115 = vsel %vm157, %v1114, 0
    %1117 = vmatprep.subr.mxu0 0.0
    %1118 = vmatpush1.msra.mxu0 %v559
    %1119 = vmatprep.subr.mxu0 0.0
    %1120 = vmatpush1.msra.mxu0 %v560
    %1121 = vmatprep.subr.mxu0 0.0
    %1122 = vmatpush1.msra.mxu0 %v561
    %1123 = vmatprep.subr.mxu0 0.0
    %1124 = vmatpush1.msra.mxu0 %v562
    %1125 = vmatprep.subr.mxu0 0.0
    %1126 = vmatpush1.msra.mxu0 0.0
    %1127 = vmatprep.subr.mxu0 0.0
    %1128 = vmatpush1.msra.mxu0 0.0
    %1129 = vmatprep.subr.mxu0 0.0
    %1130 = vmatpush1.msra.mxu0 0.0
    %1131 = vmatprep.subr.mxu0 0.0
    %1132 = vmatpush1.msra.mxu0 0.0
    %1133 = vmatprep.subr.mxu0 0.0
    %1134 = vmatpush1.msra.mxu0 0.0
    %1135 = vmatprep.subr.mxu0 0.0
    %1136 = vmatpush1.msra.mxu0 0.0
    %1137 = vmatprep.subr.mxu0 0.0
    %1138 = vmatpush1.msra.mxu0 0.0
    %1139 = vmatprep.subr.mxu0 0.0
    %1140 = vmatpush1.msra.mxu0 0.0
    %1141 = vmatprep.subr.mxu0 0.0
    %1142 = vmatpush1.msra.mxu0 0.0
    %1143 = vmatprep.subr.mxu0 0.0
    %1144 = vmatpush1.msra.mxu0 0.0
    %1145 = vmatprep.subr.mxu0 0.0
    %1146 = vmatpush1.msra.mxu0 0.0
    %1147 = vmatprep.subr.mxu0 0.0
    %1148 = vmatpush1.msra.mxu0 0.0
    %1149 = vmatprep.subr.mxu0 0.0
    %1150 = vmatpush1.msra.mxu0 0.0
    %1151 = vmatprep.subr.mxu0 0.0
    %1152 = vmatpush1.msra.mxu0 0.0
    %1153 = vmatprep.subr.mxu0 0.0
    %1154 = vmatpush1.msra.mxu0 0.0
    %1155 = vmatprep.subr.mxu0 0.0
    %1156 = vmatpush1.msra.mxu0 0.0
    %1157 = vmatprep.subr.mxu0 0.0
    %1158 = vmatpush1.msra.mxu0 0.0
    %1159 = vmatprep.subr.mxu0 0.0
    %1160 = vmatpush1.msra.mxu0 0.0
    %1161 = vmatprep.subr.mxu0 0.0
    %1162 = vmatpush1.msra.mxu0 0.0
    %1163 = vmatprep.subr.mxu0 0.0
    %1164 = vmatpush1.msra.mxu0 0.0
    %1165 = vmatprep.subr.mxu0 0.0
    %1166 = vmatpush1.msra.mxu0 0.0
    %1167 = vmatprep.subr.mxu0 0.0
    %1168 = vmatpush1.msra.mxu0 0.0
    %1169 = vmatprep.subr.mxu0 0.0
    %1170 = vmatpush1.msra.mxu0 0.0
    %1171 = vmatprep.subr.mxu0 0.0
    %1172 = vmatpush1.msra.mxu0 0.0
    %1173 = vmatprep.subr.mxu0 0.0
    %1174 = vmatpush1.msra.mxu0 0.0
    %1175 = vmatprep.subr.mxu0 0.0
    %1176 = vmatpush1.msra.mxu0 0.0
    %1177 = vmatprep.subr.mxu0 0.0
    %1178 = vmatpush1.msra.mxu0 0.0
    %1179 = vmatprep.subr.mxu0 0.0
    %1180 = vmatpush1.msra.mxu0 0.0
    %1181 = vmatprep.mubr.f32.mxu0 0.0
    %1182 = vmatmul.mubr.f32.gmra.mrb[0].mxu0 %v1115
    %v1183 = vpop.f32.mrb[0].mxu0
    %v1184 = vadd.f32 0.0, %v1183
    %v1185 = vpop.f32.mrb[0].mxu0
    %1186 = vdwg.mxu0
    %v1188 = vrot.slane %v1184, 6
    %v1190 = vadd.f32 %v461, %v1188
    %v1191 = vxor.u32 %v1190, 2147483648
    %v1192 = vmul.f32 %v1191, 1.442695
    %v1193 = vpow.pop %v1192
    %v1194 = vadd.f32 %v1193, 1.0
    %v1195 = vrcp.pop %v1194
    %v1196 = vmul.f32 1.0, %v1195
    %v1197 = vadd.f32 %v1184, %v660
    %v1199 = vrot.slane %v1197, 6
    %1200 = vrot.lane.b32.xlu0 %v1199, 64
    %v1201 = vpop.permute.xlu0 %1200
    %v1203 = vmul.f32 %v1196, %v1201
    %1205 = vrot.lane.b32.xlu0 %v1203, 64
    %v1206 = vpop.permute.xlu0 %1205
    %v1208 = vadd.f32 %v461, %v1206
    %v1209 = vtanh.pop %v1208
    %v1210 = vsub.f32 1.0, %v1196
    %1212 = vrot.lane.b32.xlu0 %v1209, 96
    %v1213 = vpop.permute.xlu0 %1212
    %v1215 = vmul.f32 %v1210, %v1213
    %v1216 = vrot.slane %v1111, 6
    %v1218 = vmul.f32 %v1196, %v1216
    %v1219 = vadd.f32 %v1215, %v1218
    %v1221 = vrot.slane %v1219, 2
    %1222 = vrot.lane.b32.xlu0 %v1221, 96
    %v1223 = vpop.permute.xlu0 %1222
    %v1224 = vsel %vm157, %v1223, 0
    %1226 = vmatprep.subr.mxu0 0.0
    %1227 = vmatpush1.msra.mxu0 %v559
    %1228 = vmatprep.subr.mxu0 0.0
    %1229 = vmatpush1.msra.mxu0 %v560
    %1230 = vmatprep.subr.mxu0 0.0
    %1231 = vmatpush1.msra.mxu0 %v561
    %1232 = vmatprep.subr.mxu0 0.0
    %1233 = vmatpush1.msra.mxu0 %v562
    %1234 = vmatprep.subr.mxu0 0.0
    %1235 = vmatpush1.msra.mxu0 0.0
    %1236 = vmatprep.subr.mxu0 0.0
    %1237 = vmatpush1.msra.mxu0 0.0
    %1238 = vmatprep.subr.mxu0 0.0
    %1239 = vmatpush1.msra.mxu0 0.0
    %1240 = vmatprep.subr.mxu0 0.0
    %1241 = vmatpush1.msra.mxu0 0.0
    %1242 = vmatprep.subr.mxu0 0.0
    %1243 = vmatpush1.msra.mxu0 0.0
    %1244 = vmatprep.subr.mxu0 0.0
    %1245 = vmatpush1.msra.mxu0 0.0
    %1246 = vmatprep.subr.mxu0 0.0
    %1247 = vmatpush1.msra.mxu0 0.0
    %1248 = vmatprep.subr.mxu0 0.0
    %1249 = vmatpush1.msra.mxu0 0.0
    %1250 = vmatprep.subr.mxu0 0.0
    %1251 = vmatpush1.msra.mxu0 0.0
    %1252 = vmatprep.subr.mxu0 0.0
    %1253 = vmatpush1.msra.mxu0 0.0
    %1254 = vmatprep.subr.mxu0 0.0
    %1255 = vmatpush1.msra.mxu0 0.0
    %1256 = vmatprep.subr.mxu0 0.0
    %1257 = vmatpush1.msra.mxu0 0.0
    %1258 = vmatprep.subr.mxu0 0.0
    %1259 = vmatpush1.msra.mxu0 0.0
    %1260 = vmatprep.subr.mxu0 0.0
    %1261 = vmatpush1.msra.mxu0 0.0
    %1262 = vmatprep.subr.mxu0 0.0
    %1263 = vmatpush1.msra.mxu0 0.0
    %1264 = vmatprep.subr.mxu0 0.0
    %1265 = vmatpush1.msra.mxu0 0.0
    %1266 = vmatprep.subr.mxu0 0.0
    %1267 = vmatpush1.msra.mxu0 0.0
    %1268 = vmatprep.subr.mxu0 0.0
    %1269 = vmatpush1.msra.mxu0 0.0
    %1270 = vmatprep.subr.mxu0 0.0
    %1271 = vmatpush1.msra.mxu0 0.0
    %1272 = vmatprep.subr.mxu0 0.0
    %1273 = vmatpush1.msra.mxu0 0.0
    %1274 = vmatprep.subr.mxu0 0.0
    %1275 = vmatpush1.msra.mxu0 0.0
    %1276 = vmatprep.subr.mxu0 0.0
    %1277 = vmatpush1.msra.mxu0 0.0
    %1278 = vmatprep.subr.mxu0 0.0
    %1279 = vmatpush1.msra.mxu0 0.0
    %1280 = vmatprep.subr.mxu0 0.0
    %1281 = vmatpush1.msra.mxu0 0.0
    %1282 = vmatprep.subr.mxu0 0.0
    %1283 = vmatpush1.msra.mxu0 0.0
    %1284 = vmatprep.subr.mxu0 0.0
    %1285 = vmatpush1.msra.mxu0 0.0
    %1286 = vmatprep.subr.mxu0 0.0
    %1287 = vmatpush1.msra.mxu0 0.0
    %1288 = vmatprep.subr.mxu0 0.0
    %1289 = vmatpush1.msra.mxu0 0.0
    %1290 = vmatprep.mubr.f32.mxu0 0.0
    %1291 = vmatmul.mubr.f32.gmra.mrb[0].mxu0 %v1224
    %v1292 = vpop.f32.mrb[0].mxu0
    %v1293 = vadd.f32 0.0, %v1292
    %v1294 = vpop.f32.mrb[0].mxu0
    %1295 = vdwg.mxu0
    %v1297 = vrot.slane %v1293, 4
    %v1299 = vadd.f32 %v461, %v1297
    %v1300 = vxor.u32 %v1299, 2147483648
    %v1301 = vmul.f32 %v1300, 1.442695
    %v1302 = vpow.pop %v1301
    %v1303 = vadd.f32 %v1302, 1.0
    %v1304 = vrcp.pop %v1303
    %v1305 = vmul.f32 1.0, %v1304
    %v1306 = vadd.f32 %v1293, %v660
    %v1308 = vrot.slane %v1306, 4
    %1309 = vrot.lane.b32.xlu0 %v1308, 64
    %v1310 = vpop.permute.xlu0 %1309
    %v1312 = vmul.f32 %v1305, %v1310
    %1314 = vrot.lane.b32.xlu0 %v1312, 64
    %v1315 = vpop.permute.xlu0 %1314
    %v1317 = vadd.f32 %v461, %v1315
    %v1318 = vtanh.pop %v1317
    %v1319 = vsub.f32 1.0, %v1305
    %1321 = vrot.lane.b32.xlu0 %v1318, 96
    %v1322 = vpop.permute.xlu0 %1321
    %v1324 = vmul.f32 %v1319, %v1322
    %v1325 = vrot.slane %v1219, 6
    %v1327 = vmul.f32 %v1305, %v1325
    %v1328 = vadd.f32 %v1324, %v1327
    %v1330 = vrot.slane %v1328, 4
    %1331 = vrot.lane.b32.xlu0 %v1330, 96
    %v1332 = vpop.permute.xlu0 %1331
    %v1333 = vsel %vm157, %v1332, 0
    %1335 = vmatprep.subr.mxu0 0.0
    %1336 = vmatpush1.msra.mxu0 %v559
    %1337 = vmatprep.subr.mxu0 0.0
    %1338 = vmatpush1.msra.mxu0 %v560
    %1339 = vmatprep.subr.mxu0 0.0
    %1340 = vmatpush1.msra.mxu0 %v561
    %1341 = vmatprep.subr.mxu0 0.0
    %1342 = vmatpush1.msra.mxu0 %v562
    %1343 = vmatprep.subr.mxu0 0.0
    %1344 = vmatpush1.msra.mxu0 0.0
    %1345 = vmatprep.subr.mxu0 0.0
    %1346 = vmatpush1.msra.mxu0 0.0
    %1347 = vmatprep.subr.mxu0 0.0
    %1348 = vmatpush1.msra.mxu0 0.0
    %1349 = vmatprep.subr.mxu0 0.0
    %1350 = vmatpush1.msra.mxu0 0.0
    %1351 = vmatprep.subr.mxu0 0.0
    %1352 = vmatpush1.msra.mxu0 0.0
    %1353 = vmatprep.subr.mxu0 0.0
    %1354 = vmatpush1.msra.mxu0 0.0
    %1355 = vmatprep.subr.mxu0 0.0
    %1356 = vmatpush1.msra.mxu0 0.0
    %1357 = vmatprep.subr.mxu0 0.0
    %1358 = vmatpush1.msra.mxu0 0.0
    %1359 = vmatprep.subr.mxu0 0.0
    %1360 = vmatpush1.msra.mxu0 0.0
    %1361 = vmatprep.subr.mxu0 0.0
    %1362 = vmatpush1.msra.mxu0 0.0
    %1363 = vmatprep.subr.mxu0 0.0
    %1364 = vmatpush1.msra.mxu0 0.0
    %1365 = vmatprep.subr.mxu0 0.0
    %1366 = vmatpush1.msra.mxu0 0.0
    %1367 = vmatprep.subr.mxu0 0.0
    %1368 = vmatpush1.msra.mxu0 0.0
    %1369 = vmatprep.subr.mxu0 0.0
    %1370 = vmatpush1.msra.mxu0 0.0
    %1371 = vmatprep.subr.mxu0 0.0
    %1372 = vmatpush1.msra.mxu0 0.0
    %1373 = vmatprep.subr.mxu0 0.0
    %1374 = vmatpush1.msra.mxu0 0.0
    %1375 = vmatprep.subr.mxu0 0.0
    %1376 = vmatpush1.msra.mxu0 0.0
    %1377 = vmatprep.subr.mxu0 0.0
    %1378 = vmatpush1.msra.mxu0 0.0
    %1379 = vmatprep.subr.mxu0 0.0
    %1380 = vmatpush1.msra.mxu0 0.0
    %1381 = vmatprep.subr.mxu0 0.0
    %1382 = vmatpush1.msra.mxu0 0.0
    %1383 = vmatprep.subr.mxu0 0.0
    %1384 = vmatpush1.msra.mxu0 0.0
    %1385 = vmatprep.subr.mxu0 0.0
    %1386 = vmatpush1.msra.mxu0 0.0
    %1387 = vmatprep.subr.mxu0 0.0
    %1388 = vmatpush1.msra.mxu0 0.0
    %1389 = vmatprep.subr.mxu0 0.0
    %1390 = vmatpush1.msra.mxu0 0.0
    %1391 = vmatprep.subr.mxu0 0.0
    %1392 = vmatpush1.msra.mxu0 0.0
    %1393 = vmatprep.subr.mxu0 0.0
    %1394 = vmatpush1.msra.mxu0 0.0
    %1395 = vmatprep.subr.mxu0 0.0
    %1396 = vmatpush1.msra.mxu0 0.0
    %1397 = vmatprep.subr.mxu0 0.0
    %1398 = vmatpush1.msra.mxu0 0.0
    %1399 = vmatprep.mubr.f32.mxu0 0.0
    %1400 = vmatmul.mubr.f32.gmra.mrb[0].mxu0 %v1333
    %v1401 = vpop.f32.mrb[0].mxu0
    %v1402 = vadd.f32 0.0, %v1401
    %v1403 = vpop.f32.mrb[0].mxu0
    %1404 = vdwg.mxu0
    %v1406 = vrot.slane %v1402, 2
    %v1408 = vadd.f32 %v461, %v1406
    %v1409 = vxor.u32 %v1408, 2147483648
    %v1410 = vmul.f32 %v1409, 1.442695
    %v1411 = vpow.pop %v1410
    %v1412 = vadd.f32 %v1411, 1.0
    %v1413 = vrcp.pop %v1412
    %v1414 = vmul.f32 1.0, %v1413
    %v1415 = vadd.f32 %v1402, %v660
    %v1417 = vrot.slane %v1415, 2
    %1418 = vrot.lane.b32.xlu0 %v1417, 64
    %v1419 = vpop.permute.xlu0 %1418
    %v1421 = vmul.f32 %v1414, %v1419
    %1423 = vrot.lane.b32.xlu0 %v1421, 64
    %v1424 = vpop.permute.xlu0 %1423
    %v1426 = vadd.f32 %v461, %v1424
    %v1427 = vtanh.pop %v1426
    %v1428 = vsub.f32 1.0, %v1414
    %1430 = vrot.lane.b32.xlu0 %v1427, 96
    %v1431 = vpop.permute.xlu0 %1430
    %v1433 = vmul.f32 %v1428, %v1431
    %v1434 = vrot.slane %v1328, 6
    %v1436 = vmul.f32 %v1414, %v1434
    %v1437 = vadd.f32 %v1433, %v1436
    %v1439 = vrot.slane %v1437, 6
    %1440 = vrot.lane.b32.xlu0 %v1439, 96
    %v1441 = vpop.permute.xlu0 %1440
    %v1442 = vsel %vm157, %v1441, 0
    %1444 = vmatprep.subr.mxu0 0.0
    %1445 = vmatpush1.msra.mxu0 %v563
    %1446 = vmatprep.subr.mxu0 0.0
    %1447 = vmatpush1.msra.mxu0 %v564
    %1448 = vmatprep.subr.mxu0 0.0
    %1449 = vmatpush1.msra.mxu0 %v565
    %1450 = vmatprep.subr.mxu0 0.0
    %1451 = vmatpush1.msra.mxu0 %v566
    %1452 = vmatprep.subr.mxu0 0.0
    %1453 = vmatpush1.msra.mxu0 0.0
    %1454 = vmatprep.subr.mxu0 0.0
    %1455 = vmatpush1.msra.mxu0 0.0
    %1456 = vmatprep.subr.mxu0 0.0
    %1457 = vmatpush1.msra.mxu0 0.0
    %1458 = vmatprep.subr.mxu0 0.0
    %1459 = vmatpush1.msra.mxu0 0.0
    %1460 = vmatprep.subr.mxu0 0.0
    %1461 = vmatpush1.msra.mxu0 0.0
    %1462 = vmatprep.subr.mxu0 0.0
    %1463 = vmatpush1.msra.mxu0 0.0
    %1464 = vmatprep.subr.mxu0 0.0
    %1465 = vmatpush1.msra.mxu0 0.0
    %1466 = vmatprep.subr.mxu0 0.0
    %1467 = vmatpush1.msra.mxu0 0.0
    %1468 = vmatprep.subr.mxu0 0.0
    %1469 = vmatpush1.msra.mxu0 0.0
    %1470 = vmatprep.subr.mxu0 0.0
    %1471 = vmatpush1.msra.mxu0 0.0
    %1472 = vmatprep.subr.mxu0 0.0
    %1473 = vmatpush1.msra.mxu0 0.0
    %1474 = vmatprep.subr.mxu0 0.0
    %1475 = vmatpush1.msra.mxu0 0.0
    %1476 = vmatprep.subr.mxu0 0.0
    %1477 = vmatpush1.msra.mxu0 0.0
    %1478 = vmatprep.subr.mxu0 0.0
    %1479 = vmatpush1.msra.mxu0 0.0
    %1480 = vmatprep.subr.mxu0 0.0
    %1481 = vmatpush1.msra.mxu0 0.0
    %1482 = vmatprep.subr.mxu0 0.0
    %1483 = vmatpush1.msra.mxu0 0.0
    %1484 = vmatprep.subr.mxu0 0.0
    %1485 = vmatpush1.msra.mxu0 0.0
    %1486 = vmatprep.subr.mxu0 0.0
    %1487 = vmatpush1.msra.mxu0 0.0
    %1488 = vmatprep.subr.mxu0 0.0
    %1489 = vmatpush1.msra.mxu0 0.0
    %1490 = vmatprep.subr.mxu0 0.0
    %1491 = vmatpush1.msra.mxu0 0.0
    %1492 = vmatprep.subr.mxu0 0.0
    %1493 = vmatpush1.msra.mxu0 0.0
    %1494 = vmatprep.subr.mxu0 0.0
    %1495 = vmatpush1.msra.mxu0 0.0
    %1496 = vmatprep.subr.mxu0 0.0
    %1497 = vmatpush1.msra.mxu0 0.0
    %1498 = vmatprep.subr.mxu0 0.0
    %1499 = vmatpush1.msra.mxu0 0.0
    %1500 = vmatprep.subr.mxu0 0.0
    %1501 = vmatpush1.msra.mxu0 0.0
    %1502 = vmatprep.subr.mxu0 0.0
    %1503 = vmatpush1.msra.mxu0 0.0
    %1504 = vmatprep.subr.mxu0 0.0
    %1505 = vmatpush1.msra.mxu0 0.0
    %1506 = vmatprep.subr.mxu0 0.0
    %1507 = vmatpush1.msra.mxu0 0.0
    %1508 = vmatprep.mubr.f32.mxu0 0.0
    %1509 = vmatmul.mubr.f32.gmra.mrb[0].mxu0 %v1442
    %v1510 = vpop.f32.mrb[0].mxu0
    %v1511 = vadd.f32 0.0, %v1510
    %v1512 = vpop.f32.mrb[0].mxu0
    %1513 = vdwg.mxu0
    %v1514 = vadd.f32 %v551, %v1511
    %v1515 = vxor.u32 %v1514, 2147483648
    %v1516 = vmul.f32 %v1515, 1.442695
    %v1517 = vpow.pop %v1516
    %v1518 = vadd.f32 %v1517, 1.0
    %v1519 = vrcp.pop %v1518
    %v1520 = vmul.f32 1.0, %v1519
    %1521 = vrot.lane.b32.xlu0 %v578, 64
    %v1522 = vpop.permute.xlu0 %1521
    %v1524 = vadd.f32 %v1511, %v1522
    %1526 = vrot.lane.b32.xlu0 %v1524, 64
    %v1527 = vpop.permute.xlu0 %1526
    %v1529 = vmul.f32 %v1520, %v1527
    %1531 = vrot.lane.b32.xlu0 %v1529, 64
    %v1532 = vpop.permute.xlu0 %1531
    %v1534 = vadd.f32 %v551, %v1532
    %v1535 = vtanh.pop %v1534
    %v1536 = vsub.f32 1.0, %v1520
    %1538 = vrot.lane.b32.xlu0 %v1535, 96
    %v1539 = vpop.permute.xlu0 %1538
    %v1541 = vmul.f32 %v1536, %v1539
    %v1543 = vmul.f32 %v1520, %v1439
    %v1544 = vadd.f32 %v1541, %v1543
    %1546 = vrot.lane.b32.xlu0 %v1544, 96
    %v1547 = vpop.permute.xlu0 %1546
    %vm1549 = vcmask 254976
    %1550 = vst.msk [vmem:[#allocation2] sm:$0x3] %vm1549, %v1547
    %v1551 = vsel %vm157, %v1547, 0
    %1553 = vmatprep.subr.mxu0 0.0
    %1554 = vmatpush1.msra.mxu0 %v563
    %1555 = vmatprep.subr.mxu0 0.0
    %1556 = vmatpush1.msra.mxu0 %v564
    %1557 = vmatprep.subr.mxu0 0.0
    %1558 = vmatpush1.msra.mxu0 %v565
    %1559 = vmatprep.subr.mxu0 0.0
    %1560 = vmatpush1.msra.mxu0 %v566
    %1561 = vmatprep.subr.mxu0 0.0
    %1562 = vmatpush1.msra.mxu0 0.0
    %1563 = vmatprep.subr.mxu0 0.0
    %1564 = vmatpush1.msra.mxu0 0.0
    %1565 = vmatprep.subr.mxu0 0.0
    %1566 = vmatpush1.msra.mxu0 0.0
    %1567 = vmatprep.subr.mxu0 0.0
    %1568 = vmatpush1.msra.mxu0 0.0
    %1569 = vmatprep.subr.mxu0 0.0
    %1570 = vmatpush1.msra.mxu0 0.0
    %1571 = vmatprep.subr.mxu0 0.0
    %1572 = vmatpush1.msra.mxu0 0.0
    %1573 = vmatprep.subr.mxu0 0.0
    %1574 = vmatpush1.msra.mxu0 0.0
    %1575 = vmatprep.subr.mxu0 0.0
    %1576 = vmatpush1.msra.mxu0 0.0
    %1577 = vmatprep.subr.mxu0 0.0
    %1578 = vmatpush1.msra.mxu0 0.0
    %1579 = vmatprep.subr.mxu0 0.0
    %1580 = vmatpush1.msra.mxu0 0.0
    %1581 = vmatprep.subr.mxu0 0.0
    %1582 = vmatpush1.msra.mxu0 0.0
    %1583 = vmatprep.subr.mxu0 0.0
    %1584 = vmatpush1.msra.mxu0 0.0
    %1585 = vmatprep.subr.mxu0 0.0
    %1586 = vmatpush1.msra.mxu0 0.0
    %1587 = vmatprep.subr.mxu0 0.0
    %1588 = vmatpush1.msra.mxu0 0.0
    %1589 = vmatprep.subr.mxu0 0.0
    %1590 = vmatpush1.msra.mxu0 0.0
    %1591 = vmatprep.subr.mxu0 0.0
    %1592 = vmatpush1.msra.mxu0 0.0
    %1593 = vmatprep.subr.mxu0 0.0
    %1594 = vmatpush1.msra.mxu0 0.0
    %1595 = vmatprep.subr.mxu0 0.0
    %1596 = vmatpush1.msra.mxu0 0.0
    %1597 = vmatprep.subr.mxu0 0.0
    %1598 = vmatpush1.msra.mxu0 0.0
    %1599 = vmatprep.subr.mxu0 0.0
    %1600 = vmatpush1.msra.mxu0 0.0
    %1601 = vmatprep.subr.mxu0 0.0
    %1602 = vmatpush1.msra.mxu0 0.0
    %1603 = vmatprep.subr.mxu0 0.0
    %1604 = vmatpush1.msra.mxu0 0.0
    %1605 = vmatprep.subr.mxu0 0.0
    %1606 = vmatpush1.msra.mxu0 0.0
    %1607 = vmatprep.subr.mxu0 0.0
    %1608 = vmatpush1.msra.mxu0 0.0
    %1609 = vmatprep.subr.mxu0 0.0
    %1610 = vmatpush1.msra.mxu0 0.0
    %1611 = vmatprep.subr.mxu0 0.0
    %1612 = vmatpush1.msra.mxu0 0.0
    %1613 = vmatprep.subr.mxu0 0.0
    %1614 = vmatpush1.msra.mxu0 0.0
    %1615 = vmatprep.subr.mxu0 0.0
    %1616 = vmatpush1.msra.mxu0 0.0
    %1617 = vmatprep.mubr.f32.mxu0 0.0
    %1618 = vmatmul.mubr.f32.gmra.mrb[0].mxu0 %v1551
    %v1619 = vpop.f32.mrb[0].mxu0
    %v1620 = vadd.f32 0.0, %v1619
    %v1621 = vpop.f32.mrb[0].mxu0
    %1622 = vdwg.mxu0
    %v1624 = vrot.slane %v1620, 6
    %v1626 = vadd.f32 %v551, %v1624
    %v1627 = vxor.u32 %v1626, 2147483648
    %v1628 = vmul.f32 %v1627, 1.442695
    %v1629 = vpow.pop %v1628
    %v1630 = vadd.f32 %v1629, 1.0
    %v1631 = vrcp.pop %v1630
    %v1632 = vmul.f32 1.0, %v1631
    %v1633 = vadd.f32 %v1620, %v1522
    %v1635 = vrot.slane %v1633, 6
    %1636 = vrot.lane.b32.xlu0 %v1635, 64
    %v1637 = vpop.permute.xlu0 %1636
    %v1639 = vmul.f32 %v1632, %v1637
    %1641 = vrot.lane.b32.xlu0 %v1639, 64
    %v1642 = vpop.permute.xlu0 %1641
    %v1644 = vadd.f32 %v551, %v1642
    %v1645 = vtanh.pop %v1644
    %v1646 = vsub.f32 1.0, %v1632
    %1648 = vrot.lane.b32.xlu0 %v1645, 96
    %v1649 = vpop.permute.xlu0 %1648
    %v1651 = vmul.f32 %v1646, %v1649
    %v1652 = vrot.slane %v1544, 6
    %v1654 = vmul.f32 %v1632, %v1652
    %v1655 = vadd.f32 %v1651, %v1654
    %1657 = vrot.lane.b32.xlu0 %v1655, 96
    %v1658 = vpop.permute.xlu0 %1657
    %vm1660 = vcmask 257026
    %1661 = vst.msk [vmem:[#allocation2] sm:$0xc] %vm1660, %v1658
    %v1662 = vrot.slane %v1655, 2
    %1663 = vrot.lane.b32.xlu0 %v1662, 96
    %v1664 = vpop.permute.xlu0 %1663
    %v1665 = vsel %vm157, %v1664, 0
    %1667 = vmatprep.subr.mxu0 0.0
    %1668 = vmatpush1.msra.mxu0 %v563
    %1669 = vmatprep.subr.mxu0 0.0
    %1670 = vmatpush1.msra.mxu0 %v564
    %1671 = vmatprep.subr.mxu0 0.0
    %1672 = vmatpush1.msra.mxu0 %v565
    %1673 = vmatprep.subr.mxu0 0.0
    %1674 = vmatpush1.msra.mxu0 %v566
    %1675 = vmatprep.subr.mxu0 0.0
    %1676 = vmatpush1.msra.mxu0 0.0
    %1677 = vmatprep.subr.mxu0 0.0
    %1678 = vmatpush1.msra.mxu0 0.0
    %1679 = vmatprep.subr.mxu0 0.0
    %1680 = vmatpush1.msra.mxu0 0.0
    %1681 = vmatprep.subr.mxu0 0.0
    %1682 = vmatpush1.msra.mxu0 0.0
    %1683 = vmatprep.subr.mxu0 0.0
    %1684 = vmatpush1.msra.mxu0 0.0
    %1685 = vmatprep.subr.mxu0 0.0
    %1686 = vmatpush1.msra.mxu0 0.0
    %1687 = vmatprep.subr.mxu0 0.0
    %1688 = vmatpush1.msra.mxu0 0.0
    %1689 = vmatprep.subr.mxu0 0.0
    %1690 = vmatpush1.msra.mxu0 0.0
    %1691 = vmatprep.subr.mxu0 0.0
    %1692 = vmatpush1.msra.mxu0 0.0
    %1693 = vmatprep.subr.mxu0 0.0
    %1694 = vmatpush1.msra.mxu0 0.0
    %1695 = vmatprep.subr.mxu0 0.0
    %1696 = vmatpush1.msra.mxu0 0.0
    %1697 = vmatprep.subr.mxu0 0.0
    %1698 = vmatpush1.msra.mxu0 0.0
    %1699 = vmatprep.subr.mxu0 0.0
    %1700 = vmatpush1.msra.mxu0 0.0
    %1701 = vmatprep.subr.mxu0 0.0
    %1702 = vmatpush1.msra.mxu0 0.0
    %1703 = vmatprep.subr.mxu0 0.0
    %1704 = vmatpush1.msra.mxu0 0.0
    %1705 = vmatprep.subr.mxu0 0.0
    %1706 = vmatpush1.msra.mxu0 0.0
    %1707 = vmatprep.subr.mxu0 0.0
    %1708 = vmatpush1.msra.mxu0 0.0
    %1709 = vmatprep.subr.mxu0 0.0
    %1710 = vmatpush1.msra.mxu0 0.0
    %1711 = vmatprep.subr.mxu0 0.0
    %1712 = vmatpush1.msra.mxu0 0.0
    %1713 = vmatprep.subr.mxu0 0.0
    %1714 = vmatpush1.msra.mxu0 0.0
    %1715 = vmatprep.subr.mxu0 0.0
    %1716 = vmatpush1.msra.mxu0 0.0
    %1717 = vmatprep.subr.mxu0 0.0
    %1718 = vmatpush1.msra.mxu0 0.0
    %1719 = vmatprep.subr.mxu0 0.0
    %1720 = vmatpush1.msra.mxu0 0.0
    %1721 = vmatprep.subr.mxu0 0.0
    %1722 = vmatpush1.msra.mxu0 0.0
    %1723 = vmatprep.subr.mxu0 0.0
    %1724 = vmatpush1.msra.mxu0 0.0
    %1725 = vmatprep.subr.mxu0 0.0
    %1726 = vmatpush1.msra.mxu0 0.0
    %1727 = vmatprep.subr.mxu0 0.0
    %1728 = vmatpush1.msra.mxu0 0.0
    %1729 = vmatprep.subr.mxu0 0.0
    %1730 = vmatpush1.msra.mxu0 0.0
    %1731 = vmatprep.mubr.f32.mxu0 0.0
    %1732 = vmatmul.mubr.f32.gmra.mrb[0].mxu0 %v1665
    %v1733 = vpop.f32.mrb[0].mxu0
    %v1734 = vadd.f32 0.0, %v1733
    %v1735 = vpop.f32.mrb[0].mxu0
    %1736 = vdwg.mxu0
    %v1738 = vrot.slane %v1734, 4
    %v1740 = vadd.f32 %v551, %v1738
    %v1741 = vxor.u32 %v1740, 2147483648
    %v1742 = vmul.f32 %v1741, 1.442695
    %v1743 = vpow.pop %v1742
    %v1744 = vadd.f32 %v1743, 1.0
    %v1745 = vrcp.pop %v1744
    %v1746 = vmul.f32 1.0, %v1745
    %v1747 = vadd.f32 %v1734, %v1522
    %v1749 = vrot.slane %v1747, 4
    %1750 = vrot.lane.b32.xlu0 %v1749, 64
    %v1751 = vpop.permute.xlu0 %1750
    %v1753 = vmul.f32 %v1746, %v1751
    %1755 = vrot.lane.b32.xlu0 %v1753, 64
    %v1756 = vpop.permute.xlu0 %1755
    %v1758 = vadd.f32 %v551, %v1756
    %v1759 = vtanh.pop %v1758
    %v1760 = vsub.f32 1.0, %v1746
    %1762 = vrot.lane.b32.xlu0 %v1759, 96
    %v1763 = vpop.permute.xlu0 %1762
    %v1765 = vmul.f32 %v1760, %v1763
    %v1766 = vrot.slane %v1655, 6
    %v1768 = vmul.f32 %v1746, %v1766
    %v1769 = vadd.f32 %v1765, %v1768
    %1771 = vrot.lane.b32.xlu0 %v1769, 96
    %v1772 = vpop.permute.xlu0 %1771
    %vm1774 = vcmask 259076
    %1775 = vst.msk [vmem:[#allocation2] sm:$0x30] %vm1774, %v1772
    %v1776 = vrot.slane %v1769, 4
    %1777 = vrot.lane.b32.xlu0 %v1776, 96
    %v1778 = vpop.permute.xlu0 %1777
    %v1779 = vsel %vm157, %v1778, 0
    %1781 = vmatprep.subr.mxu0 0.0
    %1782 = vmatpush1.msra.mxu0 %v563
    %1783 = vmatprep.subr.mxu0 0.0
    %1784 = vmatpush1.msra.mxu0 %v564
    %1785 = vmatprep.subr.mxu0 0.0
    %1786 = vmatpush1.msra.mxu0 %v565
    %1787 = vmatprep.subr.mxu0 0.0
    %1788 = vmatpush1.msra.mxu0 %v566
    %1789 = vmatprep.subr.mxu0 0.0
    %1790 = vmatpush1.msra.mxu0 0.0
    %1791 = vmatprep.subr.mxu0 0.0
    %1792 = vmatpush1.msra.mxu0 0.0
    %1793 = vmatprep.subr.mxu0 0.0
    %1794 = vmatpush1.msra.mxu0 0.0
    %1795 = vmatprep.subr.mxu0 0.0
    %1796 = vmatpush1.msra.mxu0 0.0
    %1797 = vmatprep.subr.mxu0 0.0
    %1798 = vmatpush1.msra.mxu0 0.0
    %1799 = vmatprep.subr.mxu0 0.0
    %1800 = vmatpush1.msra.mxu0 0.0
    %1801 = vmatprep.subr.mxu0 0.0
    %1802 = vmatpush1.msra.mxu0 0.0
    %1803 = vmatprep.subr.mxu0 0.0
    %1804 = vmatpush1.msra.mxu0 0.0
    %1805 = vmatprep.subr.mxu0 0.0
    %1806 = vmatpush1.msra.mxu0 0.0
    %1807 = vmatprep.subr.mxu0 0.0
    %1808 = vmatpush1.msra.mxu0 0.0
    %1809 = vmatprep.subr.mxu0 0.0
    %1810 = vmatpush1.msra.mxu0 0.0
    %1811 = vmatprep.subr.mxu0 0.0
    %1812 = vmatpush1.msra.mxu0 0.0
    %1813 = vmatprep.subr.mxu0 0.0
    %1814 = vmatpush1.msra.mxu0 0.0
    %1815 = vmatprep.subr.mxu0 0.0
    %1816 = vmatpush1.msra.mxu0 0.0
    %1817 = vmatprep.subr.mxu0 0.0
    %1818 = vmatpush1.msra.mxu0 0.0
    %1819 = vmatprep.subr.mxu0 0.0
    %1820 = vmatpush1.msra.mxu0 0.0
    %1821 = vmatprep.subr.mxu0 0.0
    %1822 = vmatpush1.msra.mxu0 0.0
    %1823 = vmatprep.subr.mxu0 0.0
    %1824 = vmatpush1.msra.mxu0 0.0
    %1825 = vmatprep.subr.mxu0 0.0
    %1826 = vmatpush1.msra.mxu0 0.0
    %1827 = vmatprep.subr.mxu0 0.0
    %1828 = vmatpush1.msra.mxu0 0.0
    %1829 = vmatprep.subr.mxu0 0.0
    %1830 = vmatpush1.msra.mxu0 0.0
    %1831 = vmatprep.subr.mxu0 0.0
    %1832 = vmatpush1.msra.mxu0 0.0
    %1833 = vmatprep.subr.mxu0 0.0
    %1834 = vmatpush1.msra.mxu0 0.0
    %1835 = vmatprep.subr.mxu0 0.0
    %1836 = vmatpush1.msra.mxu0 0.0
    %1837 = vmatprep.subr.mxu0 0.0
    %1838 = vmatpush1.msra.mxu0 0.0
    %1839 = vmatprep.subr.mxu0 0.0
    %1840 = vmatpush1.msra.mxu0 0.0
    %1841 = vmatprep.subr.mxu0 0.0
    %1842 = vmatpush1.msra.mxu0 0.0
    %1843 = vmatprep.subr.mxu0 0.0
    %1844 = vmatpush1.msra.mxu0 0.0
    %1845 = vmatprep.mubr.f32.mxu0 0.0
    %1846 = vmatmul.mubr.f32.gmra.mrb[0].mxu0 %v1779
    %v1847 = vpop.f32.mrb[0].mxu0
    %v1848 = vadd.f32 0.0, %v1847
    %v1849 = vpop.f32.mrb[0].mxu0
    %1850 = vdwg.mxu0
    %v1852 = vrot.slane %v1848, 2
    %v1854 = vadd.f32 %v551, %v1852
    %v1855 = vxor.u32 %v1854, 2147483648
    %v1856 = vmul.f32 %v1855, 1.442695
    %v1857 = vpow.pop %v1856
    %v1858 = vadd.f32 %v1857, 1.0
    %v1859 = vrcp.pop %v1858
    %v1860 = vmul.f32 1.0, %v1859
    %v1861 = vadd.f32 %v1848, %v1522
    %v1863 = vrot.slane %v1861, 2
    %1864 = vrot.lane.b32.xlu0 %v1863, 64
    %v1865 = vpop.permute.xlu0 %1864
    %v1867 = vmul.f32 %v1860, %v1865
    %1869 = vrot.lane.b32.xlu0 %v1867, 64
    %v1870 = vpop.permute.xlu0 %1869
    %v1872 = vadd.f32 %v551, %v1870
    %v1873 = vtanh.pop %v1872
    %v1874 = vsub.f32 1.0, %v1860
    %1876 = vrot.lane.b32.xlu0 %v1873, 96
    %v1877 = vpop.permute.xlu0 %1876
    %v1879 = vmul.f32 %v1874, %v1877
    %v1880 = vrot.slane %v1769, 6
    %v1882 = vmul.f32 %v1860, %v1880
    %v1883 = vadd.f32 %v1879, %v1882
    %1885 = vrot.lane.b32.xlu0 %v1883, 96
    %v1886 = vpop.permute.xlu0 %1885
    %vm1888 = vcmask 261126
    %1889 = vst.msk [vmem:[#allocation2] sm:$0xc0] %vm1888, %v1886
    %v1890 = vrot.slane %v1883, 6
    %1891 = vrot.lane.b32.xlu0 %v1890, 96
    %v1892 = vpop.permute.xlu0 %1891
    %v1893 = vsel %vm157, %v1892, 0
    %1895 = vmatprep.subr.mxu0 0.0
    %1896 = vmatpush1.msra.mxu0 %v563
    %1897 = vmatprep.subr.mxu0 0.0
    %1898 = vmatpush1.msra.mxu0 %v564
    %1899 = vmatprep.subr.mxu0 0.0
    %1900 = vmatpush1.msra.mxu0 %v565
    %1901 = vmatprep.subr.mxu0 0.0
    %1902 = vmatpush1.msra.mxu0 %v566
    %1903 = vmatprep.subr.mxu0 0.0
    %1904 = vmatpush1.msra.mxu0 0.0
    %1905 = vmatprep.subr.mxu0 0.0
    %1906 = vmatpush1.msra.mxu0 0.0
    %1907 = vmatprep.subr.mxu0 0.0
    %1908 = vmatpush1.msra.mxu0 0.0
    %1909 = vmatprep.subr.mxu0 0.0
    %1910 = vmatpush1.msra.mxu0 0.0
    %1911 = vmatprep.subr.mxu0 0.0
    %1912 = vmatpush1.msra.mxu0 0.0
    %1913 = vmatprep.subr.mxu0 0.0
    %1914 = vmatpush1.msra.mxu0 0.0
    %1915 = vmatprep.subr.mxu0 0.0
    %1916 = vmatpush1.msra.mxu0 0.0
    %1917 = vmatprep.subr.mxu0 0.0
    %1918 = vmatpush1.msra.mxu0 0.0
    %1919 = vmatprep.subr.mxu0 0.0
    %1920 = vmatpush1.msra.mxu0 0.0
    %1921 = vmatprep.subr.mxu0 0.0
    %1922 = vmatpush1.msra.mxu0 0.0
    %1923 = vmatprep.subr.mxu0 0.0
    %1924 = vmatpush1.msra.mxu0 0.0
    %1925 = vmatprep.subr.mxu0 0.0
    %1926 = vmatpush1.msra.mxu0 0.0
    %1927 = vmatprep.subr.mxu0 0.0
    %1928 = vmatpush1.msra.mxu0 0.0
    %1929 = vmatprep.subr.mxu0 0.0
    %1930 = vmatpush1.msra.mxu0 0.0
    %1931 = vmatprep.subr.mxu0 0.0
    %1932 = vmatpush1.msra.mxu0 0.0
    %1933 = vmatprep.subr.mxu0 0.0
    %1934 = vmatpush1.msra.mxu0 0.0
    %1935 = vmatprep.subr.mxu0 0.0
    %1936 = vmatpush1.msra.mxu0 0.0
    %1937 = vmatprep.subr.mxu0 0.0
    %1938 = vmatpush1.msra.mxu0 0.0
    %1939 = vmatprep.subr.mxu0 0.0
    %1940 = vmatpush1.msra.mxu0 0.0
    %1941 = vmatprep.subr.mxu0 0.0
    %1942 = vmatpush1.msra.mxu0 0.0
    %1943 = vmatprep.subr.mxu0 0.0
    %1944 = vmatpush1.msra.mxu0 0.0
    %1945 = vmatprep.subr.mxu0 0.0
    %1946 = vmatpush1.msra.mxu0 0.0
    %1947 = vmatprep.subr.mxu0 0.0
    %1948 = vmatpush1.msra.mxu0 0.0
    %1949 = vmatprep.subr.mxu0 0.0
    %1950 = vmatpush1.msra.mxu0 0.0
    %1951 = vmatprep.subr.mxu0 0.0
    %1952 = vmatpush1.msra.mxu0 0.0
    %1953 = vmatprep.subr.mxu0 0.0
    %1954 = vmatpush1.msra.mxu0 0.0
    %1955 = vmatprep.subr.mxu0 0.0
    %1956 = vmatpush1.msra.mxu0 0.0
    %1957 = vmatprep.subr.mxu0 0.0
    %1958 = vmatpush1.msra.mxu0 0.0
    %1959 = vmatprep.mubr.f32.mxu0 0.0
    %1960 = vmatmul.mubr.f32.gmra.mrb[0].mxu0 %v1893
    %v1961 = vpop.f32.mrb[0].mxu0
    %v1962 = vadd.f32 0.0, %v1961
    %v1963 = vpop.f32.mrb[0].mxu0
    %1964 = vdwg.mxu0
    %v1965 = vadd.f32 %v556, %v1962
    %v1966 = vxor.u32 %v1965, 2147483648
    %v1967 = vmul.f32 %v1966, 1.442695
    %v1968 = vpow.pop %v1967
    %v1969 = vadd.f32 %v1968, 1.0
    %v1970 = vrcp.pop %v1969
    %v1971 = vmul.f32 1.0, %v1970
    %v1972 = vadd.f32 %v1962, %v1522
    %1974 = vrot.lane.b32.xlu0 %v1972, 64
    %v1975 = vpop.permute.xlu0 %1974
    %v1977 = vmul.f32 %v1971, %v1975
    %1979 = vrot.lane.b32.xlu0 %v1977, 64
    %v1980 = vpop.permute.xlu0 %1979
    %v1982 = vadd.f32 %v556, %v1980
    %v1983 = vtanh.pop %v1982
    %v1984 = vsub.f32 1.0, %v1971
    %1986 = vrot.lane.b32.xlu0 %v1983, 96
    %v1987 = vpop.permute.xlu0 %1986
    %v1989 = vmul.f32 %v1984, %v1987
    %v1991 = vmul.f32 %v1971, %v1890
    %v1992 = vadd.f32 %v1989, %v1991
    %1994 = vrot.lane.b32.xlu0 %v1992, 96
    %v1995 = vpop.permute.xlu0 %1994
    %1997 = vst.msk [vmem:[#allocation2 + $0x8] sm:$0x3] %vm1549, %v1995
    %v1998 = vsel %vm157, %v1995, 0
    %2000 = vmatprep.subr.mxu0 0.0
    %2001 = vmatpush1.msra.mxu0 %v563
    %2002 = vmatprep.subr.mxu0 0.0
    %2003 = vmatpush1.msra.mxu0 %v564
    %2004 = vmatprep.subr.mxu0 0.0
    %2005 = vmatpush1.msra.mxu0 %v565
    %2006 = vmatprep.subr.mxu0 0.0
    %2007 = vmatpush1.msra.mxu0 %v566
    %2008 = vmatprep.subr.mxu0 0.0
    %2009 = vmatpush1.msra.mxu0 0.0
    %2010 = vmatprep.subr.mxu0 0.0
    %2011 = vmatpush1.msra.mxu0 0.0
    %2012 = vmatprep.subr.mxu0 0.0
    %2013 = vmatpush1.msra.mxu0 0.0
    %2014 = vmatprep.subr.mxu0 0.0
    %2015 = vmatpush1.msra.mxu0 0.0
    %2016 = vmatprep.subr.mxu0 0.0
    %2017 = vmatpush1.msra.mxu0 0.0
    %2018 = vmatprep.subr.mxu0 0.0
    %2019 = vmatpush1.msra.mxu0 0.0
    %2020 = vmatprep.subr.mxu0 0.0
    %2021 = vmatpush1.msra.mxu0 0.0
    %2022 = vmatprep.subr.mxu0 0.0
    %2023 = vmatpush1.msra.mxu0 0.0
    %2024 = vmatprep.subr.mxu0 0.0
    %2025 = vmatpush1.msra.mxu0 0.0
    %2026 = vmatprep.subr.mxu0 0.0
    %2027 = vmatpush1.msra.mxu0 0.0
    %2028 = vmatprep.subr.mxu0 0.0
    %2029 = vmatpush1.msra.mxu0 0.0
    %2030 = vmatprep.subr.mxu0 0.0
    %2031 = vmatpush1.msra.mxu0 0.0
    %2032 = vmatprep.subr.mxu0 0.0
    %2033 = vmatpush1.msra.mxu0 0.0
    %2034 = vmatprep.subr.mxu0 0.0
    %2035 = vmatpush1.msra.mxu0 0.0
    %2036 = vmatprep.subr.mxu0 0.0
    %2037 = vmatpush1.msra.mxu0 0.0
    %2038 = vmatprep.subr.mxu0 0.0
    %2039 = vmatpush1.msra.mxu0 0.0
    %2040 = vmatprep.subr.mxu0 0.0
    %2041 = vmatpush1.msra.mxu0 0.0
    %2042 = vmatprep.subr.mxu0 0.0
    %2043 = vmatpush1.msra.mxu0 0.0
    %2044 = vmatprep.subr.mxu0 0.0
    %2045 = vmatpush1.msra.mxu0 0.0
    %2046 = vmatprep.subr.mxu0 0.0
    %2047 = vmatpush1.msra.mxu0 0.0
    %2048 = vmatprep.subr.mxu0 0.0
    %2049 = vmatpush1.msra.mxu0 0.0
    %2050 = vmatprep.subr.mxu0 0.0
    %2051 = vmatpush1.msra.mxu0 0.0
    %2052 = vmatprep.subr.mxu0 0.0
    %2053 = vmatpush1.msra.mxu0 0.0
    %2054 = vmatprep.subr.mxu0 0.0
    %2055 = vmatpush1.msra.mxu0 0.0
    %2056 = vmatprep.subr.mxu0 0.0
    %2057 = vmatpush1.msra.mxu0 0.0
    %2058 = vmatprep.subr.mxu0 0.0
    %2059 = vmatpush1.msra.mxu0 0.0
    %2060 = vmatprep.subr.mxu0 0.0
    %2061 = vmatpush1.msra.mxu0 0.0
    %2062 = vmatprep.subr.mxu0 0.0
    %2063 = vmatpush1.msra.mxu0 0.0
    %2064 = vmatprep.mubr.f32.mxu0 0.0
    %2065 = vmatmul.mubr.f32.gmra.mrb[0].mxu0 %v1998
    %v2066 = vpop.f32.mrb[0].mxu0
    %v2067 = vadd.f32 0.0, %v2066
    %v2068 = vpop.f32.mrb[0].mxu0
    %2069 = vdwg.mxu0
    %v2071 = vrot.slane %v2067, 6
    %v2073 = vadd.f32 %v556, %v2071
    %v2074 = vxor.u32 %v2073, 2147483648
    %v2075 = vmul.f32 %v2074, 1.442695
    %v2076 = vpow.pop %v2075
    %v2077 = vadd.f32 %v2076, 1.0
    %v2078 = vrcp.pop %v2077
    %v2079 = vmul.f32 1.0, %v2078
    %v2080 = vadd.f32 %v2067, %v1522
    %v2082 = vrot.slane %v2080, 6
    %2083 = vrot.lane.b32.xlu0 %v2082, 64
    %v2084 = vpop.permute.xlu0 %2083
    %v2086 = vmul.f32 %v2079, %v2084
    %2088 = vrot.lane.b32.xlu0 %v2086, 64
    %v2089 = vpop.permute.xlu0 %2088
    %v2091 = vadd.f32 %v556, %v2089
    %v2092 = vtanh.pop %v2091
    %v2093 = vsub.f32 1.0, %v2079
    %2095 = vrot.lane.b32.xlu0 %v2092, 96
    %v2096 = vpop.permute.xlu0 %2095
    %v2098 = vmul.f32 %v2093, %v2096
    %v2099 = vrot.slane %v1992, 6
    %v2101 = vmul.f32 %v2079, %v2099
    %v2102 = vadd.f32 %v2098, %v2101
    %2104 = vrot.lane.b32.xlu0 %v2102, 96
    %v2105 = vpop.permute.xlu0 %2104
    %2107 = vst.msk [vmem:[#allocation2 + $0x8] sm:$0xc] %vm1660, %v2105
    %v2108 = vrot.slane %v2102, 2
    %2109 = vrot.lane.b32.xlu0 %v2108, 96
    %v2110 = vpop.permute.xlu0 %2109
    %v2111 = vsel %vm157, %v2110, 0
    %2113 = vmatprep.subr.mxu0 0.0
    %2114 = vmatpush1.msra.mxu0 %v563
    %2115 = vmatprep.subr.mxu0 0.0
    %2116 = vmatpush1.msra.mxu0 %v564
    %2117 = vmatprep.subr.mxu0 0.0
    %2118 = vmatpush1.msra.mxu0 %v565
    %2119 = vmatprep.subr.mxu0 0.0
    %2120 = vmatpush1.msra.mxu0 %v566
    %2121 = vmatprep.subr.mxu0 0.0
    %2122 = vmatpush1.msra.mxu0 0.0
    %2123 = vmatprep.subr.mxu0 0.0
    %2124 = vmatpush1.msra.mxu0 0.0
    %2125 = vmatprep.subr.mxu0 0.0
    %2126 = vmatpush1.msra.mxu0 0.0
    %2127 = vmatprep.subr.mxu0 0.0
    %2128 = vmatpush1.msra.mxu0 0.0
    %2129 = vmatprep.subr.mxu0 0.0
    %2130 = vmatpush1.msra.mxu0 0.0
    %2131 = vmatprep.subr.mxu0 0.0
    %2132 = vmatpush1.msra.mxu0 0.0
    %2133 = vmatprep.subr.mxu0 0.0
    %2134 = vmatpush1.msra.mxu0 0.0
    %2135 = vmatprep.subr.mxu0 0.0
    %2136 = vmatpush1.msra.mxu0 0.0
    %2137 = vmatprep.subr.mxu0 0.0
    %2138 = vmatpush1.msra.mxu0 0.0
    %2139 = vmatprep.subr.mxu0 0.0
    %2140 = vmatpush1.msra.mxu0 0.0
    %2141 = vmatprep.subr.mxu0 0.0
    %2142 = vmatpush1.msra.mxu0 0.0
    %2143 = vmatprep.subr.mxu0 0.0
    %2144 = vmatpush1.msra.mxu0 0.0
    %2145 = vmatprep.subr.mxu0 0.0
    %2146 = vmatpush1.msra.mxu0 0.0
    %2147 = vmatprep.subr.mxu0 0.0
    %2148 = vmatpush1.msra.mxu0 0.0
    %2149 = vmatprep.subr.mxu0 0.0
    %2150 = vmatpush1.msra.mxu0 0.0
    %2151 = vmatprep.subr.mxu0 0.0
    %2152 = vmatpush1.msra.mxu0 0.0
    %2153 = vmatprep.subr.mxu0 0.0
    %2154 = vmatpush1.msra.mxu0 0.0
    %2155 = vmatprep.subr.mxu0 0.0
    %2156 = vmatpush1.msra.mxu0 0.0
    %2157 = vmatprep.subr.mxu0 0.0
    %2158 = vmatpush1.msra.mxu0 0.0
    %2159 = vmatprep.subr.mxu0 0.0
    %2160 = vmatpush1.msra.mxu0 0.0
    %2161 = vmatprep.subr.mxu0 0.0
    %2162 = vmatpush1.msra.mxu0 0.0
    %2163 = vmatprep.subr.mxu0 0.0
    %2164 = vmatpush1.msra.mxu0 0.0
    %2165 = vmatprep.subr.mxu0 0.0
    %2166 = vmatpush1.msra.mxu0 0.0
    %2167 = vmatprep.subr.mxu0 0.0
    %2168 = vmatpush1.msra.mxu0 0.0
    %2169 = vmatprep.subr.mxu0 0.0
    %2170 = vmatpush1.msra.mxu0 0.0
    %2171 = vmatprep.subr.mxu0 0.0
    %2172 = vmatpush1.msra.mxu0 0.0
    %2173 = vmatprep.subr.mxu0 0.0
    %2174 = vmatpush1.msra.mxu0 0.0
    %2175 = vmatprep.subr.mxu0 0.0
    %2176 = vmatpush1.msra.mxu0 0.0
    %2177 = vmatprep.mubr.f32.mxu0 0.0
    %2178 = vmatmul.mubr.f32.gmra.mrb[0].mxu0 %v2111
    %v2179 = vpop.f32.mrb[0].mxu0
    %v2180 = vadd.f32 0.0, %v2179
    %v2181 = vpop.f32.mrb[0].mxu0
    %2182 = vdwg.mxu0
    %v2184 = vrot.slane %v2180, 4
    %v2186 = vadd.f32 %v556, %v2184
    %v2187 = vxor.u32 %v2186, 2147483648
    %v2188 = vmul.f32 %v2187, 1.442695
    %v2189 = vpow.pop %v2188
    %v2190 = vadd.f32 %v2189, 1.0
    %v2191 = vrcp.pop %v2190
    %v2192 = vmul.f32 1.0, %v2191
    %v2193 = vadd.f32 %v2180, %v1522
    %v2195 = vrot.slane %v2193, 4
    %2196 = vrot.lane.b32.xlu0 %v2195, 64
    %v2197 = vpop.permute.xlu0 %2196
    %v2199 = vmul.f32 %v2192, %v2197
    %2201 = vrot.lane.b32.xlu0 %v2199, 64
    %v2202 = vpop.permute.xlu0 %2201
    %v2204 = vadd.f32 %v556, %v2202
    %v2205 = vtanh.pop %v2204
    %v2206 = vsub.f32 1.0, %v2192
    %2208 = vrot.lane.b32.xlu0 %v2205, 96
    %v2209 = vpop.permute.xlu0 %2208
    %v2211 = vmul.f32 %v2206, %v2209
    %v2212 = vrot.slane %v2102, 6
    %v2214 = vmul.f32 %v2192, %v2212
    %v2215 = vadd.f32 %v2211, %v2214
    %2217 = vrot.lane.b32.xlu0 %v2215, 96
    %v2218 = vpop.permute.xlu0 %2217
    %2220 = vst.msk [vmem:[#allocation2 + $0x8] sm:$0x30] %vm1774, %v2218
    %v2221 = vrot.slane %v2215, 4
    %2222 = vrot.lane.b32.xlu0 %v2221, 96
    %v2223 = vpop.permute.xlu0 %2222
    %v2224 = vsel %vm157, %v2223, 0
    %2226 = vmatprep.subr.mxu0 0.0
    %2227 = vmatpush1.msra.mxu0 %v563
    %2228 = vmatprep.subr.mxu0 0.0
    %2229 = vmatpush1.msra.mxu0 %v564
    %2230 = vmatprep.subr.mxu0 0.0
    %2231 = vmatpush1.msra.mxu0 %v565
    %2232 = vmatprep.subr.mxu0 0.0
    %2233 = vmatpush1.msra.mxu0 %v566
    %2234 = vmatprep.subr.mxu0 0.0
    %2235 = vmatpush1.msra.mxu0 0.0
    %2236 = vmatprep.subr.mxu0 0.0
    %2237 = vmatpush1.msra.mxu0 0.0
    %2238 = vmatprep.subr.mxu0 0.0
    %2239 = vmatpush1.msra.mxu0 0.0
    %2240 = vmatprep.subr.mxu0 0.0
    %2241 = vmatpush1.msra.mxu0 0.0
    %2242 = vmatprep.subr.mxu0 0.0
    %2243 = vmatpush1.msra.mxu0 0.0
    %2244 = vmatprep.subr.mxu0 0.0
    %2245 = vmatpush1.msra.mxu0 0.0
    %2246 = vmatprep.subr.mxu0 0.0
    %2247 = vmatpush1.msra.mxu0 0.0
    %2248 = vmatprep.subr.mxu0 0.0
    %2249 = vmatpush1.msra.mxu0 0.0
    %2250 = vmatprep.subr.mxu0 0.0
    %2251 = vmatpush1.msra.mxu0 0.0
    %2252 = vmatprep.subr.mxu0 0.0
    %2253 = vmatpush1.msra.mxu0 0.0
    %2254 = vmatprep.subr.mxu0 0.0
    %2255 = vmatpush1.msra.mxu0 0.0
    %2256 = vmatprep.subr.mxu0 0.0
    %2257 = vmatpush1.msra.mxu0 0.0
    %2258 = vmatprep.subr.mxu0 0.0
    %2259 = vmatpush1.msra.mxu0 0.0
    %2260 = vmatprep.subr.mxu0 0.0
    %2261 = vmatpush1.msra.mxu0 0.0
    %2262 = vmatprep.subr.mxu0 0.0
    %2263 = vmatpush1.msra.mxu0 0.0
    %2264 = vmatprep.subr.mxu0 0.0
    %2265 = vmatpush1.msra.mxu0 0.0
    %2266 = vmatprep.subr.mxu0 0.0
    %2267 = vmatpush1.msra.mxu0 0.0
    %2268 = vmatprep.subr.mxu0 0.0
    %2269 = vmatpush1.msra.mxu0 0.0
    %2270 = vmatprep.subr.mxu0 0.0
    %2271 = vmatpush1.msra.mxu0 0.0
    %2272 = vmatprep.subr.mxu0 0.0
    %2273 = vmatpush1.msra.mxu0 0.0
    %2274 = vmatprep.subr.mxu0 0.0
    %2275 = vmatpush1.msra.mxu0 0.0
    %2276 = vmatprep.subr.mxu0 0.0
    %2277 = vmatpush1.msra.mxu0 0.0
    %2278 = vmatprep.subr.mxu0 0.0
    %2279 = vmatpush1.msra.mxu0 0.0
    %2280 = vmatprep.subr.mxu0 0.0
    %2281 = vmatpush1.msra.mxu0 0.0
    %2282 = vmatprep.subr.mxu0 0.0
    %2283 = vmatpush1.msra.mxu0 0.0
    %2284 = vmatprep.subr.mxu0 0.0
    %2285 = vmatpush1.msra.mxu0 0.0
    %2286 = vmatprep.subr.mxu0 0.0
    %2287 = vmatpush1.msra.mxu0 0.0
    %2288 = vmatprep.subr.mxu0 0.0
    %2289 = vmatpush1.msra.mxu0 0.0
    %2290 = vmatprep.mubr.f32.mxu0 0.0
    %2291 = vmatmul.mubr.f32.gmra.mrb[0].mxu0 %v2224
    %v2292 = vpop.f32.mrb[0].mxu0
    %v2293 = vadd.f32 0.0, %v2292
    %v2294 = vpop.f32.mrb[0].mxu0
    %2295 = vdwg.mxu0
    %v2297 = vrot.slane %v2293, 2
    %v2299 = vadd.f32 %v556, %v2297
    %v2300 = vxor.u32 %v2299, 2147483648
    %v2301 = vmul.f32 %v2300, 1.442695
    %v2302 = vpow.pop %v2301
    %v2303 = vadd.f32 %v2302, 1.0
    %v2304 = vrcp.pop %v2303
    %v2305 = vmul.f32 1.0, %v2304
    %v2306 = vadd.f32 %v2293, %v1522
    %v2308 = vrot.slane %v2306, 2
    %2309 = vrot.lane.b32.xlu0 %v2308, 64
    %v2310 = vpop.permute.xlu0 %2309
    %v2312 = vmul.f32 %v2305, %v2310
    %2314 = vrot.lane.b32.xlu0 %v2312, 64
    %v2315 = vpop.permute.xlu0 %2314
    %v2317 = vadd.f32 %v556, %v2315
    %v2318 = vtanh.pop %v2317
    %v2319 = vsub.f32 1.0, %v2305
    %2321 = vrot.lane.b32.xlu0 %v2318, 96
    %v2322 = vpop.permute.xlu0 %2321
    %v2324 = vmul.f32 %v2319, %v2322
    %v2325 = vrot.slane %v2215, 6
    %v2327 = vmul.f32 %v2305, %v2325
    %v2328 = vadd.f32 %v2324, %v2327
    %2330 = vrot.lane.b32.xlu0 %v2328, 96
    %v2331 = vpop.permute.xlu0 %2330
    %2333 = vst.msk [vmem:[#allocation2 + $0x8] sm:$0xc0] %vm1888, %v2331
    %v2334 = vld [vmem:[#allocation2] sm:$0xff]
    %v2335 = vld [vmem:[#allocation2 + $0x8] sm:$0xff]
    %v2336 = vld [vmem:[#allocation14] sm:$0xff]
    %v2337 = vld [vmem:[#allocation14 + $0x8] sm:$0xff]
    %v2338 = vld [vmem:[#allocation14 + $0x10] sm:$0xff]
    %v2339 = vld [vmem:[#allocation14 + $0x18] sm:$0xff]
    %v2340 = vld [vmem:[%s13] sm:$0x1]
    %v2342 = vlaneseq
    %v2343 = vshrl.u32 %v2342, 7
    %v2344 = vsub.s32 0, %v2343
    %v2345 = vrot.slane %v2340, %v2344
    %v2348 = vsel %vm157, %v2334, 0
    %v2351 = vsel %vm157, %v2335, 0
    %2353 = vmatprep.subr.mxu0 0.0
    %2354 = vmatpush1.msra.mxu0 %v2336
    %2355 = vmatprep.subr.mxu0 0.0
    %2356 = vmatpush1.msra.mxu0 %v2337
    %2357 = vmatprep.subr.mxu0 0.0
    %2358 = vmatpush1.msra.mxu0 %v2338
    %2359 = vmatprep.subr.mxu0 0.0
    %2360 = vmatpush1.msra.mxu0 %v2339
    %2361 = vmatprep.subr.mxu0 0.0
    %2362 = vmatpush1.msra.mxu0 0.0
    %2363 = vmatprep.subr.mxu0 0.0
    %2364 = vmatpush1.msra.mxu0 0.0
    %2365 = vmatprep.subr.mxu0 0.0
    %2366 = vmatpush1.msra.mxu0 0.0
    %2367 = vmatprep.subr.mxu0 0.0
    %2368 = vmatpush1.msra.mxu0 0.0
    %2369 = vmatprep.subr.mxu0 0.0
    %2370 = vmatpush1.msra.mxu0 0.0
    %2371 = vmatprep.subr.mxu0 0.0
    %2372 = vmatpush1.msra.mxu0 0.0
    %2373 = vmatprep.subr.mxu0 0.0
    %2374 = vmatpush1.msra.mxu0 0.0
    %2375 = vmatprep.subr.mxu0 0.0
    %2376 = vmatpush1.msra.mxu0 0.0
    %2377 = vmatprep.subr.mxu0 0.0
    %2378 = vmatpush1.msra.mxu0 0.0
    %2379 = vmatprep.subr.mxu0 0.0
    %2380 = vmatpush1.msra.mxu0 0.0
    %2381 = vmatprep.subr.mxu0 0.0
    %2382 = vmatpush1.msra.mxu0 0.0
    %2383 = vmatprep.subr.mxu0 0.0
    %2384 = vmatpush1.msra.mxu0 0.0
    %2385 = vmatprep.subr.mxu0 0.0
    %2386 = vmatpush1.msra.mxu0 0.0
    %2387 = vmatprep.subr.mxu0 0.0
    %2388 = vmatpush1.msra.mxu0 0.0
    %2389 = vmatprep.subr.mxu0 0.0
    %2390 = vmatpush1.msra.mxu0 0.0
    %2391 = vmatprep.subr.mxu0 0.0
    %2392 = vmatpush1.msra.mxu0 0.0
    %2393 = vmatprep.subr.mxu0 0.0
    %2394 = vmatpush1.msra.mxu0 0.0
    %2395 = vmatprep.subr.mxu0 0.0
    %2396 = vmatpush1.msra.mxu0 0.0
    %2397 = vmatprep.subr.mxu0 0.0
    %2398 = vmatpush1.msra.mxu0 0.0
    %2399 = vmatprep.subr.mxu0 0.0
    %2400 = vmatpush1.msra.mxu0 0.0
    %2401 = vmatprep.subr.mxu0 0.0
    %2402 = vmatpush1.msra.mxu0 0.0
    %2403 = vmatprep.subr.mxu0 0.0
    %2404 = vmatpush1.msra.mxu0 0.0
    %2405 = vmatprep.subr.mxu0 0.0
    %2406 = vmatpush1.msra.mxu0 0.0
    %2407 = vmatprep.subr.mxu0 0.0
    %2408 = vmatpush1.msra.mxu0 0.0
    %2409 = vmatprep.subr.mxu0 0.0
    %2410 = vmatpush1.msra.mxu0 0.0
    %2411 = vmatprep.subr.mxu0 0.0
    %2412 = vmatpush1.msra.mxu0 0.0
    %2413 = vmatprep.subr.mxu0 0.0
    %2414 = vmatpush1.msra.mxu0 0.0
    %2415 = vmatprep.subr.mxu0 0.0
    %2416 = vmatpush1.msra.mxu0 0.0
    %2417 = vmatprep.mubr.f32.mxu0 0.0
    %2418 = vmatmul.mubr.f32.gmra.mrb[0].mxu0 %v2348
    %v2419 = vpop.f32.mrb[0].mxu0
    %v2420 = vadd.f32 %v2345, %v2419
    %v2421 = vpop.f32.mrb[0].mxu0
    %2422 = vmatprep.mubr.f32.mxu0 0.0
    %2423 = vmatmul.mubr.f32.gmra.mrb[0].mxu0 %v2351
    %v2424 = vpop.f32.mrb[0].mxu0
    %v2425 = vadd.f32 %v2345, %v2424
    %v2426 = vpop.f32.mrb[0].mxu0
    %2427 = vdwg.mxu0
    %v2428 = vsel %vm157, %v2420, -inf
    %2429 = vmax.xlane.f32.xlu0 %v2428
    %v2430 = vpop.xlane.xlu0 %2429
    %v2431 = vsel %vm157, %v2425, -inf
    %2432 = vmax.xlane.f32.xlu0 %v2431
    %v2433 = vpop.xlane.xlu0 %2432
    %v2434 = vsub.f32 %v2420, %v2430
    %v2435 = vsub.f32 %v2425, %v2433
    %v2436 = vmul.f32 %v2434, 1.442695
    %v2437 = vpow.pop %v2436
    %v2438 = vmul.f32 %v2435, 1.442695
    %v2439 = vpow.pop %v2438
    %v2440 = vsel %vm157, %v2437, 0.0
    %2441 = vadd.xlane.f32.xlu0 %v2440
    %v2442 = vpop.xlane.xlu0 %2441
    %v2443 = vsel %vm157, %v2439, 0.0
    %2444 = vadd.xlane.f32.xlu0 %v2443
    %v2445 = vpop.xlane.xlu0 %2444
    %v2446 = vlog2.pop %v2442
    %v2447 = vmul.f32 %v2446, 0.6931472
    %v2448 = vlog2.pop %v2445
    %v2449 = vmul.f32 %v2448, 0.6931472
    %v2450 = vadd.f32 %v2430, %v2447
    %v2451 = vadd.f32 %v2433, %v2449
    %v2452 = vsub.f32 %v2420, %v2450
    %v2453 = vsub.f32 %v2425, %v2451
    %2454 = vst.msk [vmem:[#allocation15] sm:$0xff] %vm157, %v2452
    %2455 = vst.msk [vmem:[#allocation15 + $0x8] sm:$0xff] %vm157, %v2453
    %2456 = vst.msk [vmem:[#allocation16 - $0x6] sm:$0xc0] %vm1888, %v2331
    // Predicated region
    $region86: #{tpu_custom_call.1} parent=1 // pred_check
      _
    $region87: #{tpu_custom_call.1} parent=1 // pred_check_branch
      %2458 = sbr.rel (0) target = $region89
    $region88: #{tpu_custom_call.1} parent=1 // pred_region
      %s2460 = ssub.s32 256, 256
      %2461 = vsyncadd [#allocation5], %s2460
      %s2462 = sshll.u32 [#allocation15], 4
      %s2463 = int_to_ptr.vmem [resolvable:$true] %s2462
      %2468 = dma.vmem_to_hbm [thread:$0]  %s2463, 256, %s14, [#allocation5], 128, 128, 8
    $region89: #{tpu_custom_call.1} parent=1 // pred_fallthru
      _
    // Predicated region
    $region90: #{tpu_custom_call.1} parent=1 // pred_check
      _
    $region91: #{tpu_custom_call.1} parent=1 // pred_check_branch
      %2470 = sbr.rel (0) target = $region93
    $region92: #{tpu_custom_call.1} parent=1 // pred_region
      %s2472 = ssub.s32 32, 32
      %2473 = vsyncadd [#allocation17], %s2472
      %s2475 = sshll.u32 [#allocation16], 4
      %s2476 = int_to_ptr.vmem [resolvable:$true] %s2475
      %2478 = dma.vmem_to_hbm [thread:$0]  %s2476, 32, %s15, [#allocation17]
    $region93: #{tpu_custom_call.1} parent=1 // pred_fallthru
      _
    // Predicated region
    $region94: #{tpu_custom_call.1} parent=1 // pred_check
      _
    $region95: #{tpu_custom_call.1} parent=1 // pred_check_branch
      %2480 = sbr.rel (0) target = $region97
    $region96: #{tpu_custom_call.1} parent=1 // pred_region
      %2481 = dma.done [#allocation5], 256
    $region97: #{tpu_custom_call.1} parent=1 // pred_fallthru
      _
    // Predicated region
    $region98: #{tpu_custom_call.1} parent=1 // pred_check
      _
    $region99: #{tpu_custom_call.1} parent=1 // pred_check_branch
      %2483 = sbr.rel (0) target = $region101
    $region100: #{tpu_custom_call.1} parent=1 // pred_region
      %2484 = dma.done [#allocation17], 32
    $region101: #{tpu_custom_call.1} parent=1 // pred_fallthru
      _
    %2485 = vsyncpa [#allocation4], 1
    %2486 = vsyncpa [#allocation7], 1
    %2487 = vsyncpa [#allocation10], 1
    %2488 = vsyncpa [#allocation13], 1
    %2489 = vsyncpa [#allocation5], 1
    %2490 = vsyncpa [#allocation17], 1

</llo_original>
